<compile_context>
chip_gen: v7x
topology: tpu7x:2x2x1
jax: 0.10.0
libtpu: 0.0.40
codegen_flags: <defaults>
</compile_context>

<pallas_src>
import jax
import jax.numpy as jnp
from jax.experimental import pallas as pl
from jax.experimental.pallas import tpu as pltpu

N_FEATURES = 784
H0, H1, H2, N_OUT = 1024, 512, 256, 1
OUT_PAD = 128            # lane-dense padded width of the final layer
LEAKY_SLOPE = 0.2


def _cdiv(a, b):
    return -(-a // b)


def _round_up(n, m):
    return _cdiv(n, m) * m


def _leaky_relu(x, slope=LEAKY_SLOPE):
    return jnp.where(x > 0, x, slope * x)


def _tpu_generation():
    """Best-effort TPU generation from device_kind; 0 if unknown."""
    try:
        kind = jax.devices()[0].device_kind.lower()
    except Exception:
        return 0
    for g in (7, 6, 5, 4, 3, 2):
        if "v%d" % g in kind:
            return g
    return 0


def disc_kernel(x_ref,
                w0_ref, b0_ref,
                w1_ref, b1_ref,
                w2_ref, b2_ref,
                w3_ref, b3_ref,
                o_ref):
    # Activation dtype is driven by the bias dtype chosen in the wrapper:
    # bf16 on v6e/v7x (bf16 VPU), f32 on v5e.
    act_dt = b0_ref.dtype

    # hidden0: Linear(784->1024) + LeakyReLU(0.2)   (Dropout = identity, inference)
    x = x_ref[...].astype(jnp.bfloat16)
    h = jnp.dot(x, w0_ref[...], preferred_element_type=jnp.float32)
    h = _leaky_relu(h.astype(act_dt) + b0_ref[...])

    # hidden1: Linear(1024->512) + LeakyReLU(0.2)
    h = jnp.dot(h.astype(jnp.bfloat16), w1_ref[...], preferred_element_type=jnp.float32)
    h = _leaky_relu(h.astype(act_dt) + b1_ref[...])

    # hidden2: Linear(512->256) + LeakyReLU(0.2)
    h = jnp.dot(h.astype(jnp.bfloat16), w2_ref[...], preferred_element_type=jnp.float32)
    h = _leaky_relu(h.astype(act_dt) + b2_ref[...])

    # out: Linear(256->1) + Sigmoid. w3 is zero-padded to (256, 128) so the final
    # layer runs on the MXU and the store is lane-dense; only column 0 is meaningful.
    logits = jnp.dot(h.astype(jnp.bfloat16), w3_ref[...],
                     preferred_element_type=jnp.float32) + b3_ref[...]
    o_ref[...] = jax.nn.sigmoid(logits).astype(o_ref.dtype)


def discriminator_forward(x, params, *, batch_tile=1024):
    """x: (B, 784) float. params: dict of f32 weights/biases. Returns (B, 1) f32."""
    B = x.shape[0]
    gen = _tpu_generation()

    # bf16 activation math only where the VPU has a bf16 path (v6e / v7x).
    act_dtype = jnp.bfloat16 if gen >= 6 else jnp.float32
    # v7x has 64 MiB physical VMEM per TC -> 48 MiB cap; v5e/v6e have 128 MiB -> 96 MiB.
    vmem_limit = (96 << 20) if gen in (5, 6) else (48 << 20)

    # Minimal-waste tile: split B as evenly as possible over the number of grid
    # steps implied by batch_tile, rounded up to the 8-row sublane granularity.
    n_steps = max(1, _cdiv(B, batch_tile))
    tile = _round_up(_cdiv(B, n_steps), 8)
    Bp = n_steps * tile

    # No feature-dim padding and no dtype cast for x: the bf16 cast happens in-kernel,
    # saving a full HBM round trip over the activations. Batch pad only when needed.
    xp = x if Bp == B else jnp.pad(x, ((0, Bp - B), (0, 0)))

    # bf16 matmul operands (accumulation stays f32 inside the kernel).
    w0 = params["w0"].astype(jnp.bfloat16)                   # (784, 1024)
    w1 = params["w1"].astype(jnp.bfloat16)                   # (1024, 512)
    w2 = params["w2"].astype(jnp.bfloat16)                   # (512, 256)
    w3 = jnp.pad(params["w3"], ((0, 0), (0, OUT_PAD - N_OUT))).astype(jnp.bfloat16)  # (256, 128)
    b0 = params["b0"].astype(act_dtype)
    b1 = params["b1"].astype(act_dtype)
    b2 = params["b2"].astype(act_dtype)
    b3 = jnp.pad(params["b3"].astype(jnp.float32), ((0, 0), (0, OUT_PAD - N_OUT)))   # (1, 128)

    # Constant index maps => weights/biases are DMA'd into VMEM once and stay
    # resident across all batch tiles (~3 MiB of bf16 weights).
    def full(arr):
        return pl.BlockSpec(arr.shape, lambda i: (0, 0))

    flops = 2 * Bp * (N_FEATURES * H0 + H0 * H1 + H1 * H2 + H2 * OUT_PAD)
    bytes_accessed = (
        xp.size * xp.dtype.itemsize
        + (w0.size + w1.size + w2.size + w3.size) * 2
        + (b0.size + b1.size + b2.size) * b0.dtype.itemsize
        + b3.size * 4
        + Bp * OUT_PAD * 4
    )

    out = pl.pallas_call(
        disc_kernel,
        out_shape=jax.ShapeDtypeStruct((Bp, OUT_PAD), jnp.float32),
        grid_spec=pltpu.PrefetchScalarGridSpec(
            num_scalar_prefetch=0,
            grid=(n_steps,),
            in_specs=[
                pl.BlockSpec((tile, N_FEATURES), lambda i: (i, 0)),
                full(w0), full(b0),
                full(w1), full(b1),
                full(w2), full(b2),
                full(w3), full(b3),
            ],
            out_specs=pl.BlockSpec((tile, OUT_PAD), lambda i: (i, 0)),
        ),
        compiler_params=pltpu.CompilerParams(
            dimension_semantics=("parallel",),
            vmem_limit_bytes=vmem_limit,
        ),
        cost_estimate=pl.CostEstimate(
            flops=flops,
            transcendentals=2 * Bp * OUT_PAD,   # exp + reciprocal per sigmoid element
            bytes_accessed=bytes_accessed,
        ),
    )(xp, w0, b0, w1, b1, w2, b2, w3, b3)

    return out[:B, :N_OUT]


def init_params(key):
    """Deterministic synthetic parameters, PyTorch-Linear-like uniform init (f32)."""
    def linear(key, fan_in, fan_out):
        kw, kb = jax.random.split(key)
        bound = 1.0 / (fan_in ** 0.5)
        w = jax.random.uniform(kw, (fan_in, fan_out), jnp.float32, -bound, bound)
        b = jax.random.uniform(kb, (1, fan_out), jnp.float32, -bound, bound)
        return w, b

    k0, k1, k2, k3 = jax.random.split(key, 4)
    w0, b0 = linear(k0, N_FEATURES, H0)
    w1, b1 = linear(k1, H0, H1)
    w2, b2 = linear(k2, H1, H2)
    w3, b3 = linear(k3, H2, N_OUT)
    return dict(w0=w0, b0=b0, w1=w1, b1=b1, w2=w2, b2=b2, w3=w3, b3=b3)


def reference_forward(x, p):
    h = _leaky_relu(x @ p["w0"] + p["b0"])
    h = _leaky_relu(h @ p["w1"] + p["b1"])
    h = _leaky_relu(h @ p["w2"] + p["b2"])
    return jax.nn.sigmoid(h @ p["w3"] + p["b3"])


if __name__ == "__main__":
    key = jax.random.PRNGKey(0)
    kx, kp = jax.random.split(key)
    B = 16
    x = jax.random.normal(kx, (B, N_FEATURES), jnp.float32)
    params = init_params(kp)

    out = discriminator_forward(x, params)
    out = jax.block_until_ready(out)

    ref = reference_forward(x, params)
    assert out.shape == (B, 1)
    # bf16 matmul operands (and bf16 activation math on v6e/v7x) vs f32 reference
    # => loosened tolerance; sigmoid outputs are bounded in [0, 1].
    assert jnp.allclose(out, ref, atol=3e-2, rtol=3e-2), float(jnp.max(jnp.abs(out - ref)))
    print("KERNEL_OK")
</pallas_src>

<mosaic_0001>
module attributes {stable_mosaic.version = 11 : i64} {
  func.func @disc_kernel(%arg0: i32, %arg1: memref<16x784xf32, #tpu.memory_space<vmem>>, %arg2: memref<784x1024xbf16, #tpu.memory_space<vmem>>, %arg3: memref<1x1024xf32, #tpu.memory_space<vmem>>, %arg4: memref<1024x512xbf16, #tpu.memory_space<vmem>>, %arg5: memref<1x512xf32, #tpu.memory_space<vmem>>, %arg6: memref<512x256xbf16, #tpu.memory_space<vmem>>, %arg7: memref<1x256xf32, #tpu.memory_space<vmem>>, %arg8: memref<256x128xbf16, #tpu.memory_space<vmem>>, %arg9: memref<1x128xf32, #tpu.memory_space<vmem>>, %arg10: memref<16x128xf32, #tpu.memory_space<vmem>>) attributes {dimension_semantics = [#tpu.dimension_semantics<parallel>], iteration_bounds = array<i64: 1>, scalar_prefetch = 0 : i64, scratch_operands = 0 : i64, tpu.core_type = #tpu.core_type<tc>, window_params = [{transform_indices = @transform_0, window_bounds = array<i64: 16, 784>}, {pipeline_mode = #tpu.pipeline_mode<synchronous>, transform_indices = @transform_1, window_bounds = array<i64: 784, 1024>}, {pipeline_mode = #tpu.pipeline_mode<synchronous>, transform_indices = @transform_2, window_bounds = array<i64: 1, 1024>}, {pipeline_mode = #tpu.pipeline_mode<synchronous>, transform_indices = @transform_3, window_bounds = array<i64: 1024, 512>}, {pipeline_mode = #tpu.pipeline_mode<synchronous>, transform_indices = @transform_4, window_bounds = array<i64: 1, 512>}, {pipeline_mode = #tpu.pipeline_mode<synchronous>, transform_indices = @transform_5, window_bounds = array<i64: 512, 256>}, {pipeline_mode = #tpu.pipeline_mode<synchronous>, transform_indices = @transform_6, window_bounds = array<i64: 1, 256>}, {pipeline_mode = #tpu.pipeline_mode<synchronous>, transform_indices = @transform_7, window_bounds = array<i64: 256, 128>}, {pipeline_mode = #tpu.pipeline_mode<synchronous>, transform_indices = @transform_8, window_bounds = array<i64: 1, 128>}, {transform_indices = @transform_9, window_bounds = array<i64: 16, 128>}]} {
    %c0 = arith.constant 0 : index
    %c0_0 = arith.constant 0 : index
    %0 = vector.load %arg1[%c0, %c0_0] : memref<16x784xf32, #tpu.memory_space<vmem>>, vector<16x784xf32>
    %1 = arith.truncf %0 : vector<16x784xf32> to vector<16x784xbf16>
    %c0_1 = arith.constant 0 : index
    %c0_2 = arith.constant 0 : index
    %2 = vector.load %arg2[%c0_1, %c0_2] : memref<784x1024xbf16, #tpu.memory_space<vmem>>, vector<784x1024xbf16>
    %cst = arith.constant dense<0.000000e+00> : vector<16x1024xf32>
    %3 = tpu.matmul %1, %2, %cst {dimension_numbers = #tpu.dot_dimension_numbers<[1], [0], [0], [1], [0, 0, 1, 1], [], []>} : vector<16x784xbf16>, vector<784x1024xbf16>, vector<16x1024xf32> -> vector<16x1024xf32>
    %c0_3 = arith.constant 0 : index
    %c0_4 = arith.constant 0 : index
    %4 = vector.load %arg3[%c0_3, %c0_4] : memref<1x1024xf32, #tpu.memory_space<vmem>>, vector<1x1024xf32>
    %5 = vector.broadcast %4 : vector<1x1024xf32> to vector<16x1024xf32>
    %6 = arith.addf %3, %5 : vector<16x1024xf32>
    %cst_5 = arith.constant 0.000000e+00 : f32
    %7 = vector.broadcast %cst_5 : f32 to vector<16x1024xf32>
    %8 = arith.cmpf ogt, %6, %7 : vector<16x1024xf32>
    %cst_6 = arith.constant 2.000000e-01 : f32
    %9 = vector.broadcast %cst_6 : f32 to vector<16x1024xf32>
    %10 = arith.mulf %9, %6 : vector<16x1024xf32>
    %11 = arith.select %8, %6, %10 : vector<16x1024xi1>, vector<16x1024xf32>
    %12 = arith.truncf %11 : vector<16x1024xf32> to vector<16x1024xbf16>
    %c0_7 = arith.constant 0 : index
    %c0_8 = arith.constant 0 : index
    %13 = vector.load %arg4[%c0_7, %c0_8] : memref<1024x512xbf16, #tpu.memory_space<vmem>>, vector<1024x512xbf16>
    %cst_9 = arith.constant dense<0.000000e+00> : vector<16x512xf32>
    %14 = tpu.matmul %12, %13, %cst_9 {dimension_numbers = #tpu.dot_dimension_numbers<[1], [0], [0], [1], [0, 0, 1, 1], [], []>} : vector<16x1024xbf16>, vector<1024x512xbf16>, vector<16x512xf32> -> vector<16x512xf32>
    %c0_10 = arith.constant 0 : index
    %c0_11 = arith.constant 0 : index
    %15 = vector.load %arg5[%c0_10, %c0_11] : memref<1x512xf32, #tpu.memory_space<vmem>>, vector<1x512xf32>
    %16 = vector.broadcast %15 : vector<1x512xf32> to vector<16x512xf32>
    %17 = arith.addf %14, %16 : vector<16x512xf32>
    %cst_12 = arith.constant 0.000000e+00 : f32
    %18 = vector.broadcast %cst_12 : f32 to vector<16x512xf32>
    %19 = arith.cmpf ogt, %17, %18 : vector<16x512xf32>
    %cst_13 = arith.constant 2.000000e-01 : f32
    %20 = vector.broadcast %cst_13 : f32 to vector<16x512xf32>
    %21 = arith.mulf %20, %17 : vector<16x512xf32>
    %22 = arith.select %19, %17, %21 : vector<16x512xi1>, vector<16x512xf32>
    %23 = arith.truncf %22 : vector<16x512xf32> to vector<16x512xbf16>
    %c0_14 = arith.constant 0 : index
    %c0_15 = arith.constant 0 : index
    %24 = vector.load %arg6[%c0_14, %c0_15] : memref<512x256xbf16, #tpu.memory_space<vmem>>, vector<512x256xbf16>
    %cst_16 = arith.constant dense<0.000000e+00> : vector<16x256xf32>
    %25 = tpu.matmul %23, %24, %cst_16 {dimension_numbers = #tpu.dot_dimension_numbers<[1], [0], [0], [1], [0, 0, 1, 1], [], []>} : vector<16x512xbf16>, vector<512x256xbf16>, vector<16x256xf32> -> vector<16x256xf32>
    %c0_17 = arith.constant 0 : index
    %c0_18 = arith.constant 0 : index
    %26 = vector.load %arg7[%c0_17, %c0_18] : memref<1x256xf32, #tpu.memory_space<vmem>>, vector<1x256xf32>
    %27 = vector.broadcast %26 : vector<1x256xf32> to vector<16x256xf32>
    %28 = arith.addf %25, %27 : vector<16x256xf32>
    %cst_19 = arith.constant 0.000000e+00 : f32
    %29 = vector.broadcast %cst_19 : f32 to vector<16x256xf32>
    %30 = arith.cmpf ogt, %28, %29 : vector<16x256xf32>
    %cst_20 = arith.constant 2.000000e-01 : f32
    %31 = vector.broadcast %cst_20 : f32 to vector<16x256xf32>
    %32 = arith.mulf %31, %28 : vector<16x256xf32>
    %33 = arith.select %30, %28, %32 : vector<16x256xi1>, vector<16x256xf32>
    %34 = arith.truncf %33 : vector<16x256xf32> to vector<16x256xbf16>
    %c0_21 = arith.constant 0 : index
    %c0_22 = arith.constant 0 : index
    %35 = vector.load %arg8[%c0_21, %c0_22] : memref<256x128xbf16, #tpu.memory_space<vmem>>, vector<256x128xbf16>
    %cst_23 = arith.constant dense<0.000000e+00> : vector<16x128xf32>
    %36 = tpu.matmul %34, %35, %cst_23 {dimension_numbers = #tpu.dot_dimension_numbers<[1], [0], [0], [1], [0, 0, 1, 1], [], []>} : vector<16x256xbf16>, vector<256x128xbf16>, vector<16x128xf32> -> vector<16x128xf32>
    %c0_24 = arith.constant 0 : index
    %c0_25 = arith.constant 0 : index
    %37 = vector.load %arg9[%c0_24, %c0_25] : memref<1x128xf32, #tpu.memory_space<vmem>>, vector<1x128xf32>
    %38 = vector.broadcast %37 : vector<1x128xf32> to vector<16x128xf32>
    %39 = arith.addf %36, %38 : vector<16x128xf32>
    %40 = arith.negf %39 : vector<16x128xf32>
    %41 = math.exp %40 : vector<16x128xf32>
    %cst_26 = arith.constant 1.000000e+00 : f32
    %42 = vector.broadcast %cst_26 : f32 to vector<16x128xf32>
    %43 = arith.addf %42, %41 : vector<16x128xf32>
    %44 = arith.divf %42, %43 : vector<16x128xf32>
    %c0_27 = arith.constant 0 : index
    %c0_28 = arith.constant 0 : index
    %45 = vector.load %arg10[%c0_27, %c0_28] : memref<16x128xf32, #tpu.memory_space<vmem>>, vector<16x128xf32>
    tpu.vector_store %arg10[%c0_27, %c0_28], %44 {strides = array<i32>} : memref<16x128xf32, #tpu.memory_space<vmem>>, vector<16x128xf32>,
    return
  }
  func.func @transform_0(%arg0: i32) -> (i32, i32) {
    %c0_i32 = arith.constant 0 : i32
    %c0_i32_0 = arith.constant 0 : i32
    return %arg0, %c0_i32 : i32, i32
  }
  func.func @transform_1(%arg0: i32) -> (i32, i32) {
    %c0_i32 = arith.constant 0 : i32
    %c0_i32_0 = arith.constant 0 : i32
    %c0_i32_1 = arith.constant 0 : i32
    return %c0_i32, %c0_i32_0 : i32, i32
  }
  func.func @transform_2(%arg0: i32) -> (i32, i32) {
    %c0_i32 = arith.constant 0 : i32
    %c0_i32_0 = arith.constant 0 : i32
    %c0_i32_1 = arith.constant 0 : i32
    return %c0_i32, %c0_i32_0 : i32, i32
  }
  func.func @transform_3(%arg0: i32) -> (i32, i32) {
    %c0_i32 = arith.constant 0 : i32
    %c0_i32_0 = arith.constant 0 : i32
    %c0_i32_1 = arith.constant 0 : i32
    return %c0_i32, %c0_i32_0 : i32, i32
  }
  func.func @transform_4(%arg0: i32) -> (i32, i32) {
    %c0_i32 = arith.constant 0 : i32
    %c0_i32_0 = arith.constant 0 : i32
    %c0_i32_1 = arith.constant 0 : i32
    return %c0_i32, %c0_i32_0 : i32, i32
  }
  func.func @transform_5(%arg0: i32) -> (i32, i32) {
    %c0_i32 = arith.constant 0 : i32
    %c0_i32_0 = arith.constant 0 : i32
    %c0_i32_1 = arith.constant 0 : i32
    return %c0_i32, %c0_i32_0 : i32, i32
  }
  func.func @transform_6(%arg0: i32) -> (i32, i32) {
    %c0_i32 = arith.constant 0 : i32
    %c0_i32_0 = arith.constant 0 : i32
    %c0_i32_1 = arith.constant 0 : i32
    return %c0_i32, %c0_i32_0 : i32, i32
  }
  func.func @transform_7(%arg0: i32) -> (i32, i32) {
    %c0_i32 = arith.constant 0 : i32
    %c0_i32_0 = arith.constant 0 : i32
    %c0_i32_1 = arith.constant 0 : i32
    return %c0_i32, %c0_i32_0 : i32, i32
  }
  func.func @transform_8(%arg0: i32) -> (i32, i32) {
    %c0_i32 = arith.constant 0 : i32
    %c0_i32_0 = arith.constant 0 : i32
    %c0_i32_1 = arith.constant 0 : i32
    return %c0_i32, %c0_i32_0 : i32, i32
  }
  func.func @transform_9(%arg0: i32) -> (i32, i32) {
    %c0_i32 = arith.constant 0 : i32
    %c0_i32_0 = arith.constant 0 : i32
    return %arg0, %c0_i32 : i32, i32
  }
}

</mosaic_0001>

<llo_original>
// kernel: tpu_custom_call.1
$region0: #{tpu_custom_call.1}
  #allocation0 [shape = 'u32[]', space=smem, size = 0x4, offset = 0x4, fixed_abs, tag = 'smem constant byte address 0x4 - core index']
  #allocation1 [shape = 'u32[144,128]{1,0:T(1,128)}', space=vmem, size = 0x12000, scoped, tag = 'internal scratch']
  %s0 = inlined_call_operand.hbm [shape: f32[16,784], index: 0, kind: input, shape index: {}]
  %s1 = inlined_call_operand.hbm [shape: bf16[784,1024], index: 1, kind: input, shape index: {}]
  %s2 = inlined_call_operand.hbm [shape: f32[1,1024], index: 2, kind: input, shape index: {}]
  %s3 = inlined_call_operand.hbm [shape: bf16[1024,512], index: 3, kind: input, shape index: {}]
  %s4 = inlined_call_operand.hbm [shape: f32[1,512], index: 4, kind: input, shape index: {}]
  %s5 = inlined_call_operand.hbm [shape: bf16[512,256], index: 5, kind: input, shape index: {}]
  %s6 = inlined_call_operand.hbm [shape: f32[1,256], index: 6, kind: input, shape index: {}]
  %s7 = inlined_call_operand.hbm [shape: bf16[256,128], index: 7, kind: input, shape index: {}]
  %s8 = inlined_call_operand.hbm [shape: f32[1,128], index: 8, kind: input, shape index: {}]
  %s9 = inlined_call_operand.hbm [shape: f32[16,128], index: 9, kind: output, shape index: {}]
  %s10 = sld [smem:[#allocation0]]
  $region82: #{tpu_custom_call.1} parent=0
    _
  %s12 = ssub.s32 1, %s10
  %s13 = scalar_select 0, %s12, %s10
  $region1: #{tpu_custom_call.1} parent=0
    #allocation2 [shape = 'u8[57344]{0}', space=vmem, size = 0xe000, scoped, tag = 'input window, operand 0, single buffered']
    #allocation3 [shape = 's32[1]{0}', space=sflag, size = 0x4, scoped, tag = 'scoped memory for tpu_custom_call.1']
    #allocation4 [shape = 's32[1]{0}', space=sflag, size = 0x4, scoped, tag = 'scoped memory for tpu_custom_call.1']
    #allocation5 [shape = 'u8[1605632]{0}', space=vmem, size = 0x188000, scoped, tag = 'input window, operand 1, single buffered']
    #allocation6 [shape = 's32[1]{0}', space=sflag, size = 0x4, scoped, tag = 'scoped memory for tpu_custom_call.1']
    #allocation7 [shape = 'u8[4096]{0}', space=vmem, size = 0x1000, scoped, tag = 'input window, operand 2, single buffered']
    #allocation8 [shape = 'u8[1048576]{0}', space=vmem, size = 0x100000, scoped, tag = 'input window, operand 3, single buffered']
    #allocation9 [shape = 's32[1]{0}', space=sflag, size = 0x4, scoped, tag = 'scoped memory for tpu_custom_call.1']
    #allocation10 [shape = 'u8[2048]{0}', space=vmem, size = 0x800, scoped, tag = 'input window, operand 4, single buffered']
    #allocation11 [shape = 'u8[262144]{0}', space=vmem, size = 0x40000, scoped, tag = 'input window, operand 5, single buffered']
    #allocation12 [shape = 's32[1]{0}', space=sflag, size = 0x4, scoped, tag = 'scoped memory for tpu_custom_call.1']
    #allocation13 [shape = 'u8[1024]{0}', space=vmem, size = 0x400, scoped, tag = 'input window, operand 6, single buffered']
    #allocation14 [shape = 'u8[65536]{0}', space=vmem, size = 0x10000, scoped, tag = 'input window, operand 7, single buffered']
    #allocation15 [shape = 's32[1]{0}', space=sflag, size = 0x4, scoped, tag = 'scoped memory for tpu_custom_call.1']
    #allocation16 [shape = 'u8[512]{0}', space=vmem, size = 0x400, scoped, tag = 'input window, operand 8, single buffered']
    #allocation17 [shape = 'u8[8192]{0}', space=vmem, size = 0x2000, scoped, tag = 'output window, operand 0, single buffered']
    %14 = vsyncpa [#allocation3], 0
    %15 = vsyncpa [#allocation6], 0
    %16 = vsyncpa [#allocation9], 0
    %17 = vsyncpa [#allocation12], 0
    %18 = vsyncpa [#allocation15], 0
    %19 = vsyncpa [#allocation4], 0
    // Predicated region
    $region2: #{tpu_custom_call.1} parent=1 // pred_check
      _
    $region3: #{tpu_custom_call.1} parent=1 // pred_check_branch
      %21 = sbr.rel (0) target = $region5
    $region4: #{tpu_custom_call.1} parent=1 // pred_region
      %s23 = ssub.s32 1792, 1792
      %24 = vsyncadd [#allocation3], %s23
      %s25 = sshll.u32 [#allocation2], 4
      %s26 = int_to_ptr.vmem [resolvable:$true] %s25
      %31 = dma.hbm_to_vmem [thread:$0]  %s0, 1792, %s26, [#allocation3], 896, 896, 56
    $region5: #{tpu_custom_call.1} parent=1 // pred_fallthru
      _
    // Predicated region
    $region6: #{tpu_custom_call.1} parent=1 // pred_check
      _
    $region7: #{tpu_custom_call.1} parent=1 // pred_check_branch
      %33 = sbr.rel (0) target = $region9
    $region8: #{tpu_custom_call.1} parent=1 // pred_region
      %s35 = ssub.s32 50176, 50176
      %36 = vsyncadd [#allocation6], %s35
      %s37 = sshll.u32 [#allocation5], 4
      %s38 = int_to_ptr.vmem [resolvable:$true] %s37
      %43 = dma.hbm_to_vmem [thread:$0]  %s1, 50176, %s38, [#allocation6], 512, 512, 32
    $region9: #{tpu_custom_call.1} parent=1 // pred_fallthru
      _
    // Predicated region
    $region10: #{tpu_custom_call.1} parent=1 // pred_check
      _
    $region11: #{tpu_custom_call.1} parent=1 // pred_check_branch
      %45 = sbr.rel (0) target = $region13
    $region12: #{tpu_custom_call.1} parent=1 // pred_region
      %s47 = ssub.s32 128, 128
      %48 = vsyncadd [#allocation6], %s47
      %s50 = sshll.u32 [#allocation7], 4
      %s51 = int_to_ptr.vmem [resolvable:$true] %s50
      %53 = dma.hbm_to_vmem [thread:$0]  %s2, 128, %s51, [#allocation6]
    $region13: #{tpu_custom_call.1} parent=1 // pred_fallthru
      _
    // Predicated region
    $region14: #{tpu_custom_call.1} parent=1 // pred_check
      _
    $region15: #{tpu_custom_call.1} parent=1 // pred_check_branch
      %55 = sbr.rel (0) target = $region17
    $region16: #{tpu_custom_call.1} parent=1 // pred_region
      %s57 = ssub.s32 32768, 32768
      %58 = vsyncadd [#allocation9], %s57
      %s59 = sshll.u32 [#allocation8], 4
      %s60 = int_to_ptr.vmem [resolvable:$true] %s59
      %65 = dma.hbm_to_vmem [thread:$0]  %s3, 32768, %s60, [#allocation9], 256, 256, 16
    $region17: #{tpu_custom_call.1} parent=1 // pred_fallthru
      _
    // Predicated region
    $region18: #{tpu_custom_call.1} parent=1 // pred_check
      _
    $region19: #{tpu_custom_call.1} parent=1 // pred_check_branch
      %67 = sbr.rel (0) target = $region21
    $region20: #{tpu_custom_call.1} parent=1 // pred_region
      %s69 = ssub.s32 64, 64
      %70 = vsyncadd [#allocation9], %s69
      %s72 = sshll.u32 [#allocation10], 4
      %s73 = int_to_ptr.vmem [resolvable:$true] %s72
      %75 = dma.hbm_to_vmem [thread:$0]  %s4, 64, %s73, [#allocation9]
    $region21: #{tpu_custom_call.1} parent=1 // pred_fallthru
      _
    // Predicated region
    $region22: #{tpu_custom_call.1} parent=1 // pred_check
      _
    $region23: #{tpu_custom_call.1} parent=1 // pred_check_branch
      %77 = sbr.rel (0) target = $region25
    $region24: #{tpu_custom_call.1} parent=1 // pred_region
      %s79 = ssub.s32 8192, 8192
      %80 = vsyncadd [#allocation12], %s79
      %s81 = sshll.u32 [#allocation11], 4
      %s82 = int_to_ptr.vmem [resolvable:$true] %s81
      %87 = dma.hbm_to_vmem [thread:$0]  %s5, 8192, %s82, [#allocation12], 128, 128, 8
    $region25: #{tpu_custom_call.1} parent=1 // pred_fallthru
      _
    // Predicated region
    $region26: #{tpu_custom_call.1} parent=1 // pred_check
      _
    $region27: #{tpu_custom_call.1} parent=1 // pred_check_branch
      %89 = sbr.rel (0) target = $region29
    $region28: #{tpu_custom_call.1} parent=1 // pred_region
      %s91 = ssub.s32 32, 32
      %92 = vsyncadd [#allocation12], %s91
      %s94 = sshll.u32 [#allocation13], 4
      %s95 = int_to_ptr.vmem [resolvable:$true] %s94
      %97 = dma.hbm_to_vmem [thread:$0]  %s6, 32, %s95, [#allocation12]
    $region29: #{tpu_custom_call.1} parent=1 // pred_fallthru
      _
    // Predicated region
    $region30: #{tpu_custom_call.1} parent=1 // pred_check
      _
    $region31: #{tpu_custom_call.1} parent=1 // pred_check_branch
      %99 = sbr.rel (0) target = $region33
    $region32: #{tpu_custom_call.1} parent=1 // pred_region
      %s101 = ssub.s32 2048, 2048
      %102 = vsyncadd [#allocation15], %s101
      %s103 = sshll.u32 [#allocation14], 4
      %s104 = int_to_ptr.vmem [resolvable:$true] %s103
      %109 = dma.hbm_to_vmem [thread:$0]  %s7, 2048, %s104, [#allocation15], 64, 64, 4
    $region33: #{tpu_custom_call.1} parent=1 // pred_fallthru
      _
    // Predicated region
    $region34: #{tpu_custom_call.1} parent=1 // pred_check
      _
    $region35: #{tpu_custom_call.1} parent=1 // pred_check_branch
      %111 = sbr.rel (0) target = $region37
    $region36: #{tpu_custom_call.1} parent=1 // pred_region
      %s113 = ssub.s32 16, 16
      %114 = vsyncadd [#allocation15], %s113
      %s116 = sshll.u32 [#allocation16], 4
      %s117 = int_to_ptr.vmem [resolvable:$true] %s116
      %119 = dma.hbm_to_vmem [thread:$0]  %s8, 16, %s117, [#allocation15]
    $region37: #{tpu_custom_call.1} parent=1 // pred_fallthru
      _
    // Predicated region
    $region38: #{tpu_custom_call.1} parent=1 // pred_check
      _
    $region39: #{tpu_custom_call.1} parent=1 // pred_check_branch
      %121 = sbr.rel (0) target = $region41
    $region40: #{tpu_custom_call.1} parent=1 // pred_region
      %122 = dma.done [#allocation3], 1792
    $region41: #{tpu_custom_call.1} parent=1 // pred_fallthru
      _
    // Predicated region
    $region42: #{tpu_custom_call.1} parent=1 // pred_check
      _
    $region43: #{tpu_custom_call.1} parent=1 // pred_check_branch
      %124 = sbr.rel (0) target = $region45
    $region44: #{tpu_custom_call.1} parent=1 // pred_region
      %125 = dma.done [#allocation6], 50176
    $region45: #{tpu_custom_call.1} parent=1 // pred_fallthru
      _
    // Predicated region
    $region46: #{tpu_custom_call.1} parent=1 // pred_check
      _
    $region47: #{tpu_custom_call.1} parent=1 // pred_check_branch
      %127 = sbr.rel (0) target = $region49
    $region48: #{tpu_custom_call.1} parent=1 // pred_region
      %128 = dma.done [#allocation6], 128
    $region49: #{tpu_custom_call.1} parent=1 // pred_fallthru
      _
    // Predicated region
    $region50: #{tpu_custom_call.1} parent=1 // pred_check
      _
    $region51: #{tpu_custom_call.1} parent=1 // pred_check_branch
      %130 = sbr.rel (0) target = $region53
    $region52: #{tpu_custom_call.1} parent=1 // pred_region
      %131 = dma.done [#allocation9], 32768
    $region53: #{tpu_custom_call.1} parent=1 // pred_fallthru
      _
    // Predicated region
    $region54: #{tpu_custom_call.1} parent=1 // pred_check
      _
    $region55: #{tpu_custom_call.1} parent=1 // pred_check_branch
      %133 = sbr.rel (0) target = $region57
    $region56: #{tpu_custom_call.1} parent=1 // pred_region
      %134 = dma.done [#allocation9], 64
    $region57: #{tpu_custom_call.1} parent=1 // pred_fallthru
      _
    // Predicated region
    $region58: #{tpu_custom_call.1} parent=1 // pred_check
      _
    $region59: #{tpu_custom_call.1} parent=1 // pred_check_branch
      %136 = sbr.rel (0) target = $region61
    $region60: #{tpu_custom_call.1} parent=1 // pred_region
      %137 = dma.done [#allocation12], 8192
    $region61: #{tpu_custom_call.1} parent=1 // pred_fallthru
      _
    // Predicated region
    $region62: #{tpu_custom_call.1} parent=1 // pred_check
      _
    $region63: #{tpu_custom_call.1} parent=1 // pred_check_branch
      %139 = sbr.rel (0) target = $region65
    $region64: #{tpu_custom_call.1} parent=1 // pred_region
      %140 = dma.done [#allocation12], 32
    $region65: #{tpu_custom_call.1} parent=1 // pred_fallthru
      _
    // Predicated region
    $region66: #{tpu_custom_call.1} parent=1 // pred_check
      _
    $region67: #{tpu_custom_call.1} parent=1 // pred_check_branch
      %142 = sbr.rel (0) target = $region69
    $region68: #{tpu_custom_call.1} parent=1 // pred_region
      %143 = dma.done [#allocation15], 2048
    $region69: #{tpu_custom_call.1} parent=1 // pred_fallthru
      _
    // Predicated region
    $region70: #{tpu_custom_call.1} parent=1 // pred_check
      _
    $region71: #{tpu_custom_call.1} parent=1 // pred_check_branch
      %145 = sbr.rel (0) target = $region73
    $region72: #{tpu_custom_call.1} parent=1 // pred_region
      %146 = dma.done [#allocation15], 16
    $region73: #{tpu_custom_call.1} parent=1 // pred_fallthru
      _
    %v148 = vld [vmem:[#allocation2] sm:$0xff]
    %v149 = vld [vmem:[#allocation2 + $0x8] sm:$0xff]
    %v150 = vld [vmem:[#allocation2 + $0x10] sm:$0xff]
    %v151 = vld [vmem:[#allocation2 + $0x18] sm:$0xff]
    %v152 = vld [vmem:[#allocation2 + $0x20] sm:$0xff]
    %v153 = vld [vmem:[#allocation2 + $0x28] sm:$0xff]
    %v154 = vld [vmem:[#allocation2 + $0x30] sm:$0xff]
    %v155 = vld [vmem:[#allocation2 + $0x38] sm:$0xff]
    %v156 = vld [vmem:[#allocation2 + $0x40] sm:$0xff]
    %v157 = vld [vmem:[#allocation2 + $0x48] sm:$0xff]
    %v158 = vld [vmem:[#allocation2 + $0x50] sm:$0xff]
    %v159 = vld [vmem:[#allocation2 + $0x58] sm:$0xff]
    %v160 = vld [vmem:[#allocation2 + $0x60] sm:$0xff]
    %v161 = vld [vmem:[#allocation2 + $0x68] sm:$0xff]
    %v162 = vpack.c.bf16 %v155, %v148
    %v163 = vpack.c.bf16 %v156, %v149
    %v164 = vpack.c.bf16 %v157, %v150
    %v165 = vpack.c.bf16 %v158, %v151
    %v166 = vpack.c.bf16 %v159, %v152
    %v167 = vpack.c.bf16 %v160, %v153
    %v168 = vpack.c.bf16 %v161, %v154
    %v169 = vld [vmem:[#allocation5] sm:$0xff]
    %v170 = vld [vmem:[#allocation5 + $0x8] sm:$0xff]
    %v171 = vld [vmem:[#allocation5 + $0x10] sm:$0xff]
    %v172 = vld [vmem:[#allocation5 + $0x18] sm:$0xff]
    %v173 = vld [vmem:[#allocation5 + $0x20] sm:$0xff]
    %v174 = vld [vmem:[#allocation5 + $0x28] sm:$0xff]
    %v175 = vld [vmem:[#allocation5 + $0x30] sm:$0xff]
    %v176 = vld [vmem:[#allocation5 + $0x38] sm:$0xff]
    %v177 = vld [vmem:[#allocation5 + $0x40] sm:$0xff]
    %v178 = vld [vmem:[#allocation5 + $0x48] sm:$0xff]
    %v179 = vld [vmem:[#allocation5 + $0x50] sm:$0xff]
    %v180 = vld [vmem:[#allocation5 + $0x58] sm:$0xff]
    %v181 = vld [vmem:[#allocation5 + $0x60] sm:$0xff]
    %v182 = vld [vmem:[#allocation5 + $0x68] sm:$0xff]
    %v183 = vld [vmem:[#allocation5 + $0x70] sm:$0xff]
    %v184 = vld [vmem:[#allocation5 + $0x78] sm:$0xff]
    %v185 = vld [vmem:[#allocation5 + $0x80] sm:$0xff]
    %v186 = vld [vmem:[#allocation5 + $0x88] sm:$0xff]
    %v187 = vld [vmem:[#allocation5 + $0x90] sm:$0xff]
    %v188 = vld [vmem:[#allocation5 + $0x98] sm:$0xff]
    %v189 = vld [vmem:[#allocation5 + $0xa0] sm:$0xff]
    %v190 = vld [vmem:[#allocation5 + $0xa8] sm:$0xff]
    %v191 = vld [vmem:[#allocation5 + $0xb0] sm:$0xff]
    %v192 = vld [vmem:[#allocation5 + $0xb8] sm:$0xff]
    %v193 = vld [vmem:[#allocation5 + $0xc0] sm:$0xff]
    %v194 = vld [vmem:[#allocation5 + $0xc8] sm:$0xff]
    %v195 = vld [vmem:[#allocation5 + $0xd0] sm:$0xff]
    %v196 = vld [vmem:[#allocation5 + $0xd8] sm:$0xff]
    %v197 = vld [vmem:[#allocation5 + $0xe0] sm:$0xff]
    %v198 = vld [vmem:[#allocation5 + $0xe8] sm:$0xff]
    %v199 = vld [vmem:[#allocation5 + $0xf0] sm:$0xff]
    %v200 = vld [vmem:[#allocation5 + $0xf8] sm:$0xff]
    %v201 = vld [vmem:[#allocation5 + $0x100] sm:$0xff]
    %v202 = vld [vmem:[#allocation5 + $0x108] sm:$0xff]
    %v203 = vld [vmem:[#allocation5 + $0x110] sm:$0xff]
    %v204 = vld [vmem:[#allocation5 + $0x118] sm:$0xff]
    %v205 = vld [vmem:[#allocation5 + $0x120] sm:$0xff]
    %v206 = vld [vmem:[#allocation5 + $0x128] sm:$0xff]
    %v207 = vld [vmem:[#allocation5 + $0x130] sm:$0xff]
    %v208 = vld [vmem:[#allocation5 + $0x138] sm:$0xff]
    %v209 = vld [vmem:[#allocation5 + $0x140] sm:$0xff]
    %v210 = vld [vmem:[#allocation5 + $0x148] sm:$0xff]
    %v211 = vld [vmem:[#allocation5 + $0x150] sm:$0xff]
    %v212 = vld [vmem:[#allocation5 + $0x158] sm:$0xff]
    %v213 = vld [vmem:[#allocation5 + $0x160] sm:$0xff]
    %v214 = vld [vmem:[#allocation5 + $0x168] sm:$0xff]
    %v215 = vld [vmem:[#allocation5 + $0x170] sm:$0xff]
    %v216 = vld [vmem:[#allocation5 + $0x178] sm:$0xff]
    %v217 = vld [vmem:[#allocation5 + $0x180] sm:$0xff]
    %v218 = vld [vmem:[#allocation5 + $0x188] sm:$0xff]
    %v219 = vld [vmem:[#allocation5 + $0x190] sm:$0xff]
    %v220 = vld [vmem:[#allocation5 + $0x198] sm:$0xff]
    %v221 = vld [vmem:[#allocation5 + $0x1a0] sm:$0xff]
    %v222 = vld [vmem:[#allocation5 + $0x1a8] sm:$0xff]
    %v223 = vld [vmem:[#allocation5 + $0x1b0] sm:$0xff]
    %v224 = vld [vmem:[#allocation5 + $0x1b8] sm:$0xff]
    %v225 = vld [vmem:[#allocation5 + $0x1c0] sm:$0xff]
    %v226 = vld [vmem:[#allocation5 + $0x1c8] sm:$0xff]
    %v227 = vld [vmem:[#allocation5 + $0x1d0] sm:$0xff]
    %v228 = vld [vmem:[#allocation5 + $0x1d8] sm:$0xff]
    %v229 = vld [vmem:[#allocation5 + $0x1e0] sm:$0xff]
    %v230 = vld [vmem:[#allocation5 + $0x1e8] sm:$0xff]
    %v231 = vld [vmem:[#allocation5 + $0x1f0] sm:$0xff]
    %v232 = vld [vmem:[#allocation5 + $0x1f8] sm:$0xff]
    %v233 = vld [vmem:[#allocation5 + $0x200] sm:$0xff]
    %v234 = vld [vmem:[#allocation5 + $0x208] sm:$0xff]
    %v235 = vld [vmem:[#allocation5 + $0x210] sm:$0xff]
    %v236 = vld [vmem:[#allocation5 + $0x218] sm:$0xff]
    %v237 = vld [vmem:[#allocation5 + $0x220] sm:$0xff]
    %v238 = vld [vmem:[#allocation5 + $0x228] sm:$0xff]
    %v239 = vld [vmem:[#allocation5 + $0x230] sm:$0xff]
    %v240 = vld [vmem:[#allocation5 + $0x238] sm:$0xff]
    %v241 = vld [vmem:[#allocation5 + $0x240] sm:$0xff]
    %v242 = vld [vmem:[#allocation5 + $0x248] sm:$0xff]
    %v243 = vld [vmem:[#allocation5 + $0x250] sm:$0xff]
    %v244 = vld [vmem:[#allocation5 + $0x258] sm:$0xff]
    %v245 = vld [vmem:[#allocation5 + $0x260] sm:$0xff]
    %v246 = vld [vmem:[#allocation5 + $0x268] sm:$0xff]
    %v247 = vld [vmem:[#allocation5 + $0x270] sm:$0xff]
    %v248 = vld [vmem:[#allocation5 + $0x278] sm:$0xff]
    %v249 = vld [vmem:[#allocation5 + $0x280] sm:$0xff]
    %v250 = vld [vmem:[#allocation5 + $0x288] sm:$0xff]
    %v251 = vld [vmem:[#allocation5 + $0x290] sm:$0xff]
    %v252 = vld [vmem:[#allocation5 + $0x298] sm:$0xff]
    %v253 = vld [vmem:[#allocation5 + $0x2a0] sm:$0xff]
    %v254 = vld [vmem:[#allocation5 + $0x2a8] sm:$0xff]
    %v255 = vld [vmem:[#allocation5 + $0x2b0] sm:$0xff]
    %v256 = vld [vmem:[#allocation5 + $0x2b8] sm:$0xff]
    %v257 = vld [vmem:[#allocation5 + $0x2c0] sm:$0xff]
    %v258 = vld [vmem:[#allocation5 + $0x2c8] sm:$0xff]
    %v259 = vld [vmem:[#allocation5 + $0x2d0] sm:$0xff]
    %v260 = vld [vmem:[#allocation5 + $0x2d8] sm:$0xff]
    %v261 = vld [vmem:[#allocation5 + $0x2e0] sm:$0xff]
    %v262 = vld [vmem:[#allocation5 + $0x2e8] sm:$0xff]
    %v263 = vld [vmem:[#allocation5 + $0x2f0] sm:$0xff]
    %v264 = vld [vmem:[#allocation5 + $0x2f8] sm:$0xff]
    %v265 = vld [vmem:[#allocation5 + $0x300] sm:$0xff]
    %v266 = vld [vmem:[#allocation5 + $0x308] sm:$0xff]
    %v267 = vld [vmem:[#allocation5 + $0x310] sm:$0xff]
    %v268 = vld [vmem:[#allocation5 + $0x318] sm:$0xff]
    %v269 = vld [vmem:[#allocation5 + $0x320] sm:$0xff]
    %v270 = vld [vmem:[#allocation5 + $0x328] sm:$0xff]
    %v271 = vld [vmem:[#allocation5 + $0x330] sm:$0xff]
    %v272 = vld [vmem:[#allocation5 + $0x338] sm:$0xff]
    %v273 = vld [vmem:[#allocation5 + $0x340] sm:$0xff]
    %v274 = vld [vmem:[#allocation5 + $0x348] sm:$0xff]
    %v275 = vld [vmem:[#allocation5 + $0x350] sm:$0xff]
    %v276 = vld [vmem:[#allocation5 + $0x358] sm:$0xff]
    %v277 = vld [vmem:[#allocation5 + $0x360] sm:$0xff]
    %v278 = vld [vmem:[#allocation5 + $0x368] sm:$0xff]
    %v279 = vld [vmem:[#allocation5 + $0x370] sm:$0xff]
    %v280 = vld [vmem:[#allocation5 + $0x378] sm:$0xff]
    %v281 = vld [vmem:[#allocation5 + $0x380] sm:$0xff]
    %v282 = vld [vmem:[#allocation5 + $0x388] sm:$0xff]
    %v283 = vld [vmem:[#allocation5 + $0x390] sm:$0xff]
    %v284 = vld [vmem:[#allocation5 + $0x398] sm:$0xff]
    %v285 = vld [vmem:[#allocation5 + $0x3a0] sm:$0xff]
    %v286 = vld [vmem:[#allocation5 + $0x3a8] sm:$0xff]
    %v287 = vld [vmem:[#allocation5 + $0x3b0] sm:$0xff]
    %v288 = vld [vmem:[#allocation5 + $0x3b8] sm:$0xff]
    %v289 = vld [vmem:[#allocation5 + $0x3c0] sm:$0xff]
    %v290 = vld [vmem:[#allocation5 + $0x3c8] sm:$0xff]
    %v291 = vld [vmem:[#allocation5 + $0x3d0] sm:$0xff]
    %v292 = vld [vmem:[#allocation5 + $0x3d8] sm:$0xff]
    %v293 = vld [vmem:[#allocation5 + $0x3e0] sm:$0xff]
    %v294 = vld [vmem:[#allocation5 + $0x3e8] sm:$0xff]
    %v295 = vld [vmem:[#allocation5 + $0x3f0] sm:$0xff]
    %v296 = vld [vmem:[#allocation5 + $0x3f8] sm:$0xff]
    %v297 = vld [vmem:[#allocation5 + $0x400] sm:$0xff]
    %v298 = vld [vmem:[#allocation5 + $0x408] sm:$0xff]
    %v299 = vld [vmem:[#allocation5 + $0x410] sm:$0xff]
    %v300 = vld [vmem:[#allocation5 + $0x418] sm:$0xff]
    %v301 = vld [vmem:[#allocation5 + $0x420] sm:$0xff]
    %v302 = vld [vmem:[#allocation5 + $0x428] sm:$0xff]
    %v303 = vld [vmem:[#allocation5 + $0x430] sm:$0xff]
    %v304 = vld [vmem:[#allocation5 + $0x438] sm:$0xff]
    %v305 = vld [vmem:[#allocation5 + $0x440] sm:$0xff]
    %v306 = vld [vmem:[#allocation5 + $0x448] sm:$0xff]
    %v307 = vld [vmem:[#allocation5 + $0x450] sm:$0xff]
    %v308 = vld [vmem:[#allocation5 + $0x458] sm:$0xff]
    %v309 = vld [vmem:[#allocation5 + $0x460] sm:$0xff]
    %v310 = vld [vmem:[#allocation5 + $0x468] sm:$0xff]
    %v311 = vld [vmem:[#allocation5 + $0x470] sm:$0xff]
    %v312 = vld [vmem:[#allocation5 + $0x478] sm:$0xff]
    %v313 = vld [vmem:[#allocation5 + $0x480] sm:$0xff]
    %v314 = vld [vmem:[#allocation5 + $0x488] sm:$0xff]
    %v315 = vld [vmem:[#allocation5 + $0x490] sm:$0xff]
    %v316 = vld [vmem:[#allocation5 + $0x498] sm:$0xff]
    %v317 = vld [vmem:[#allocation5 + $0x4a0] sm:$0xff]
    %v318 = vld [vmem:[#allocation5 + $0x4a8] sm:$0xff]
    %v319 = vld [vmem:[#allocation5 + $0x4b0] sm:$0xff]
    %v320 = vld [vmem:[#allocation5 + $0x4b8] sm:$0xff]
    %v321 = vld [vmem:[#allocation5 + $0x4c0] sm:$0xff]
    %v322 = vld [vmem:[#allocation5 + $0x4c8] sm:$0xff]
    %v323 = vld [vmem:[#allocation5 + $0x4d0] sm:$0xff]
    %v324 = vld [vmem:[#allocation5 + $0x4d8] sm:$0xff]
    %v325 = vld [vmem:[#allocation5 + $0x4e0] sm:$0xff]
    %v326 = vld [vmem:[#allocation5 + $0x4e8] sm:$0xff]
    %v327 = vld [vmem:[#allocation5 + $0x4f0] sm:$0xff]
    %v328 = vld [vmem:[#allocation5 + $0x4f8] sm:$0xff]
    %v329 = vld [vmem:[#allocation5 + $0x500] sm:$0xff]
    %v330 = vld [vmem:[#allocation5 + $0x508] sm:$0xff]
    %v331 = vld [vmem:[#allocation5 + $0x510] sm:$0xff]
    %v332 = vld [vmem:[#allocation5 + $0x518] sm:$0xff]
    %v333 = vld [vmem:[#allocation5 + $0x520] sm:$0xff]
    %v334 = vld [vmem:[#allocation5 + $0x528] sm:$0xff]
    %v335 = vld [vmem:[#allocation5 + $0x530] sm:$0xff]
    %v336 = vld [vmem:[#allocation5 + $0x538] sm:$0xff]
    %v337 = vld [vmem:[#allocation5 + $0x540] sm:$0xff]
    %v338 = vld [vmem:[#allocation5 + $0x548] sm:$0xff]
    %v339 = vld [vmem:[#allocation5 + $0x550] sm:$0xff]
    %v340 = vld [vmem:[#allocation5 + $0x558] sm:$0xff]
    %v341 = vld [vmem:[#allocation5 + $0x560] sm:$0xff]
    %v342 = vld [vmem:[#allocation5 + $0x568] sm:$0xff]
    %v343 = vld [vmem:[#allocation5 + $0x570] sm:$0xff]
    %v344 = vld [vmem:[#allocation5 + $0x578] sm:$0xff]
    %v345 = vld [vmem:[#allocation5 + $0x580] sm:$0xff]
    %v346 = vld [vmem:[#allocation5 + $0x588] sm:$0xff]
    %v347 = vld [vmem:[#allocation5 + $0x590] sm:$0xff]
    %v348 = vld [vmem:[#allocation5 + $0x598] sm:$0xff]
    %v349 = vld [vmem:[#allocation5 + $0x5a0] sm:$0xff]
    %v350 = vld [vmem:[#allocation5 + $0x5a8] sm:$0xff]
    %v351 = vld [vmem:[#allocation5 + $0x5b0] sm:$0xff]
    %v352 = vld [vmem:[#allocation5 + $0x5b8] sm:$0xff]
    %v353 = vld [vmem:[#allocation5 + $0x5c0] sm:$0xff]
    %v354 = vld [vmem:[#allocation5 + $0x5c8] sm:$0xff]
    %v355 = vld [vmem:[#allocation5 + $0x5d0] sm:$0xff]
    %v356 = vld [vmem:[#allocation5 + $0x5d8] sm:$0xff]
    %v357 = vld [vmem:[#allocation5 + $0x5e0] sm:$0xff]
    %v358 = vld [vmem:[#allocation5 + $0x5e8] sm:$0xff]
    %v359 = vld [vmem:[#allocation5 + $0x5f0] sm:$0xff]
    %v360 = vld [vmem:[#allocation5 + $0x5f8] sm:$0xff]
    %v361 = vld [vmem:[#allocation5 + $0x600] sm:$0xff]
    %v362 = vld [vmem:[#allocation5 + $0x608] sm:$0xff]
    %v363 = vld [vmem:[#allocation5 + $0x610] sm:$0xff]
    %v364 = vld [vmem:[#allocation5 + $0x618] sm:$0xff]
    %v365 = vld [vmem:[#allocation5 + $0x620] sm:$0xff]
    %v366 = vld [vmem:[#allocation5 + $0x628] sm:$0xff]
    %v367 = vld [vmem:[#allocation5 + $0x630] sm:$0xff]
    %v368 = vld [vmem:[#allocation5 + $0x638] sm:$0xff]
    %v369 = vld [vmem:[#allocation5 + $0x640] sm:$0xff]
    %v370 = vld [vmem:[#allocation5 + $0x648] sm:$0xff]
    %v371 = vld [vmem:[#allocation5 + $0x650] sm:$0xff]
    %v372 = vld [vmem:[#allocation5 + $0x658] sm:$0xff]
    %v373 = vld [vmem:[#allocation5 + $0x660] sm:$0xff]
    %v374 = vld [vmem:[#allocation5 + $0x668] sm:$0xff]
    %v375 = vld [vmem:[#allocation5 + $0x670] sm:$0xff]
    %v376 = vld [vmem:[#allocation5 + $0x678] sm:$0xff]
    %v377 = vld [vmem:[#allocation5 + $0x680] sm:$0xff]
    %v378 = vld [vmem:[#allocation5 + $0x688] sm:$0xff]
    %v379 = vld [vmem:[#allocation5 + $0x690] sm:$0xff]
    %v380 = vld [vmem:[#allocation5 + $0x698] sm:$0xff]
    %v381 = vld [vmem:[#allocation5 + $0x6a0] sm:$0xff]
    %v382 = vld [vmem:[#allocation5 + $0x6a8] sm:$0xff]
    %v383 = vld [vmem:[#allocation5 + $0x6b0] sm:$0xff]
    %v384 = vld [vmem:[#allocation5 + $0x6b8] sm:$0xff]
    %v385 = vld [vmem:[#allocation5 + $0x6c0] sm:$0xff]
    %v386 = vld [vmem:[#allocation5 + $0x6c8] sm:$0xff]
    %v387 = vld [vmem:[#allocation5 + $0x6d0] sm:$0xff]
    %v388 = vld [vmem:[#allocation5 + $0x6d8] sm:$0xff]
    %v389 = vld [vmem:[#allocation5 + $0x6e0] sm:$0xff]
    %v390 = vld [vmem:[#allocation5 + $0x6e8] sm:$0xff]
    %v391 = vld [vmem:[#allocation5 + $0x6f0] sm:$0xff]
    %v392 = vld [vmem:[#allocation5 + $0x6f8] sm:$0xff]
    %v393 = vld [vmem:[#allocation5 + $0x700] sm:$0xff]
    %v394 = vld [vmem:[#allocation5 + $0x708] sm:$0xff]
    %v395 = vld [vmem:[#allocation5 + $0x710] sm:$0xff]
    %v396 = vld [vmem:[#allocation5 + $0x718] sm:$0xff]
    %v397 = vld [vmem:[#allocation5 + $0x720] sm:$0xff]
    %v398 = vld [vmem:[#allocation5 + $0x728] sm:$0xff]
    %v399 = vld [vmem:[#allocation5 + $0x730] sm:$0xff]
    %v400 = vld [vmem:[#allocation5 + $0x738] sm:$0xff]
    %v401 = vld [vmem:[#allocation5 + $0x740] sm:$0xff]
    %v402 = vld [vmem:[#allocation5 + $0x748] sm:$0xff]
    %v403 = vld [vmem:[#allocation5 + $0x750] sm:$0xff]
    %v404 = vld [vmem:[#allocation5 + $0x758] sm:$0xff]
    %v405 = vld [vmem:[#allocation5 + $0x760] sm:$0xff]
    %v406 = vld [vmem:[#allocation5 + $0x768] sm:$0xff]
    %v407 = vld [vmem:[#allocation5 + $0x770] sm:$0xff]
    %v408 = vld [vmem:[#allocation5 + $0x778] sm:$0xff]
    %v409 = vld [vmem:[#allocation5 + $0x780] sm:$0xff]
    %v410 = vld [vmem:[#allocation5 + $0x788] sm:$0xff]
    %v411 = vld [vmem:[#allocation5 + $0x790] sm:$0xff]
    %v412 = vld [vmem:[#allocation5 + $0x798] sm:$0xff]
    %v413 = vld [vmem:[#allocation5 + $0x7a0] sm:$0xff]
    %v414 = vld [vmem:[#allocation5 + $0x7a8] sm:$0xff]
    %v415 = vld [vmem:[#allocation5 + $0x7b0] sm:$0xff]
    %v416 = vld [vmem:[#allocation5 + $0x7b8] sm:$0xff]
    %v417 = vld [vmem:[#allocation5 + $0x7c0] sm:$0xff]
    %v418 = vld [vmem:[#allocation5 + $0x7c8] sm:$0xff]
    %v419 = vld [vmem:[#allocation5 + $0x7d0] sm:$0xff]
    %v420 = vld [vmem:[#allocation5 + $0x7d8] sm:$0xff]
    %v421 = vld [vmem:[#allocation5 + $0x7e0] sm:$0xff]
    %v422 = vld [vmem:[#allocation5 + $0x7e8] sm:$0xff]
    %v423 = vld [vmem:[#allocation5 + $0x7f0] sm:$0xff]
    %v424 = vld [vmem:[#allocation5 + $0x7f8] sm:$0xff]
    %v425 = vld [vmem:[#allocation5 + $0x800] sm:$0xff]
    %v426 = vld [vmem:[#allocation5 + $0x808] sm:$0xff]
    %v427 = vld [vmem:[#allocation5 + $0x810] sm:$0xff]
    %v428 = vld [vmem:[#allocation5 + $0x818] sm:$0xff]
    %v429 = vld [vmem:[#allocation5 + $0x820] sm:$0xff]
    %v430 = vld [vmem:[#allocation5 + $0x828] sm:$0xff]
    %v431 = vld [vmem:[#allocation5 + $0x830] sm:$0xff]
    %v432 = vld [vmem:[#allocation5 + $0x838] sm:$0xff]
    %v433 = vld [vmem:[#allocation5 + $0x840] sm:$0xff]
    %v434 = vld [vmem:[#allocation5 + $0x848] sm:$0xff]
    %v435 = vld [vmem:[#allocation5 + $0x850] sm:$0xff]
    %v436 = vld [vmem:[#allocation5 + $0x858] sm:$0xff]
    %v437 = vld [vmem:[#allocation5 + $0x860] sm:$0xff]
    %v438 = vld [vmem:[#allocation5 + $0x868] sm:$0xff]
    %v439 = vld [vmem:[#allocation5 + $0x870] sm:$0xff]
    %v440 = vld [vmem:[#allocation5 + $0x878] sm:$0xff]
    %v441 = vld [vmem:[#allocation5 + $0x880] sm:$0xff]
    %v442 = vld [vmem:[#allocation5 + $0x888] sm:$0xff]
    %v443 = vld [vmem:[#allocation5 + $0x890] sm:$0xff]
    %v444 = vld [vmem:[#allocation5 + $0x898] sm:$0xff]
    %v445 = vld [vmem:[#allocation5 + $0x8a0] sm:$0xff]
    %v446 = vld [vmem:[#allocation5 + $0x8a8] sm:$0xff]
    %v447 = vld [vmem:[#allocation5 + $0x8b0] sm:$0xff]
    %v448 = vld [vmem:[#allocation5 + $0x8b8] sm:$0xff]
    %v449 = vld [vmem:[#allocation5 + $0x8c0] sm:$0xff]
    %v450 = vld [vmem:[#allocation5 + $0x8c8] sm:$0xff]
    %v451 = vld [vmem:[#allocation5 + $0x8d0] sm:$0xff]
    %v452 = vld [vmem:[#allocation5 + $0x8d8] sm:$0xff]
    %v453 = vld [vmem:[#allocation5 + $0x8e0] sm:$0xff]
    %v454 = vld [vmem:[#allocation5 + $0x8e8] sm:$0xff]
    %v455 = vld [vmem:[#allocation5 + $0x8f0] sm:$0xff]
    %v456 = vld [vmem:[#allocation5 + $0x8f8] sm:$0xff]
    %v457 = vld [vmem:[#allocation5 + $0x900] sm:$0xff]
    %v458 = vld [vmem:[#allocation5 + $0x908] sm:$0xff]
    %v459 = vld [vmem:[#allocation5 + $0x910] sm:$0xff]
    %v460 = vld [vmem:[#allocation5 + $0x918] sm:$0xff]
    %v461 = vld [vmem:[#allocation5 + $0x920] sm:$0xff]
    %v462 = vld [vmem:[#allocation5 + $0x928] sm:$0xff]
    %v463 = vld [vmem:[#allocation5 + $0x930] sm:$0xff]
    %v464 = vld [vmem:[#allocation5 + $0x938] sm:$0xff]
    %v465 = vld [vmem:[#allocation5 + $0x940] sm:$0xff]
    %v466 = vld [vmem:[#allocation5 + $0x948] sm:$0xff]
    %v467 = vld [vmem:[#allocation5 + $0x950] sm:$0xff]
    %v468 = vld [vmem:[#allocation5 + $0x958] sm:$0xff]
    %v469 = vld [vmem:[#allocation5 + $0x960] sm:$0xff]
    %v470 = vld [vmem:[#allocation5 + $0x968] sm:$0xff]
    %v471 = vld [vmem:[#allocation5 + $0x970] sm:$0xff]
    %v472 = vld [vmem:[#allocation5 + $0x978] sm:$0xff]
    %v473 = vld [vmem:[#allocation5 + $0x980] sm:$0xff]
    %v474 = vld [vmem:[#allocation5 + $0x988] sm:$0xff]
    %v475 = vld [vmem:[#allocation5 + $0x990] sm:$0xff]
    %v476 = vld [vmem:[#allocation5 + $0x998] sm:$0xff]
    %v477 = vld [vmem:[#allocation5 + $0x9a0] sm:$0xff]
    %v478 = vld [vmem:[#allocation5 + $0x9a8] sm:$0xff]
    %v479 = vld [vmem:[#allocation5 + $0x9b0] sm:$0xff]
    %v480 = vld [vmem:[#allocation5 + $0x9b8] sm:$0xff]
    %v481 = vld [vmem:[#allocation5 + $0x9c0] sm:$0xff]
    %v482 = vld [vmem:[#allocation5 + $0x9c8] sm:$0xff]
    %v483 = vld [vmem:[#allocation5 + $0x9d0] sm:$0xff]
    %v484 = vld [vmem:[#allocation5 + $0x9d8] sm:$0xff]
    %v485 = vld [vmem:[#allocation5 + $0x9e0] sm:$0xff]
    %v486 = vld [vmem:[#allocation5 + $0x9e8] sm:$0xff]
    %v487 = vld [vmem:[#allocation5 + $0x9f0] sm:$0xff]
    %v488 = vld [vmem:[#allocation5 + $0x9f8] sm:$0xff]
    %v489 = vld [vmem:[#allocation5 + $0xa00] sm:$0xff]
    %v490 = vld [vmem:[#allocation5 + $0xa08] sm:$0xff]
    %v491 = vld [vmem:[#allocation5 + $0xa10] sm:$0xff]
    %v492 = vld [vmem:[#allocation5 + $0xa18] sm:$0xff]
    %v493 = vld [vmem:[#allocation5 + $0xa20] sm:$0xff]
    %v494 = vld [vmem:[#allocation5 + $0xa28] sm:$0xff]
    %v495 = vld [vmem:[#allocation5 + $0xa30] sm:$0xff]
    %v496 = vld [vmem:[#allocation5 + $0xa38] sm:$0xff]
    %v497 = vld [vmem:[#allocation5 + $0xa40] sm:$0xff]
    %v498 = vld [vmem:[#allocation5 + $0xa48] sm:$0xff]
    %v499 = vld [vmem:[#allocation5 + $0xa50] sm:$0xff]
    %v500 = vld [vmem:[#allocation5 + $0xa58] sm:$0xff]
    %v501 = vld [vmem:[#allocation5 + $0xa60] sm:$0xff]
    %v502 = vld [vmem:[#allocation5 + $0xa68] sm:$0xff]
    %v503 = vld [vmem:[#allocation5 + $0xa70] sm:$0xff]
    %v504 = vld [vmem:[#allocation5 + $0xa78] sm:$0xff]
    %v505 = vld [vmem:[#allocation5 + $0xa80] sm:$0xff]
    %v506 = vld [vmem:[#allocation5 + $0xa88] sm:$0xff]
    %v507 = vld [vmem:[#allocation5 + $0xa90] sm:$0xff]
    %v508 = vld [vmem:[#allocation5 + $0xa98] sm:$0xff]
    %v509 = vld [vmem:[#allocation5 + $0xaa0] sm:$0xff]
    %v510 = vld [vmem:[#allocation5 + $0xaa8] sm:$0xff]
    %v511 = vld [vmem:[#allocation5 + $0xab0] sm:$0xff]
    %v512 = vld [vmem:[#allocation5 + $0xab8] sm:$0xff]
    %v513 = vld [vmem:[#allocation5 + $0xac0] sm:$0xff]
    %v514 = vld [vmem:[#allocation5 + $0xac8] sm:$0xff]
    %v515 = vld [vmem:[#allocation5 + $0xad0] sm:$0xff]
    %v516 = vld [vmem:[#allocation5 + $0xad8] sm:$0xff]
    %v517 = vld [vmem:[#allocation5 + $0xae0] sm:$0xff]
    %v518 = vld [vmem:[#allocation5 + $0xae8] sm:$0xff]
    %v519 = vld [vmem:[#allocation5 + $0xaf0] sm:$0xff]
    %v520 = vld [vmem:[#allocation5 + $0xaf8] sm:$0xff]
    %v521 = vld [vmem:[#allocation5 + $0xb00] sm:$0xff]
    %v522 = vld [vmem:[#allocation5 + $0xb08] sm:$0xff]
    %v523 = vld [vmem:[#allocation5 + $0xb10] sm:$0xff]
    %v524 = vld [vmem:[#allocation5 + $0xb18] sm:$0xff]
    %v525 = vld [vmem:[#allocation5 + $0xb20] sm:$0xff]
    %v526 = vld [vmem:[#allocation5 + $0xb28] sm:$0xff]
    %v527 = vld [vmem:[#allocation5 + $0xb30] sm:$0xff]
    %v528 = vld [vmem:[#allocation5 + $0xb38] sm:$0xff]
    %v529 = vld [vmem:[#allocation5 + $0xb40] sm:$0xff]
    %v530 = vld [vmem:[#allocation5 + $0xb48] sm:$0xff]
    %v531 = vld [vmem:[#allocation5 + $0xb50] sm:$0xff]
    %v532 = vld [vmem:[#allocation5 + $0xb58] sm:$0xff]
    %v533 = vld [vmem:[#allocation5 + $0xb60] sm:$0xff]
    %v534 = vld [vmem:[#allocation5 + $0xb68] sm:$0xff]
    %v535 = vld [vmem:[#allocation5 + $0xb70] sm:$0xff]
    %v536 = vld [vmem:[#allocation5 + $0xb78] sm:$0xff]
    %v537 = vld [vmem:[#allocation5 + $0xb80] sm:$0xff]
    %v538 = vld [vmem:[#allocation5 + $0xb88] sm:$0xff]
    %v539 = vld [vmem:[#allocation5 + $0xb90] sm:$0xff]
    %v540 = vld [vmem:[#allocation5 + $0xb98] sm:$0xff]
    %v541 = vld [vmem:[#allocation5 + $0xba0] sm:$0xff]
    %v542 = vld [vmem:[#allocation5 + $0xba8] sm:$0xff]
    %v543 = vld [vmem:[#allocation5 + $0xbb0] sm:$0xff]
    %v544 = vld [vmem:[#allocation5 + $0xbb8] sm:$0xff]
    %v545 = vld [vmem:[#allocation5 + $0xbc0] sm:$0xff]
    %v546 = vld [vmem:[#allocation5 + $0xbc8] sm:$0xff]
    %v547 = vld [vmem:[#allocation5 + $0xbd0] sm:$0xff]
    %v548 = vld [vmem:[#allocation5 + $0xbd8] sm:$0xff]
    %v549 = vld [vmem:[#allocation5 + $0xbe0] sm:$0xff]
    %v550 = vld [vmem:[#allocation5 + $0xbe8] sm:$0xff]
    %v551 = vld [vmem:[#allocation5 + $0xbf0] sm:$0xff]
    %v552 = vld [vmem:[#allocation5 + $0xbf8] sm:$0xff]
    %v553 = vld [vmem:[#allocation5 + $0xc00] sm:$0xff]
    %v554 = vld [vmem:[#allocation5 + $0xc08] sm:$0xff]
    %v555 = vld [vmem:[#allocation5 + $0xc10] sm:$0xff]
    %v556 = vld [vmem:[#allocation5 + $0xc18] sm:$0xff]
    %v557 = vld [vmem:[#allocation5 + $0xc20] sm:$0xff]
    %v558 = vld [vmem:[#allocation5 + $0xc28] sm:$0xff]
    %v559 = vld [vmem:[#allocation5 + $0xc30] sm:$0xff]
    %v560 = vld [vmem:[#allocation5 + $0xc38] sm:$0xff]
    %v561 = vld [vmem:[#allocation7] sm:$0xff]
    %v563 = vlaneseq
    %v564 = vshrl.u32 %v563, 7
    %v565 = vsub.s32 0, %v564
    %v566 = vrot.slane %v561, %v565
    %v567 = vlaneseq
    %v568 = vshrl.u32 %v567, 7
    %v569 = vsub.s32 1, %v568
    %v570 = vrot.slane %v561, %v569
    %v571 = vlaneseq
    %v572 = vshrl.u32 %v571, 7
    %v573 = vsub.s32 2, %v572
    %v574 = vrot.slane %v561, %v573
    %v575 = vlaneseq
    %v576 = vshrl.u32 %v575, 7
    %v577 = vsub.s32 3, %v576
    %v578 = vrot.slane %v561, %v577
    %v579 = vlaneseq
    %v580 = vshrl.u32 %v579, 7
    %v581 = vsub.s32 4, %v580
    %v582 = vrot.slane %v561, %v581
    %v583 = vlaneseq
    %v584 = vshrl.u32 %v583, 7
    %v585 = vsub.s32 5, %v584
    %v586 = vrot.slane %v561, %v585
    %v587 = vlaneseq
    %v588 = vshrl.u32 %v587, 7
    %v589 = vsub.s32 6, %v588
    %v590 = vrot.slane %v561, %v589
    %v591 = vlaneseq
    %v592 = vshrl.u32 %v591, 7
    %v593 = vsub.s32 7, %v592
    %v594 = vrot.slane %v561, %v593
    %v995 = vunpack.c.l.b16 %v169
    %v996 = vunpack.c.h.b16 %v169
    %v997 = vunpack.c.l.b16 %v170
    %v998 = vunpack.c.h.b16 %v170
    %v999 = vunpack.c.l.b16 %v171
    %v1000 = vunpack.c.h.b16 %v171
    %v1001 = vunpack.c.l.b16 %v172
    %v1002 = vunpack.c.h.b16 %v172
    %v1003 = vunpack.c.l.b16 %v173
    %v1004 = vunpack.c.h.b16 %v173
    %v1005 = vunpack.c.l.b16 %v174
    %v1006 = vunpack.c.h.b16 %v174
    %v1007 = vunpack.c.l.b16 %v175
    %v1008 = vunpack.c.h.b16 %v175
    %v1009 = vunpack.c.l.b16 %v176
    %v1010 = vunpack.c.h.b16 %v176
    %v1011 = vunpack.c.l.b16 %v177
    %v1012 = vunpack.c.h.b16 %v177
    %v1013 = vunpack.c.l.b16 %v178
    %v1014 = vunpack.c.h.b16 %v178
    %v1015 = vunpack.c.l.b16 %v179
    %v1016 = vunpack.c.h.b16 %v179
    %v1017 = vunpack.c.l.b16 %v180
    %v1018 = vunpack.c.h.b16 %v180
    %v1019 = vunpack.c.l.b16 %v181
    %v1020 = vunpack.c.h.b16 %v181
    %v1021 = vunpack.c.l.b16 %v182
    %v1022 = vunpack.c.h.b16 %v182
    %v1023 = vunpack.c.l.b16 %v183
    %v1024 = vunpack.c.h.b16 %v183
    %v1025 = vunpack.c.l.b16 %v184
    %v1026 = vunpack.c.h.b16 %v184
    %v1027 = vunpack.c.l.b16 %v185
    %v1028 = vunpack.c.h.b16 %v185
    %v1029 = vunpack.c.l.b16 %v186
    %v1030 = vunpack.c.h.b16 %v186
    %v1031 = vunpack.c.l.b16 %v187
    %v1032 = vunpack.c.h.b16 %v187
    %v1033 = vunpack.c.l.b16 %v188
    %v1034 = vunpack.c.h.b16 %v188
    %v1035 = vunpack.c.l.b16 %v189
    %v1036 = vunpack.c.h.b16 %v189
    %v1037 = vunpack.c.l.b16 %v190
    %v1038 = vunpack.c.h.b16 %v190
    %v1039 = vunpack.c.l.b16 %v191
    %v1040 = vunpack.c.h.b16 %v191
    %v1041 = vunpack.c.l.b16 %v192
    %v1042 = vunpack.c.h.b16 %v192
    %v1043 = vunpack.c.l.b16 %v193
    %v1044 = vunpack.c.h.b16 %v193
    %v1045 = vunpack.c.l.b16 %v194
    %v1046 = vunpack.c.h.b16 %v194
    %v1047 = vunpack.c.l.b16 %v195
    %v1048 = vunpack.c.h.b16 %v195
    %v1049 = vunpack.c.l.b16 %v196
    %v1050 = vunpack.c.h.b16 %v196
    %v1051 = vunpack.c.l.b16 %v197
    %v1052 = vunpack.c.h.b16 %v197
    %v1053 = vunpack.c.l.b16 %v198
    %v1054 = vunpack.c.h.b16 %v198
    %v1055 = vunpack.c.l.b16 %v199
    %v1056 = vunpack.c.h.b16 %v199
    %v1057 = vunpack.c.l.b16 %v200
    %v1058 = vunpack.c.h.b16 %v200
    %v1059 = vunpack.c.l.b16 %v201
    %v1060 = vunpack.c.h.b16 %v201
    %v1061 = vunpack.c.l.b16 %v202
    %v1062 = vunpack.c.h.b16 %v202
    %v1063 = vunpack.c.l.b16 %v203
    %v1064 = vunpack.c.h.b16 %v203
    %v1065 = vunpack.c.l.b16 %v204
    %v1066 = vunpack.c.h.b16 %v204
    %v1067 = vunpack.c.l.b16 %v205
    %v1068 = vunpack.c.h.b16 %v205
    %v1069 = vunpack.c.l.b16 %v206
    %v1070 = vunpack.c.h.b16 %v206
    %v1071 = vunpack.c.l.b16 %v207
    %v1072 = vunpack.c.h.b16 %v207
    %v1073 = vunpack.c.l.b16 %v208
    %v1074 = vunpack.c.h.b16 %v208
    %v1075 = vunpack.c.l.b16 %v209
    %v1076 = vunpack.c.h.b16 %v209
    %v1077 = vunpack.c.l.b16 %v210
    %v1078 = vunpack.c.h.b16 %v210
    %v1079 = vunpack.c.l.b16 %v211
    %v1080 = vunpack.c.h.b16 %v211
    %v1081 = vunpack.c.l.b16 %v212
    %v1082 = vunpack.c.h.b16 %v212
    %v1083 = vunpack.c.l.b16 %v213
    %v1084 = vunpack.c.h.b16 %v213
    %v1085 = vunpack.c.l.b16 %v214
    %v1086 = vunpack.c.h.b16 %v214
    %v1087 = vunpack.c.l.b16 %v215
    %v1088 = vunpack.c.h.b16 %v215
    %v1089 = vunpack.c.l.b16 %v216
    %v1090 = vunpack.c.h.b16 %v216
    %v1091 = vunpack.c.l.b16 %v217
    %v1092 = vunpack.c.h.b16 %v217
    %v1093 = vunpack.c.l.b16 %v218
    %v1094 = vunpack.c.h.b16 %v218
    %v1095 = vunpack.c.l.b16 %v219
    %v1096 = vunpack.c.h.b16 %v219
    %v1097 = vunpack.c.l.b16 %v220
    %v1098 = vunpack.c.h.b16 %v220
    %v1099 = vunpack.c.l.b16 %v221
    %v1100 = vunpack.c.h.b16 %v221
    %v1101 = vunpack.c.l.b16 %v222
    %v1102 = vunpack.c.h.b16 %v222
    %v1103 = vunpack.c.l.b16 %v223
    %v1104 = vunpack.c.h.b16 %v223
    %v1105 = vunpack.c.l.b16 %v224
    %v1106 = vunpack.c.h.b16 %v224
    %v1107 = vunpack.c.l.b16 %v225
    %v1108 = vunpack.c.h.b16 %v225
    %v1109 = vunpack.c.l.b16 %v226
    %v1110 = vunpack.c.h.b16 %v226
    %v1111 = vunpack.c.l.b16 %v227
    %v1112 = vunpack.c.h.b16 %v227
    %v1113 = vunpack.c.l.b16 %v228
    %v1114 = vunpack.c.h.b16 %v228
    %v1115 = vunpack.c.l.b16 %v229
    %v1116 = vunpack.c.h.b16 %v229
    %v1117 = vunpack.c.l.b16 %v230
    %v1118 = vunpack.c.h.b16 %v230
    %v1119 = vunpack.c.l.b16 %v231
    %v1120 = vunpack.c.h.b16 %v231
    %v1121 = vunpack.c.l.b16 %v232
    %v1122 = vunpack.c.h.b16 %v232
    %v1123 = vunpack.c.l.b16 %v233
    %v1124 = vunpack.c.h.b16 %v233
    %v1125 = vunpack.c.l.b16 %v234
    %v1126 = vunpack.c.h.b16 %v234
    %v1127 = vunpack.c.l.b16 %v235
    %v1128 = vunpack.c.h.b16 %v235
    %v1129 = vunpack.c.l.b16 %v236
    %v1130 = vunpack.c.h.b16 %v236
    %v1131 = vunpack.c.l.b16 %v237
    %v1132 = vunpack.c.h.b16 %v237
    %v1133 = vunpack.c.l.b16 %v238
    %v1134 = vunpack.c.h.b16 %v238
    %v1135 = vunpack.c.l.b16 %v239
    %v1136 = vunpack.c.h.b16 %v239
    %v1137 = vunpack.c.l.b16 %v240
    %v1138 = vunpack.c.h.b16 %v240
    %v1139 = vunpack.c.l.b16 %v241
    %v1140 = vunpack.c.h.b16 %v241
    %v1141 = vunpack.c.l.b16 %v242
    %v1142 = vunpack.c.h.b16 %v242
    %v1143 = vunpack.c.l.b16 %v243
    %v1144 = vunpack.c.h.b16 %v243
    %v1145 = vunpack.c.l.b16 %v244
    %v1146 = vunpack.c.h.b16 %v244
    %v1147 = vunpack.c.l.b16 %v245
    %v1148 = vunpack.c.h.b16 %v245
    %v1149 = vunpack.c.l.b16 %v246
    %v1150 = vunpack.c.h.b16 %v246
    %v1151 = vunpack.c.l.b16 %v247
    %v1152 = vunpack.c.h.b16 %v247
    %v1153 = vunpack.c.l.b16 %v248
    %v1154 = vunpack.c.h.b16 %v248
    %v1155 = vunpack.c.l.b16 %v249
    %v1156 = vunpack.c.h.b16 %v249
    %v1157 = vunpack.c.l.b16 %v250
    %v1158 = vunpack.c.h.b16 %v250
    %v1159 = vunpack.c.l.b16 %v251
    %v1160 = vunpack.c.h.b16 %v251
    %v1161 = vunpack.c.l.b16 %v252
    %v1162 = vunpack.c.h.b16 %v252
    %v1163 = vunpack.c.l.b16 %v253
    %v1164 = vunpack.c.h.b16 %v253
    %v1165 = vunpack.c.l.b16 %v254
    %v1166 = vunpack.c.h.b16 %v254
    %v1167 = vunpack.c.l.b16 %v255
    %v1168 = vunpack.c.h.b16 %v255
    %v1169 = vunpack.c.l.b16 %v256
    %v1170 = vunpack.c.h.b16 %v256
    %v1171 = vunpack.c.l.b16 %v257
    %v1172 = vunpack.c.h.b16 %v257
    %v1173 = vunpack.c.l.b16 %v258
    %v1174 = vunpack.c.h.b16 %v258
    %v1175 = vunpack.c.l.b16 %v259
    %v1176 = vunpack.c.h.b16 %v259
    %v1177 = vunpack.c.l.b16 %v260
    %v1178 = vunpack.c.h.b16 %v260
    %v1179 = vunpack.c.l.b16 %v261
    %v1180 = vunpack.c.h.b16 %v261
    %v1181 = vunpack.c.l.b16 %v262
    %v1182 = vunpack.c.h.b16 %v262
    %v1183 = vunpack.c.l.b16 %v263
    %v1184 = vunpack.c.h.b16 %v263
    %v1185 = vunpack.c.l.b16 %v264
    %v1186 = vunpack.c.h.b16 %v264
    %v1187 = vunpack.c.l.b16 %v265
    %v1188 = vunpack.c.h.b16 %v265
    %v1189 = vunpack.c.l.b16 %v266
    %v1190 = vunpack.c.h.b16 %v266
    %v1191 = vunpack.c.l.b16 %v267
    %v1192 = vunpack.c.h.b16 %v267
    %v1193 = vunpack.c.l.b16 %v268
    %v1194 = vunpack.c.h.b16 %v268
    %v1195 = vunpack.c.l.b16 %v269
    %v1196 = vunpack.c.h.b16 %v269
    %v1197 = vunpack.c.l.b16 %v270
    %v1198 = vunpack.c.h.b16 %v270
    %v1199 = vunpack.c.l.b16 %v271
    %v1200 = vunpack.c.h.b16 %v271
    %v1201 = vunpack.c.l.b16 %v272
    %v1202 = vunpack.c.h.b16 %v272
    %v1203 = vunpack.c.l.b16 %v273
    %v1204 = vunpack.c.h.b16 %v273
    %v1205 = vunpack.c.l.b16 %v274
    %v1206 = vunpack.c.h.b16 %v274
    %v1207 = vunpack.c.l.b16 %v275
    %v1208 = vunpack.c.h.b16 %v275
    %v1209 = vunpack.c.l.b16 %v276
    %v1210 = vunpack.c.h.b16 %v276
    %v1211 = vunpack.c.l.b16 %v277
    %v1212 = vunpack.c.h.b16 %v277
    %v1213 = vunpack.c.l.b16 %v278
    %v1214 = vunpack.c.h.b16 %v278
    %v1215 = vunpack.c.l.b16 %v279
    %v1216 = vunpack.c.h.b16 %v279
    %v1217 = vunpack.c.l.b16 %v280
    %v1218 = vunpack.c.h.b16 %v280
    %v1219 = vunpack.c.l.b16 %v281
    %v1220 = vunpack.c.h.b16 %v281
    %v1221 = vunpack.c.l.b16 %v282
    %v1222 = vunpack.c.h.b16 %v282
    %v1223 = vunpack.c.l.b16 %v283
    %v1224 = vunpack.c.h.b16 %v283
    %v1225 = vunpack.c.l.b16 %v284
    %v1226 = vunpack.c.h.b16 %v284
    %v1227 = vunpack.c.l.b16 %v285
    %v1228 = vunpack.c.h.b16 %v285
    %v1229 = vunpack.c.l.b16 %v286
    %v1230 = vunpack.c.h.b16 %v286
    %v1231 = vunpack.c.l.b16 %v287
    %v1232 = vunpack.c.h.b16 %v287
    %v1233 = vunpack.c.l.b16 %v288
    %v1234 = vunpack.c.h.b16 %v288
    %v1235 = vunpack.c.l.b16 %v289
    %v1236 = vunpack.c.h.b16 %v289
    %v1237 = vunpack.c.l.b16 %v290
    %v1238 = vunpack.c.h.b16 %v290
    %v1239 = vunpack.c.l.b16 %v291
    %v1240 = vunpack.c.h.b16 %v291
    %v1241 = vunpack.c.l.b16 %v292
    %v1242 = vunpack.c.h.b16 %v292
    %v1243 = vunpack.c.l.b16 %v293
    %v1244 = vunpack.c.h.b16 %v293
    %v1245 = vunpack.c.l.b16 %v294
    %v1246 = vunpack.c.h.b16 %v294
    %v1247 = vunpack.c.l.b16 %v295
    %v1248 = vunpack.c.h.b16 %v295
    %v1249 = vunpack.c.l.b16 %v296
    %v1250 = vunpack.c.h.b16 %v296
    %v1251 = vunpack.c.l.b16 %v297
    %v1252 = vunpack.c.h.b16 %v297
    %v1253 = vunpack.c.l.b16 %v298
    %v1254 = vunpack.c.h.b16 %v298
    %v1255 = vunpack.c.l.b16 %v299
    %v1256 = vunpack.c.h.b16 %v299
    %v1257 = vunpack.c.l.b16 %v300
    %v1258 = vunpack.c.h.b16 %v300
    %v1259 = vunpack.c.l.b16 %v301
    %v1260 = vunpack.c.h.b16 %v301
    %v1261 = vunpack.c.l.b16 %v302
    %v1262 = vunpack.c.h.b16 %v302
    %v1263 = vunpack.c.l.b16 %v303
    %v1264 = vunpack.c.h.b16 %v303
    %v1265 = vunpack.c.l.b16 %v304
    %v1266 = vunpack.c.h.b16 %v304
    %v1267 = vunpack.c.l.b16 %v305
    %v1268 = vunpack.c.h.b16 %v305
    %v1269 = vunpack.c.l.b16 %v306
    %v1270 = vunpack.c.h.b16 %v306
    %v1271 = vunpack.c.l.b16 %v307
    %v1272 = vunpack.c.h.b16 %v307
    %v1273 = vunpack.c.l.b16 %v308
    %v1274 = vunpack.c.h.b16 %v308
    %v1275 = vunpack.c.l.b16 %v309
    %v1276 = vunpack.c.h.b16 %v309
    %v1277 = vunpack.c.l.b16 %v310
    %v1278 = vunpack.c.h.b16 %v310
    %v1279 = vunpack.c.l.b16 %v311
    %v1280 = vunpack.c.h.b16 %v311
    %v1281 = vunpack.c.l.b16 %v312
    %v1282 = vunpack.c.h.b16 %v312
    %v1283 = vunpack.c.l.b16 %v313
    %v1284 = vunpack.c.h.b16 %v313
    %v1285 = vunpack.c.l.b16 %v314
    %v1286 = vunpack.c.h.b16 %v314
    %v1287 = vunpack.c.l.b16 %v315
    %v1288 = vunpack.c.h.b16 %v315
    %v1289 = vunpack.c.l.b16 %v316
    %v1290 = vunpack.c.h.b16 %v316
    %v1291 = vunpack.c.l.b16 %v317
    %v1292 = vunpack.c.h.b16 %v317
    %v1293 = vunpack.c.l.b16 %v318
    %v1294 = vunpack.c.h.b16 %v318
    %v1295 = vunpack.c.l.b16 %v319
    %v1296 = vunpack.c.h.b16 %v319
    %v1297 = vunpack.c.l.b16 %v320
    %v1298 = vunpack.c.h.b16 %v320
    %v1299 = vunpack.c.l.b16 %v321
    %v1300 = vunpack.c.h.b16 %v321
    %v1301 = vunpack.c.l.b16 %v322
    %v1302 = vunpack.c.h.b16 %v322
    %v1303 = vunpack.c.l.b16 %v323
    %v1304 = vunpack.c.h.b16 %v323
    %v1305 = vunpack.c.l.b16 %v324
    %v1306 = vunpack.c.h.b16 %v324
    %v1307 = vunpack.c.l.b16 %v325
    %v1308 = vunpack.c.h.b16 %v325
    %v1309 = vunpack.c.l.b16 %v326
    %v1310 = vunpack.c.h.b16 %v326
    %v1311 = vunpack.c.l.b16 %v327
    %v1312 = vunpack.c.h.b16 %v327
    %v1313 = vunpack.c.l.b16 %v328
    %v1314 = vunpack.c.h.b16 %v328
    %v1315 = vunpack.c.l.b16 %v329
    %v1316 = vunpack.c.h.b16 %v329
    %v1317 = vunpack.c.l.b16 %v330
    %v1318 = vunpack.c.h.b16 %v330
    %v1319 = vunpack.c.l.b16 %v331
    %v1320 = vunpack.c.h.b16 %v331
    %v1321 = vunpack.c.l.b16 %v332
    %v1322 = vunpack.c.h.b16 %v332
    %v1323 = vunpack.c.l.b16 %v333
    %v1324 = vunpack.c.h.b16 %v333
    %v1325 = vunpack.c.l.b16 %v334
    %v1326 = vunpack.c.h.b16 %v334
    %v1327 = vunpack.c.l.b16 %v335
    %v1328 = vunpack.c.h.b16 %v335
    %v1329 = vunpack.c.l.b16 %v336
    %v1330 = vunpack.c.h.b16 %v336
    %v1331 = vunpack.c.l.b16 %v337
    %v1332 = vunpack.c.h.b16 %v337
    %v1333 = vunpack.c.l.b16 %v338
    %v1334 = vunpack.c.h.b16 %v338
    %v1335 = vunpack.c.l.b16 %v339
    %v1336 = vunpack.c.h.b16 %v339
    %v1337 = vunpack.c.l.b16 %v340
    %v1338 = vunpack.c.h.b16 %v340
    %v1339 = vunpack.c.l.b16 %v341
    %v1340 = vunpack.c.h.b16 %v341
    %v1341 = vunpack.c.l.b16 %v342
    %v1342 = vunpack.c.h.b16 %v342
    %v1343 = vunpack.c.l.b16 %v343
    %v1344 = vunpack.c.h.b16 %v343
    %v1345 = vunpack.c.l.b16 %v344
    %v1346 = vunpack.c.h.b16 %v344
    %v1347 = vunpack.c.l.b16 %v345
    %v1348 = vunpack.c.h.b16 %v345
    %v1349 = vunpack.c.l.b16 %v346
    %v1350 = vunpack.c.h.b16 %v346
    %v1351 = vunpack.c.l.b16 %v347
    %v1352 = vunpack.c.h.b16 %v347
    %v1353 = vunpack.c.l.b16 %v348
    %v1354 = vunpack.c.h.b16 %v348
    %v1355 = vunpack.c.l.b16 %v349
    %v1356 = vunpack.c.h.b16 %v349
    %v1357 = vunpack.c.l.b16 %v350
    %v1358 = vunpack.c.h.b16 %v350
    %v1359 = vunpack.c.l.b16 %v351
    %v1360 = vunpack.c.h.b16 %v351
    %v1361 = vunpack.c.l.b16 %v352
    %v1362 = vunpack.c.h.b16 %v352
    %v1363 = vunpack.c.l.b16 %v353
    %v1364 = vunpack.c.h.b16 %v353
    %v1365 = vunpack.c.l.b16 %v354
    %v1366 = vunpack.c.h.b16 %v354
    %v1367 = vunpack.c.l.b16 %v355
    %v1368 = vunpack.c.h.b16 %v355
    %v1369 = vunpack.c.l.b16 %v356
    %v1370 = vunpack.c.h.b16 %v356
    %v1371 = vunpack.c.l.b16 %v357
    %v1372 = vunpack.c.h.b16 %v357
    %v1373 = vunpack.c.l.b16 %v358
    %v1374 = vunpack.c.h.b16 %v358
    %v1375 = vunpack.c.l.b16 %v359
    %v1376 = vunpack.c.h.b16 %v359
    %v1377 = vunpack.c.l.b16 %v360
    %v1378 = vunpack.c.h.b16 %v360
    %v1379 = vunpack.c.l.b16 %v361
    %v1380 = vunpack.c.h.b16 %v361
    %v1381 = vunpack.c.l.b16 %v362
    %v1382 = vunpack.c.h.b16 %v362
    %v1383 = vunpack.c.l.b16 %v363
    %v1384 = vunpack.c.h.b16 %v363
    %v1385 = vunpack.c.l.b16 %v364
    %v1386 = vunpack.c.h.b16 %v364
    %v1387 = vunpack.c.l.b16 %v365
    %v1388 = vunpack.c.h.b16 %v365
    %v1389 = vunpack.c.l.b16 %v366
    %v1390 = vunpack.c.h.b16 %v366
    %v1391 = vunpack.c.l.b16 %v367
    %v1392 = vunpack.c.h.b16 %v367
    %v1393 = vunpack.c.l.b16 %v368
    %v1394 = vunpack.c.h.b16 %v368
    %v1395 = vunpack.c.l.b16 %v369
    %v1396 = vunpack.c.h.b16 %v369
    %v1397 = vunpack.c.l.b16 %v370
    %v1398 = vunpack.c.h.b16 %v370
    %v1399 = vunpack.c.l.b16 %v371
    %v1400 = vunpack.c.h.b16 %v371
    %v1401 = vunpack.c.l.b16 %v372
    %v1402 = vunpack.c.h.b16 %v372
    %v1403 = vunpack.c.l.b16 %v373
    %v1404 = vunpack.c.h.b16 %v373
    %v1405 = vunpack.c.l.b16 %v374
    %v1406 = vunpack.c.h.b16 %v374
    %v1407 = vunpack.c.l.b16 %v375
    %v1408 = vunpack.c.h.b16 %v375
    %v1409 = vunpack.c.l.b16 %v376
    %v1410 = vunpack.c.h.b16 %v376
    %v1411 = vunpack.c.l.b16 %v377
    %v1412 = vunpack.c.h.b16 %v377
    %v1413 = vunpack.c.l.b16 %v378
    %v1414 = vunpack.c.h.b16 %v378
    %v1415 = vunpack.c.l.b16 %v379
    %v1416 = vunpack.c.h.b16 %v379
    %v1417 = vunpack.c.l.b16 %v380
    %v1418 = vunpack.c.h.b16 %v380
    %v1419 = vunpack.c.l.b16 %v381
    %v1420 = vunpack.c.h.b16 %v381
    %v1421 = vunpack.c.l.b16 %v382
    %v1422 = vunpack.c.h.b16 %v382
    %v1423 = vunpack.c.l.b16 %v383
    %v1424 = vunpack.c.h.b16 %v383
    %v1425 = vunpack.c.l.b16 %v384
    %v1426 = vunpack.c.h.b16 %v384
    %v1427 = vunpack.c.l.b16 %v385
    %v1428 = vunpack.c.h.b16 %v385
    %v1429 = vunpack.c.l.b16 %v386
    %v1430 = vunpack.c.h.b16 %v386
    %v1431 = vunpack.c.l.b16 %v387
    %v1432 = vunpack.c.h.b16 %v387
    %v1433 = vunpack.c.l.b16 %v388
    %v1434 = vunpack.c.h.b16 %v388
    %v1435 = vunpack.c.l.b16 %v389
    %v1436 = vunpack.c.h.b16 %v389
    %v1437 = vunpack.c.l.b16 %v390
    %v1438 = vunpack.c.h.b16 %v390
    %v1439 = vunpack.c.l.b16 %v391
    %v1440 = vunpack.c.h.b16 %v391
    %v1441 = vunpack.c.l.b16 %v392
    %v1442 = vunpack.c.h.b16 %v392
    %v1443 = vunpack.c.l.b16 %v393
    %v1444 = vunpack.c.h.b16 %v393
    %v1445 = vunpack.c.l.b16 %v394
    %v1446 = vunpack.c.h.b16 %v394
    %v1447 = vunpack.c.l.b16 %v395
    %v1448 = vunpack.c.h.b16 %v395
    %v1449 = vunpack.c.l.b16 %v396
    %v1450 = vunpack.c.h.b16 %v396
    %v1451 = vunpack.c.l.b16 %v397
    %v1452 = vunpack.c.h.b16 %v397
    %v1453 = vunpack.c.l.b16 %v398
    %v1454 = vunpack.c.h.b16 %v398
    %v1455 = vunpack.c.l.b16 %v399
    %v1456 = vunpack.c.h.b16 %v399
    %v1457 = vunpack.c.l.b16 %v400
    %v1458 = vunpack.c.h.b16 %v400
    %v1459 = vunpack.c.l.b16 %v401
    %v1460 = vunpack.c.h.b16 %v401
    %v1461 = vunpack.c.l.b16 %v402
    %v1462 = vunpack.c.h.b16 %v402
    %v1463 = vunpack.c.l.b16 %v403
    %v1464 = vunpack.c.h.b16 %v403
    %v1465 = vunpack.c.l.b16 %v404
    %v1466 = vunpack.c.h.b16 %v404
    %v1467 = vunpack.c.l.b16 %v405
    %v1468 = vunpack.c.h.b16 %v405
    %v1469 = vunpack.c.l.b16 %v406
    %v1470 = vunpack.c.h.b16 %v406
    %v1471 = vunpack.c.l.b16 %v407
    %v1472 = vunpack.c.h.b16 %v407
    %v1473 = vunpack.c.l.b16 %v408
    %v1474 = vunpack.c.h.b16 %v408
    %v1475 = vunpack.c.l.b16 %v409
    %v1476 = vunpack.c.h.b16 %v409
    %v1477 = vunpack.c.l.b16 %v410
    %v1478 = vunpack.c.h.b16 %v410
    %v1479 = vunpack.c.l.b16 %v411
    %v1480 = vunpack.c.h.b16 %v411
    %v1481 = vunpack.c.l.b16 %v412
    %v1482 = vunpack.c.h.b16 %v412
    %v1483 = vunpack.c.l.b16 %v413
    %v1484 = vunpack.c.h.b16 %v413
    %v1485 = vunpack.c.l.b16 %v414
    %v1486 = vunpack.c.h.b16 %v414
    %v1487 = vunpack.c.l.b16 %v415
    %v1488 = vunpack.c.h.b16 %v415
    %v1489 = vunpack.c.l.b16 %v416
    %v1490 = vunpack.c.h.b16 %v416
    %v1491 = vunpack.c.l.b16 %v417
    %v1492 = vunpack.c.h.b16 %v417
    %v1493 = vunpack.c.l.b16 %v418
    %v1494 = vunpack.c.h.b16 %v418
    %v1495 = vunpack.c.l.b16 %v419
    %v1496 = vunpack.c.h.b16 %v419
    %v1497 = vunpack.c.l.b16 %v420
    %v1498 = vunpack.c.h.b16 %v420
    %v1499 = vunpack.c.l.b16 %v421
    %v1500 = vunpack.c.h.b16 %v421
    %v1501 = vunpack.c.l.b16 %v422
    %v1502 = vunpack.c.h.b16 %v422
    %v1503 = vunpack.c.l.b16 %v423
    %v1504 = vunpack.c.h.b16 %v423
    %v1505 = vunpack.c.l.b16 %v424
    %v1506 = vunpack.c.h.b16 %v424
    %v1507 = vunpack.c.l.b16 %v425
    %v1508 = vunpack.c.h.b16 %v425
    %v1509 = vunpack.c.l.b16 %v426
    %v1510 = vunpack.c.h.b16 %v426
    %v1511 = vunpack.c.l.b16 %v427
    %v1512 = vunpack.c.h.b16 %v427
    %v1513 = vunpack.c.l.b16 %v428
    %v1514 = vunpack.c.h.b16 %v428
    %v1515 = vunpack.c.l.b16 %v429
    %v1516 = vunpack.c.h.b16 %v429
    %v1517 = vunpack.c.l.b16 %v430
    %v1518 = vunpack.c.h.b16 %v430
    %v1519 = vunpack.c.l.b16 %v431
    %v1520 = vunpack.c.h.b16 %v431
    %v1521 = vunpack.c.l.b16 %v432
    %v1522 = vunpack.c.h.b16 %v432
    %v1523 = vunpack.c.l.b16 %v433
    %v1524 = vunpack.c.h.b16 %v433
    %v1525 = vunpack.c.l.b16 %v434
    %v1526 = vunpack.c.h.b16 %v434
    %v1527 = vunpack.c.l.b16 %v435
    %v1528 = vunpack.c.h.b16 %v435
    %v1529 = vunpack.c.l.b16 %v436
    %v1530 = vunpack.c.h.b16 %v436
    %v1531 = vunpack.c.l.b16 %v437
    %v1532 = vunpack.c.h.b16 %v437
    %v1533 = vunpack.c.l.b16 %v438
    %v1534 = vunpack.c.h.b16 %v438
    %v1535 = vunpack.c.l.b16 %v439
    %v1536 = vunpack.c.h.b16 %v439
    %v1537 = vunpack.c.l.b16 %v440
    %v1538 = vunpack.c.h.b16 %v440
    %v1539 = vunpack.c.l.b16 %v441
    %v1540 = vunpack.c.h.b16 %v441
    %v1541 = vunpack.c.l.b16 %v442
    %v1542 = vunpack.c.h.b16 %v442
    %v1543 = vunpack.c.l.b16 %v443
    %v1544 = vunpack.c.h.b16 %v443
    %v1545 = vunpack.c.l.b16 %v444
    %v1546 = vunpack.c.h.b16 %v444
    %v1547 = vunpack.c.l.b16 %v445
    %v1548 = vunpack.c.h.b16 %v445
    %v1549 = vunpack.c.l.b16 %v446
    %v1550 = vunpack.c.h.b16 %v446
    %v1551 = vunpack.c.l.b16 %v447
    %v1552 = vunpack.c.h.b16 %v447
    %v1553 = vunpack.c.l.b16 %v448
    %v1554 = vunpack.c.h.b16 %v448
    %v1555 = vunpack.c.l.b16 %v449
    %v1556 = vunpack.c.h.b16 %v449
    %v1557 = vunpack.c.l.b16 %v450
    %v1558 = vunpack.c.h.b16 %v450
    %v1559 = vunpack.c.l.b16 %v451
    %v1560 = vunpack.c.h.b16 %v451
    %v1561 = vunpack.c.l.b16 %v452
    %v1562 = vunpack.c.h.b16 %v452
    %v1563 = vunpack.c.l.b16 %v453
    %v1564 = vunpack.c.h.b16 %v453
    %v1565 = vunpack.c.l.b16 %v454
    %v1566 = vunpack.c.h.b16 %v454
    %v1567 = vunpack.c.l.b16 %v455
    %v1568 = vunpack.c.h.b16 %v455
    %v1569 = vunpack.c.l.b16 %v456
    %v1570 = vunpack.c.h.b16 %v456
    %v1571 = vunpack.c.l.b16 %v457
    %v1572 = vunpack.c.h.b16 %v457
    %v1573 = vunpack.c.l.b16 %v458
    %v1574 = vunpack.c.h.b16 %v458
    %v1575 = vunpack.c.l.b16 %v459
    %v1576 = vunpack.c.h.b16 %v459
    %v1577 = vunpack.c.l.b16 %v460
    %v1578 = vunpack.c.h.b16 %v460
    %v1579 = vunpack.c.l.b16 %v461
    %v1580 = vunpack.c.h.b16 %v461
    %v1581 = vunpack.c.l.b16 %v462
    %v1582 = vunpack.c.h.b16 %v462
    %v1583 = vunpack.c.l.b16 %v463
    %v1584 = vunpack.c.h.b16 %v463
    %v1585 = vunpack.c.l.b16 %v464
    %v1586 = vunpack.c.h.b16 %v464
    %v1587 = vunpack.c.l.b16 %v465
    %v1588 = vunpack.c.h.b16 %v465
    %v1589 = vunpack.c.l.b16 %v466
    %v1590 = vunpack.c.h.b16 %v466
    %v1591 = vunpack.c.l.b16 %v467
    %v1592 = vunpack.c.h.b16 %v467
    %v1593 = vunpack.c.l.b16 %v468
    %v1594 = vunpack.c.h.b16 %v468
    %v1595 = vunpack.c.l.b16 %v469
    %v1596 = vunpack.c.h.b16 %v469
    %v1597 = vunpack.c.l.b16 %v470
    %v1598 = vunpack.c.h.b16 %v470
    %v1599 = vunpack.c.l.b16 %v471
    %v1600 = vunpack.c.h.b16 %v471
    %v1601 = vunpack.c.l.b16 %v472
    %v1602 = vunpack.c.h.b16 %v472
    %v1603 = vunpack.c.l.b16 %v473
    %v1604 = vunpack.c.h.b16 %v473
    %v1605 = vunpack.c.l.b16 %v474
    %v1606 = vunpack.c.h.b16 %v474
    %v1607 = vunpack.c.l.b16 %v475
    %v1608 = vunpack.c.h.b16 %v475
    %v1609 = vunpack.c.l.b16 %v476
    %v1610 = vunpack.c.h.b16 %v476
    %v1611 = vunpack.c.l.b16 %v477
    %v1612 = vunpack.c.h.b16 %v477
    %v1613 = vunpack.c.l.b16 %v478
    %v1614 = vunpack.c.h.b16 %v478
    %v1615 = vunpack.c.l.b16 %v479
    %v1616 = vunpack.c.h.b16 %v479
    %v1617 = vunpack.c.l.b16 %v480
    %v1618 = vunpack.c.h.b16 %v480
    %v1619 = vunpack.c.l.b16 %v481
    %v1620 = vunpack.c.h.b16 %v481
    %v1621 = vunpack.c.l.b16 %v482
    %v1622 = vunpack.c.h.b16 %v482
    %v1623 = vunpack.c.l.b16 %v483
    %v1624 = vunpack.c.h.b16 %v483
    %v1625 = vunpack.c.l.b16 %v484
    %v1626 = vunpack.c.h.b16 %v484
    %v1627 = vunpack.c.l.b16 %v485
    %v1628 = vunpack.c.h.b16 %v485
    %v1629 = vunpack.c.l.b16 %v486
    %v1630 = vunpack.c.h.b16 %v486
    %v1631 = vunpack.c.l.b16 %v487
    %v1632 = vunpack.c.h.b16 %v487
    %v1633 = vunpack.c.l.b16 %v488
    %v1634 = vunpack.c.h.b16 %v488
    %v1635 = vunpack.c.l.b16 %v489
    %v1636 = vunpack.c.h.b16 %v489
    %v1637 = vunpack.c.l.b16 %v490
    %v1638 = vunpack.c.h.b16 %v490
    %v1639 = vunpack.c.l.b16 %v491
    %v1640 = vunpack.c.h.b16 %v491
    %v1641 = vunpack.c.l.b16 %v492
    %v1642 = vunpack.c.h.b16 %v492
    %v1643 = vunpack.c.l.b16 %v493
    %v1644 = vunpack.c.h.b16 %v493
    %v1645 = vunpack.c.l.b16 %v494
    %v1646 = vunpack.c.h.b16 %v494
    %v1647 = vunpack.c.l.b16 %v495
    %v1648 = vunpack.c.h.b16 %v495
    %v1649 = vunpack.c.l.b16 %v496
    %v1650 = vunpack.c.h.b16 %v496
    %v1651 = vunpack.c.l.b16 %v497
    %v1652 = vunpack.c.h.b16 %v497
    %v1653 = vunpack.c.l.b16 %v498
    %v1654 = vunpack.c.h.b16 %v498
    %v1655 = vunpack.c.l.b16 %v499
    %v1656 = vunpack.c.h.b16 %v499
    %v1657 = vunpack.c.l.b16 %v500
    %v1658 = vunpack.c.h.b16 %v500
    %v1659 = vunpack.c.l.b16 %v501
    %v1660 = vunpack.c.h.b16 %v501
    %v1661 = vunpack.c.l.b16 %v502
    %v1662 = vunpack.c.h.b16 %v502
    %v1663 = vunpack.c.l.b16 %v503
    %v1664 = vunpack.c.h.b16 %v503
    %v1665 = vunpack.c.l.b16 %v504
    %v1666 = vunpack.c.h.b16 %v504
    %v1667 = vunpack.c.l.b16 %v505
    %v1668 = vunpack.c.h.b16 %v505
    %v1669 = vunpack.c.l.b16 %v506
    %v1670 = vunpack.c.h.b16 %v506
    %v1671 = vunpack.c.l.b16 %v507
    %v1672 = vunpack.c.h.b16 %v507
    %v1673 = vunpack.c.l.b16 %v508
    %v1674 = vunpack.c.h.b16 %v508
    %v1675 = vunpack.c.l.b16 %v509
    %v1676 = vunpack.c.h.b16 %v509
    %v1677 = vunpack.c.l.b16 %v510
    %v1678 = vunpack.c.h.b16 %v510
    %v1679 = vunpack.c.l.b16 %v511
    %v1680 = vunpack.c.h.b16 %v511
    %v1681 = vunpack.c.l.b16 %v512
    %v1682 = vunpack.c.h.b16 %v512
    %v1683 = vunpack.c.l.b16 %v513
    %v1684 = vunpack.c.h.b16 %v513
    %v1685 = vunpack.c.l.b16 %v514
    %v1686 = vunpack.c.h.b16 %v514
    %v1687 = vunpack.c.l.b16 %v515
    %v1688 = vunpack.c.h.b16 %v515
    %v1689 = vunpack.c.l.b16 %v516
    %v1690 = vunpack.c.h.b16 %v516
    %v1691 = vunpack.c.l.b16 %v517
    %v1692 = vunpack.c.h.b16 %v517
    %v1693 = vunpack.c.l.b16 %v518
    %v1694 = vunpack.c.h.b16 %v518
    %v1695 = vunpack.c.l.b16 %v519
    %v1696 = vunpack.c.h.b16 %v519
    %v1697 = vunpack.c.l.b16 %v520
    %v1698 = vunpack.c.h.b16 %v520
    %v1699 = vunpack.c.l.b16 %v521
    %v1700 = vunpack.c.h.b16 %v521
    %v1701 = vunpack.c.l.b16 %v522
    %v1702 = vunpack.c.h.b16 %v522
    %v1703 = vunpack.c.l.b16 %v523
    %v1704 = vunpack.c.h.b16 %v523
    %v1705 = vunpack.c.l.b16 %v524
    %v1706 = vunpack.c.h.b16 %v524
    %v1707 = vunpack.c.l.b16 %v525
    %v1708 = vunpack.c.h.b16 %v525
    %v1709 = vunpack.c.l.b16 %v526
    %v1710 = vunpack.c.h.b16 %v526
    %v1711 = vunpack.c.l.b16 %v527
    %v1712 = vunpack.c.h.b16 %v527
    %v1713 = vunpack.c.l.b16 %v528
    %v1714 = vunpack.c.h.b16 %v528
    %v1715 = vunpack.c.l.b16 %v529
    %v1716 = vunpack.c.h.b16 %v529
    %v1717 = vunpack.c.l.b16 %v530
    %v1718 = vunpack.c.h.b16 %v530
    %v1719 = vunpack.c.l.b16 %v531
    %v1720 = vunpack.c.h.b16 %v531
    %v1721 = vunpack.c.l.b16 %v532
    %v1722 = vunpack.c.h.b16 %v532
    %v1723 = vunpack.c.l.b16 %v533
    %v1724 = vunpack.c.h.b16 %v533
    %v1725 = vunpack.c.l.b16 %v534
    %v1726 = vunpack.c.h.b16 %v534
    %v1727 = vunpack.c.l.b16 %v535
    %v1728 = vunpack.c.h.b16 %v535
    %v1729 = vunpack.c.l.b16 %v536
    %v1730 = vunpack.c.h.b16 %v536
    %v1731 = vunpack.c.l.b16 %v537
    %v1732 = vunpack.c.h.b16 %v537
    %v1733 = vunpack.c.l.b16 %v538
    %v1734 = vunpack.c.h.b16 %v538
    %v1735 = vunpack.c.l.b16 %v539
    %v1736 = vunpack.c.h.b16 %v539
    %v1737 = vunpack.c.l.b16 %v540
    %v1738 = vunpack.c.h.b16 %v540
    %v1739 = vunpack.c.l.b16 %v541
    %v1740 = vunpack.c.h.b16 %v541
    %v1741 = vunpack.c.l.b16 %v542
    %v1742 = vunpack.c.h.b16 %v542
    %v1743 = vunpack.c.l.b16 %v543
    %v1744 = vunpack.c.h.b16 %v543
    %v1745 = vunpack.c.l.b16 %v544
    %v1746 = vunpack.c.h.b16 %v544
    %v1747 = vunpack.c.l.b16 %v545
    %v1748 = vunpack.c.h.b16 %v545
    %v1749 = vunpack.c.l.b16 %v546
    %v1750 = vunpack.c.h.b16 %v546
    %v1751 = vunpack.c.l.b16 %v547
    %v1752 = vunpack.c.h.b16 %v547
    %v1753 = vunpack.c.l.b16 %v548
    %v1754 = vunpack.c.h.b16 %v548
    %v1755 = vunpack.c.l.b16 %v549
    %v1756 = vunpack.c.h.b16 %v549
    %v1757 = vunpack.c.l.b16 %v550
    %v1758 = vunpack.c.h.b16 %v550
    %v1759 = vunpack.c.l.b16 %v551
    %v1760 = vunpack.c.h.b16 %v551
    %v1761 = vunpack.c.l.b16 %v552
    %v1762 = vunpack.c.h.b16 %v552
    %v1763 = vunpack.c.l.b16 %v553
    %v1764 = vunpack.c.h.b16 %v553
    %v1765 = vunpack.c.l.b16 %v554
    %v1766 = vunpack.c.h.b16 %v554
    %v1767 = vunpack.c.l.b16 %v555
    %v1768 = vunpack.c.h.b16 %v555
    %v1769 = vunpack.c.l.b16 %v556
    %v1770 = vunpack.c.h.b16 %v556
    %v1771 = vunpack.c.l.b16 %v557
    %v1772 = vunpack.c.h.b16 %v557
    %v1773 = vunpack.c.l.b16 %v558
    %v1774 = vunpack.c.h.b16 %v558
    %v1775 = vunpack.c.l.b16 %v559
    %v1776 = vunpack.c.h.b16 %v559
    %v1777 = vunpack.c.l.b16 %v560
    %v1778 = vunpack.c.h.b16 %v560
    %v1779 = vpack.c.b16 %v1003, %v995
    %v1780 = vpack.c.b16 %v1004, %v996
    %v1781 = vpack.c.b16 %v1005, %v997
    %v1782 = vpack.c.b16 %v1006, %v998
    %v1783 = vpack.c.b16 %v1007, %v999
    %v1784 = vpack.c.b16 %v1008, %v1000
    %v1785 = vpack.c.b16 %v1009, %v1001
    %v1786 = vpack.c.b16 %v1010, %v1002
    %v1787 = vpack.c.b16 %v1019, %v1011
    %v1788 = vpack.c.b16 %v1020, %v1012
    %v1789 = vpack.c.b16 %v1021, %v1013
    %v1790 = vpack.c.b16 %v1022, %v1014
    %v1791 = vpack.c.b16 %v1023, %v1015
    %v1792 = vpack.c.b16 %v1024, %v1016
    %v1793 = vpack.c.b16 %v1025, %v1017
    %v1794 = vpack.c.b16 %v1026, %v1018
    %v1795 = vpack.c.b16 %v1035, %v1027
    %v1796 = vpack.c.b16 %v1036, %v1028
    %v1797 = vpack.c.b16 %v1037, %v1029
    %v1798 = vpack.c.b16 %v1038, %v1030
    %v1799 = vpack.c.b16 %v1039, %v1031
    %v1800 = vpack.c.b16 %v1040, %v1032
    %v1801 = vpack.c.b16 %v1041, %v1033
    %v1802 = vpack.c.b16 %v1042, %v1034
    %v1803 = vpack.c.b16 %v1051, %v1043
    %v1804 = vpack.c.b16 %v1052, %v1044
    %v1805 = vpack.c.b16 %v1053, %v1045
    %v1806 = vpack.c.b16 %v1054, %v1046
    %v1807 = vpack.c.b16 %v1055, %v1047
    %v1808 = vpack.c.b16 %v1056, %v1048
    %v1809 = vpack.c.b16 %v1057, %v1049
    %v1810 = vpack.c.b16 %v1058, %v1050
    %v1811 = vpack.c.b16 %v1067, %v1059
    %v1812 = vpack.c.b16 %v1068, %v1060
    %v1813 = vpack.c.b16 %v1069, %v1061
    %v1814 = vpack.c.b16 %v1070, %v1062
    %v1815 = vpack.c.b16 %v1071, %v1063
    %v1816 = vpack.c.b16 %v1072, %v1064
    %v1817 = vpack.c.b16 %v1073, %v1065
    %v1818 = vpack.c.b16 %v1074, %v1066
    %v1819 = vpack.c.b16 %v1083, %v1075
    %v1820 = vpack.c.b16 %v1084, %v1076
    %v1821 = vpack.c.b16 %v1085, %v1077
    %v1822 = vpack.c.b16 %v1086, %v1078
    %v1823 = vpack.c.b16 %v1087, %v1079
    %v1824 = vpack.c.b16 %v1088, %v1080
    %v1825 = vpack.c.b16 %v1089, %v1081
    %v1826 = vpack.c.b16 %v1090, %v1082
    %v1827 = vpack.c.b16 %v1099, %v1091
    %v1828 = vpack.c.b16 %v1100, %v1092
    %v1829 = vpack.c.b16 %v1101, %v1093
    %v1830 = vpack.c.b16 %v1102, %v1094
    %v1831 = vpack.c.b16 %v1103, %v1095
    %v1832 = vpack.c.b16 %v1104, %v1096
    %v1833 = vpack.c.b16 %v1105, %v1097
    %v1834 = vpack.c.b16 %v1106, %v1098
    %v1835 = vpack.c.b16 %v1115, %v1107
    %v1836 = vpack.c.b16 %v1116, %v1108
    %v1837 = vpack.c.b16 %v1117, %v1109
    %v1838 = vpack.c.b16 %v1118, %v1110
    %v1839 = vpack.c.b16 %v1119, %v1111
    %v1840 = vpack.c.b16 %v1120, %v1112
    %v1841 = vpack.c.b16 %v1121, %v1113
    %v1842 = vpack.c.b16 %v1122, %v1114
    %v1843 = vpack.c.b16 %v1131, %v1123
    %v1844 = vpack.c.b16 %v1132, %v1124
    %v1845 = vpack.c.b16 %v1133, %v1125
    %v1846 = vpack.c.b16 %v1134, %v1126
    %v1847 = vpack.c.b16 %v1135, %v1127
    %v1848 = vpack.c.b16 %v1136, %v1128
    %v1849 = vpack.c.b16 %v1137, %v1129
    %v1850 = vpack.c.b16 %v1138, %v1130
    %v1851 = vpack.c.b16 %v1147, %v1139
    %v1852 = vpack.c.b16 %v1148, %v1140
    %v1853 = vpack.c.b16 %v1149, %v1141
    %v1854 = vpack.c.b16 %v1150, %v1142
    %v1855 = vpack.c.b16 %v1151, %v1143
    %v1856 = vpack.c.b16 %v1152, %v1144
    %v1857 = vpack.c.b16 %v1153, %v1145
    %v1858 = vpack.c.b16 %v1154, %v1146
    %v1859 = vpack.c.b16 %v1163, %v1155
    %v1860 = vpack.c.b16 %v1164, %v1156
    %v1861 = vpack.c.b16 %v1165, %v1157
    %v1862 = vpack.c.b16 %v1166, %v1158
    %v1863 = vpack.c.b16 %v1167, %v1159
    %v1864 = vpack.c.b16 %v1168, %v1160
    %v1865 = vpack.c.b16 %v1169, %v1161
    %v1866 = vpack.c.b16 %v1170, %v1162
    %v1867 = vpack.c.b16 %v1179, %v1171
    %v1868 = vpack.c.b16 %v1180, %v1172
    %v1869 = vpack.c.b16 %v1181, %v1173
    %v1870 = vpack.c.b16 %v1182, %v1174
    %v1871 = vpack.c.b16 %v1183, %v1175
    %v1872 = vpack.c.b16 %v1184, %v1176
    %v1873 = vpack.c.b16 %v1185, %v1177
    %v1874 = vpack.c.b16 %v1186, %v1178
    %v1875 = vpack.c.b16 %v1195, %v1187
    %v1876 = vpack.c.b16 %v1196, %v1188
    %v1877 = vpack.c.b16 %v1197, %v1189
    %v1878 = vpack.c.b16 %v1198, %v1190
    %v1879 = vpack.c.b16 %v1199, %v1191
    %v1880 = vpack.c.b16 %v1200, %v1192
    %v1881 = vpack.c.b16 %v1201, %v1193
    %v1882 = vpack.c.b16 %v1202, %v1194
    %v1883 = vpack.c.b16 %v1211, %v1203
    %v1884 = vpack.c.b16 %v1212, %v1204
    %v1885 = vpack.c.b16 %v1213, %v1205
    %v1886 = vpack.c.b16 %v1214, %v1206
    %v1887 = vpack.c.b16 %v1215, %v1207
    %v1888 = vpack.c.b16 %v1216, %v1208
    %v1889 = vpack.c.b16 %v1217, %v1209
    %v1890 = vpack.c.b16 %v1218, %v1210
    %v1891 = vpack.c.b16 %v1227, %v1219
    %v1892 = vpack.c.b16 %v1228, %v1220
    %v1893 = vpack.c.b16 %v1229, %v1221
    %v1894 = vpack.c.b16 %v1230, %v1222
    %v1895 = vpack.c.b16 %v1231, %v1223
    %v1896 = vpack.c.b16 %v1232, %v1224
    %v1897 = vpack.c.b16 %v1233, %v1225
    %v1898 = vpack.c.b16 %v1234, %v1226
    %v1899 = vpack.c.b16 %v1243, %v1235
    %v1900 = vpack.c.b16 %v1244, %v1236
    %v1901 = vpack.c.b16 %v1245, %v1237
    %v1902 = vpack.c.b16 %v1246, %v1238
    %v1903 = vpack.c.b16 %v1247, %v1239
    %v1904 = vpack.c.b16 %v1248, %v1240
    %v1905 = vpack.c.b16 %v1249, %v1241
    %v1906 = vpack.c.b16 %v1250, %v1242
    %v1907 = vpack.c.b16 %v1259, %v1251
    %v1908 = vpack.c.b16 %v1260, %v1252
    %v1909 = vpack.c.b16 %v1261, %v1253
    %v1910 = vpack.c.b16 %v1262, %v1254
    %v1911 = vpack.c.b16 %v1263, %v1255
    %v1912 = vpack.c.b16 %v1264, %v1256
    %v1913 = vpack.c.b16 %v1265, %v1257
    %v1914 = vpack.c.b16 %v1266, %v1258
    %v1915 = vpack.c.b16 %v1275, %v1267
    %v1916 = vpack.c.b16 %v1276, %v1268
    %v1917 = vpack.c.b16 %v1277, %v1269
    %v1918 = vpack.c.b16 %v1278, %v1270
    %v1919 = vpack.c.b16 %v1279, %v1271
    %v1920 = vpack.c.b16 %v1280, %v1272
    %v1921 = vpack.c.b16 %v1281, %v1273
    %v1922 = vpack.c.b16 %v1282, %v1274
    %v1923 = vpack.c.b16 %v1291, %v1283
    %v1924 = vpack.c.b16 %v1292, %v1284
    %v1925 = vpack.c.b16 %v1293, %v1285
    %v1926 = vpack.c.b16 %v1294, %v1286
    %v1927 = vpack.c.b16 %v1295, %v1287
    %v1928 = vpack.c.b16 %v1296, %v1288
    %v1929 = vpack.c.b16 %v1297, %v1289
    %v1930 = vpack.c.b16 %v1298, %v1290
    %v1931 = vpack.c.b16 %v1307, %v1299
    %v1932 = vpack.c.b16 %v1308, %v1300
    %v1933 = vpack.c.b16 %v1309, %v1301
    %v1934 = vpack.c.b16 %v1310, %v1302
    %v1935 = vpack.c.b16 %v1311, %v1303
    %v1936 = vpack.c.b16 %v1312, %v1304
    %v1937 = vpack.c.b16 %v1313, %v1305
    %v1938 = vpack.c.b16 %v1314, %v1306
    %v1939 = vpack.c.b16 %v1323, %v1315
    %v1940 = vpack.c.b16 %v1324, %v1316
    %v1941 = vpack.c.b16 %v1325, %v1317
    %v1942 = vpack.c.b16 %v1326, %v1318
    %v1943 = vpack.c.b16 %v1327, %v1319
    %v1944 = vpack.c.b16 %v1328, %v1320
    %v1945 = vpack.c.b16 %v1329, %v1321
    %v1946 = vpack.c.b16 %v1330, %v1322
    %v1947 = vpack.c.b16 %v1339, %v1331
    %v1948 = vpack.c.b16 %v1340, %v1332
    %v1949 = vpack.c.b16 %v1341, %v1333
    %v1950 = vpack.c.b16 %v1342, %v1334
    %v1951 = vpack.c.b16 %v1343, %v1335
    %v1952 = vpack.c.b16 %v1344, %v1336
    %v1953 = vpack.c.b16 %v1345, %v1337
    %v1954 = vpack.c.b16 %v1346, %v1338
    %v1955 = vpack.c.b16 %v1355, %v1347
    %v1956 = vpack.c.b16 %v1356, %v1348
    %v1957 = vpack.c.b16 %v1357, %v1349
    %v1958 = vpack.c.b16 %v1358, %v1350
    %v1959 = vpack.c.b16 %v1359, %v1351
    %v1960 = vpack.c.b16 %v1360, %v1352
    %v1961 = vpack.c.b16 %v1361, %v1353
    %v1962 = vpack.c.b16 %v1362, %v1354
    %v1963 = vpack.c.b16 %v1371, %v1363
    %v1964 = vpack.c.b16 %v1372, %v1364
    %v1965 = vpack.c.b16 %v1373, %v1365
    %v1966 = vpack.c.b16 %v1374, %v1366
    %v1967 = vpack.c.b16 %v1375, %v1367
    %v1968 = vpack.c.b16 %v1376, %v1368
    %v1969 = vpack.c.b16 %v1377, %v1369
    %v1970 = vpack.c.b16 %v1378, %v1370
    %v1971 = vpack.c.b16 %v1387, %v1379
    %v1972 = vpack.c.b16 %v1388, %v1380
    %v1973 = vpack.c.b16 %v1389, %v1381
    %v1974 = vpack.c.b16 %v1390, %v1382
    %v1975 = vpack.c.b16 %v1391, %v1383
    %v1976 = vpack.c.b16 %v1392, %v1384
    %v1977 = vpack.c.b16 %v1393, %v1385
    %v1978 = vpack.c.b16 %v1394, %v1386
    %v1979 = vpack.c.b16 %v1403, %v1395
    %v1980 = vpack.c.b16 %v1404, %v1396
    %v1981 = vpack.c.b16 %v1405, %v1397
    %v1982 = vpack.c.b16 %v1406, %v1398
    %v1983 = vpack.c.b16 %v1407, %v1399
    %v1984 = vpack.c.b16 %v1408, %v1400
    %v1985 = vpack.c.b16 %v1409, %v1401
    %v1986 = vpack.c.b16 %v1410, %v1402
    %v1987 = vpack.c.b16 %v1419, %v1411
    %v1988 = vpack.c.b16 %v1420, %v1412
    %v1989 = vpack.c.b16 %v1421, %v1413
    %v1990 = vpack.c.b16 %v1422, %v1414
    %v1991 = vpack.c.b16 %v1423, %v1415
    %v1992 = vpack.c.b16 %v1424, %v1416
    %v1993 = vpack.c.b16 %v1425, %v1417
    %v1994 = vpack.c.b16 %v1426, %v1418
    %v1995 = vpack.c.b16 %v1435, %v1427
    %v1996 = vpack.c.b16 %v1436, %v1428
    %v1997 = vpack.c.b16 %v1437, %v1429
    %v1998 = vpack.c.b16 %v1438, %v1430
    %v1999 = vpack.c.b16 %v1439, %v1431
    %v2000 = vpack.c.b16 %v1440, %v1432
    %v2001 = vpack.c.b16 %v1441, %v1433
    %v2002 = vpack.c.b16 %v1442, %v1434
    %v2003 = vpack.c.b16 %v1451, %v1443
    %v2004 = vpack.c.b16 %v1452, %v1444
    %v2005 = vpack.c.b16 %v1453, %v1445
    %v2006 = vpack.c.b16 %v1454, %v1446
    %v2007 = vpack.c.b16 %v1455, %v1447
    %v2008 = vpack.c.b16 %v1456, %v1448
    %v2009 = vpack.c.b16 %v1457, %v1449
    %v2010 = vpack.c.b16 %v1458, %v1450
    %v2011 = vpack.c.b16 %v1467, %v1459
    %v2012 = vpack.c.b16 %v1468, %v1460
    %v2013 = vpack.c.b16 %v1469, %v1461
    %v2014 = vpack.c.b16 %v1470, %v1462
    %v2015 = vpack.c.b16 %v1471, %v1463
    %v2016 = vpack.c.b16 %v1472, %v1464
    %v2017 = vpack.c.b16 %v1473, %v1465
    %v2018 = vpack.c.b16 %v1474, %v1466
    %v2019 = vpack.c.b16 %v1483, %v1475
    %v2020 = vpack.c.b16 %v1484, %v1476
    %v2021 = vpack.c.b16 %v1485, %v1477
    %v2022 = vpack.c.b16 %v1486, %v1478
    %v2023 = vpack.c.b16 %v1487, %v1479
    %v2024 = vpack.c.b16 %v1488, %v1480
    %v2025 = vpack.c.b16 %v1489, %v1481
    %v2026 = vpack.c.b16 %v1490, %v1482
    %v2027 = vpack.c.b16 %v1499, %v1491
    %v2028 = vpack.c.b16 %v1500, %v1492
    %v2029 = vpack.c.b16 %v1501, %v1493
    %v2030 = vpack.c.b16 %v1502, %v1494
    %v2031 = vpack.c.b16 %v1503, %v1495
    %v2032 = vpack.c.b16 %v1504, %v1496
    %v2033 = vpack.c.b16 %v1505, %v1497
    %v2034 = vpack.c.b16 %v1506, %v1498
    %v2035 = vpack.c.b16 %v1515, %v1507
    %v2036 = vpack.c.b16 %v1516, %v1508
    %v2037 = vpack.c.b16 %v1517, %v1509
    %v2038 = vpack.c.b16 %v1518, %v1510
    %v2039 = vpack.c.b16 %v1519, %v1511
    %v2040 = vpack.c.b16 %v1520, %v1512
    %v2041 = vpack.c.b16 %v1521, %v1513
    %v2042 = vpack.c.b16 %v1522, %v1514
    %v2043 = vpack.c.b16 %v1531, %v1523
    %v2044 = vpack.c.b16 %v1532, %v1524
    %v2045 = vpack.c.b16 %v1533, %v1525
    %v2046 = vpack.c.b16 %v1534, %v1526
    %v2047 = vpack.c.b16 %v1535, %v1527
    %v2048 = vpack.c.b16 %v1536, %v1528
    %v2049 = vpack.c.b16 %v1537, %v1529
    %v2050 = vpack.c.b16 %v1538, %v1530
    %v2051 = vpack.c.b16 %v1547, %v1539
    %v2052 = vpack.c.b16 %v1548, %v1540
    %v2053 = vpack.c.b16 %v1549, %v1541
    %v2054 = vpack.c.b16 %v1550, %v1542
    %v2055 = vpack.c.b16 %v1551, %v1543
    %v2056 = vpack.c.b16 %v1552, %v1544
    %v2057 = vpack.c.b16 %v1553, %v1545
    %v2058 = vpack.c.b16 %v1554, %v1546
    %v2059 = vpack.c.b16 %v1563, %v1555
    %v2060 = vpack.c.b16 %v1564, %v1556
    %v2061 = vpack.c.b16 %v1565, %v1557
    %v2062 = vpack.c.b16 %v1566, %v1558
    %v2063 = vpack.c.b16 %v1567, %v1559
    %v2064 = vpack.c.b16 %v1568, %v1560
    %v2065 = vpack.c.b16 %v1569, %v1561
    %v2066 = vpack.c.b16 %v1570, %v1562
    %v2067 = vpack.c.b16 %v1579, %v1571
    %v2068 = vpack.c.b16 %v1580, %v1572
    %v2069 = vpack.c.b16 %v1581, %v1573
    %v2070 = vpack.c.b16 %v1582, %v1574
    %v2071 = vpack.c.b16 %v1583, %v1575
    %v2072 = vpack.c.b16 %v1584, %v1576
    %v2073 = vpack.c.b16 %v1585, %v1577
    %v2074 = vpack.c.b16 %v1586, %v1578
    %v2075 = vpack.c.b16 %v1595, %v1587
    %v2076 = vpack.c.b16 %v1596, %v1588
    %v2077 = vpack.c.b16 %v1597, %v1589
    %v2078 = vpack.c.b16 %v1598, %v1590
    %v2079 = vpack.c.b16 %v1599, %v1591
    %v2080 = vpack.c.b16 %v1600, %v1592
    %v2081 = vpack.c.b16 %v1601, %v1593
    %v2082 = vpack.c.b16 %v1602, %v1594
    %v2083 = vpack.c.b16 %v1611, %v1603
    %v2084 = vpack.c.b16 %v1612, %v1604
    %v2085 = vpack.c.b16 %v1613, %v1605
    %v2086 = vpack.c.b16 %v1614, %v1606
    %v2087 = vpack.c.b16 %v1615, %v1607
    %v2088 = vpack.c.b16 %v1616, %v1608
    %v2089 = vpack.c.b16 %v1617, %v1609
    %v2090 = vpack.c.b16 %v1618, %v1610
    %v2091 = vpack.c.b16 %v1627, %v1619
    %v2092 = vpack.c.b16 %v1628, %v1620
    %v2093 = vpack.c.b16 %v1629, %v1621
    %v2094 = vpack.c.b16 %v1630, %v1622
    %v2095 = vpack.c.b16 %v1631, %v1623
    %v2096 = vpack.c.b16 %v1632, %v1624
    %v2097 = vpack.c.b16 %v1633, %v1625
    %v2098 = vpack.c.b16 %v1634, %v1626
    %v2099 = vpack.c.b16 %v1643, %v1635
    %v2100 = vpack.c.b16 %v1644, %v1636
    %v2101 = vpack.c.b16 %v1645, %v1637
    %v2102 = vpack.c.b16 %v1646, %v1638
    %v2103 = vpack.c.b16 %v1647, %v1639
    %v2104 = vpack.c.b16 %v1648, %v1640
    %v2105 = vpack.c.b16 %v1649, %v1641
    %v2106 = vpack.c.b16 %v1650, %v1642
    %v2107 = vpack.c.b16 %v1659, %v1651
    %v2108 = vpack.c.b16 %v1660, %v1652
    %v2109 = vpack.c.b16 %v1661, %v1653
    %v2110 = vpack.c.b16 %v1662, %v1654
    %v2111 = vpack.c.b16 %v1663, %v1655
    %v2112 = vpack.c.b16 %v1664, %v1656
    %v2113 = vpack.c.b16 %v1665, %v1657
    %v2114 = vpack.c.b16 %v1666, %v1658
    %v2115 = vpack.c.b16 %v1675, %v1667
    %v2116 = vpack.c.b16 %v1676, %v1668
    %v2117 = vpack.c.b16 %v1677, %v1669
    %v2118 = vpack.c.b16 %v1678, %v1670
    %v2119 = vpack.c.b16 %v1679, %v1671
    %v2120 = vpack.c.b16 %v1680, %v1672
    %v2121 = vpack.c.b16 %v1681, %v1673
    %v2122 = vpack.c.b16 %v1682, %v1674
    %v2123 = vpack.c.b16 %v1691, %v1683
    %v2124 = vpack.c.b16 %v1692, %v1684
    %v2125 = vpack.c.b16 %v1693, %v1685
    %v2126 = vpack.c.b16 %v1694, %v1686
    %v2127 = vpack.c.b16 %v1695, %v1687
    %v2128 = vpack.c.b16 %v1696, %v1688
    %v2129 = vpack.c.b16 %v1697, %v1689
    %v2130 = vpack.c.b16 %v1698, %v1690
    %v2131 = vpack.c.b16 %v1707, %v1699
    %v2132 = vpack.c.b16 %v1708, %v1700
    %v2133 = vpack.c.b16 %v1709, %v1701
    %v2134 = vpack.c.b16 %v1710, %v1702
    %v2135 = vpack.c.b16 %v1711, %v1703
    %v2136 = vpack.c.b16 %v1712, %v1704
    %v2137 = vpack.c.b16 %v1713, %v1705
    %v2138 = vpack.c.b16 %v1714, %v1706
    %v2139 = vpack.c.b16 %v1723, %v1715
    %v2140 = vpack.c.b16 %v1724, %v1716
    %v2141 = vpack.c.b16 %v1725, %v1717
    %v2142 = vpack.c.b16 %v1726, %v1718
    %v2143 = vpack.c.b16 %v1727, %v1719
    %v2144 = vpack.c.b16 %v1728, %v1720
    %v2145 = vpack.c.b16 %v1729, %v1721
    %v2146 = vpack.c.b16 %v1730, %v1722
    %v2147 = vpack.c.b16 %v1739, %v1731
    %v2148 = vpack.c.b16 %v1740, %v1732
    %v2149 = vpack.c.b16 %v1741, %v1733
    %v2150 = vpack.c.b16 %v1742, %v1734
    %v2151 = vpack.c.b16 %v1743, %v1735
    %v2152 = vpack.c.b16 %v1744, %v1736
    %v2153 = vpack.c.b16 %v1745, %v1737
    %v2154 = vpack.c.b16 %v1746, %v1738
    %v2155 = vpack.c.b16 %v1755, %v1747
    %v2156 = vpack.c.b16 %v1756, %v1748
    %v2157 = vpack.c.b16 %v1757, %v1749
    %v2158 = vpack.c.b16 %v1758, %v1750
    %v2159 = vpack.c.b16 %v1759, %v1751
    %v2160 = vpack.c.b16 %v1760, %v1752
    %v2161 = vpack.c.b16 %v1761, %v1753
    %v2162 = vpack.c.b16 %v1762, %v1754
    %v2163 = vpack.c.b16 %v1771, %v1763
    %v2164 = vpack.c.b16 %v1772, %v1764
    %v2165 = vpack.c.b16 %v1773, %v1765
    %v2166 = vpack.c.b16 %v1774, %v1766
    %v2167 = vpack.c.b16 %v1775, %v1767
    %v2168 = vpack.c.b16 %v1776, %v1768
    %v2169 = vpack.c.b16 %v1777, %v1769
    %v2170 = vpack.c.b16 %v1778, %v1770
    %vm2563 = vcmask 130048
    %v2565 = vsel %vm2563, %v168, 0
    %2567 = vmatprep.subr.bf16.mxu0 %v1780
    %2568 = vmatpush1.bf16.msra.mxu0 %v1779
    %2569 = vmatprep.subr.bf16.mxu0 %v1788
    %2570 = vmatpush1.bf16.msra.mxu0 %v1787
    %2571 = vmatprep.subr.bf16.mxu0 %v1796
    %2572 = vmatpush1.bf16.msra.mxu0 %v1795
    %2573 = vmatprep.subr.bf16.mxu0 %v1804
    %2574 = vmatpush1.bf16.msra.mxu0 %v1803
    %2575 = vmatprep.subr.bf16.mxu0 %v1812
    %2576 = vmatpush1.bf16.msra.mxu0 %v1811
    %2577 = vmatprep.subr.bf16.mxu0 %v1820
    %2578 = vmatpush1.bf16.msra.mxu0 %v1819
    %2579 = vmatprep.subr.bf16.mxu0 %v1828
    %2580 = vmatpush1.bf16.msra.mxu0 %v1827
    %2581 = vmatprep.subr.bf16.mxu0 %v1836
    %2582 = vmatpush1.bf16.msra.mxu0 %v1835
    %2583 = vmatprep.subr.bf16.mxu0 %v1844
    %2584 = vmatpush1.bf16.msra.mxu0 %v1843
    %2585 = vmatprep.subr.bf16.mxu0 %v1852
    %2586 = vmatpush1.bf16.msra.mxu0 %v1851
    %2587 = vmatprep.subr.bf16.mxu0 %v1860
    %2588 = vmatpush1.bf16.msra.mxu0 %v1859
    %2589 = vmatprep.subr.bf16.mxu0 %v1868
    %2590 = vmatpush1.bf16.msra.mxu0 %v1867
    %2591 = vmatprep.subr.bf16.mxu0 %v1876
    %2592 = vmatpush1.bf16.msra.mxu0 %v1875
    %2593 = vmatprep.subr.bf16.mxu0 %v1884
    %2594 = vmatpush1.bf16.msra.mxu0 %v1883
    %2595 = vmatprep.subr.bf16.mxu0 %v1892
    %2596 = vmatpush1.bf16.msra.mxu0 %v1891
    %2597 = vmatprep.subr.bf16.mxu0 %v1900
    %2598 = vmatpush1.bf16.msra.mxu0 %v1899
    %2599 = vmatprep.mubr.bf16.mxu0 %v163
    %2600 = vmatmul.mubr.bf16.gmra.mrb[0].mxu0 %v162
    %v2601 = vpop.f32.mrb[0].mxu0
    %v2602 = vadd.f32 %v566, %v2601
    %v2603 = vpop.f32.mrb[0].mxu0
    %v2604 = vadd.f32 %v570, %v2603
    %v2605 = vpop.f32.mrb[0].mxu0
    %v2606 = vadd.f32 %v566, %v2605
    %v2607 = vpop.f32.mrb[0].mxu0
    %v2608 = vadd.f32 %v570, %v2607
    %2609 = vdwg.mxu0
    %2610 = vmatprep.subr.bf16.mxu0 %v1908
    %2611 = vmatpush1.bf16.msra.mxu0 %v1907
    %2612 = vmatprep.subr.bf16.mxu0 %v1916
    %2613 = vmatpush1.bf16.msra.mxu0 %v1915
    %2614 = vmatprep.subr.bf16.mxu0 %v1924
    %2615 = vmatpush1.bf16.msra.mxu0 %v1923
    %2616 = vmatprep.subr.bf16.mxu0 %v1932
    %2617 = vmatpush1.bf16.msra.mxu0 %v1931
    %2618 = vmatprep.subr.bf16.mxu0 %v1940
    %2619 = vmatpush1.bf16.msra.mxu0 %v1939
    %2620 = vmatprep.subr.bf16.mxu0 %v1948
    %2621 = vmatpush1.bf16.msra.mxu0 %v1947
    %2622 = vmatprep.subr.bf16.mxu0 %v1956
    %2623 = vmatpush1.bf16.msra.mxu0 %v1955
    %2624 = vmatprep.subr.bf16.mxu0 %v1964
    %2625 = vmatpush1.bf16.msra.mxu0 %v1963
    %2626 = vmatprep.subr.bf16.mxu0 %v1972
    %2627 = vmatpush1.bf16.msra.mxu0 %v1971
    %2628 = vmatprep.subr.bf16.mxu0 %v1980
    %2629 = vmatpush1.bf16.msra.mxu0 %v1979
    %2630 = vmatprep.subr.bf16.mxu0 %v1988
    %2631 = vmatpush1.bf16.msra.mxu0 %v1987
    %2632 = vmatprep.subr.bf16.mxu0 %v1996
    %2633 = vmatpush1.bf16.msra.mxu0 %v1995
    %2634 = vmatprep.subr.bf16.mxu0 %v2004
    %2635 = vmatpush1.bf16.msra.mxu0 %v2003
    %2636 = vmatprep.subr.bf16.mxu0 %v2012
    %2637 = vmatpush1.bf16.msra.mxu0 %v2011
    %2638 = vmatprep.subr.bf16.mxu0 %v2020
    %2639 = vmatpush1.bf16.msra.mxu0 %v2019
    %2640 = vmatprep.subr.bf16.mxu0 %v2028
    %2641 = vmatpush1.bf16.msra.mxu0 %v2027
    %2642 = vmatprep.mubr.bf16.mxu0 %v165
    %2643 = vmatmul.mubr.bf16.gmra.mrb[0].mxu0 %v164
    %v2644 = vpop.f32.mrb[0].mxu0
    %v2645 = vadd.f32 %v2602, %v2644
    %v2646 = vpop.f32.mrb[0].mxu0
    %v2647 = vadd.f32 %v2604, %v2646
    %v2648 = vpop.f32.mrb[0].mxu0
    %v2649 = vadd.f32 %v2606, %v2648
    %v2650 = vpop.f32.mrb[0].mxu0
    %v2651 = vadd.f32 %v2608, %v2650
    %2652 = vdwg.mxu0
    %2653 = vmatprep.subr.bf16.mxu0 %v2036
    %2654 = vmatpush1.bf16.msra.mxu0 %v2035
    %2655 = vmatprep.subr.bf16.mxu0 %v2044
    %2656 = vmatpush1.bf16.msra.mxu0 %v2043
    %2657 = vmatprep.subr.bf16.mxu0 %v2052
    %2658 = vmatpush1.bf16.msra.mxu0 %v2051
    %2659 = vmatprep.subr.bf16.mxu0 %v2060
    %2660 = vmatpush1.bf16.msra.mxu0 %v2059
    %2661 = vmatprep.subr.bf16.mxu0 %v2068
    %2662 = vmatpush1.bf16.msra.mxu0 %v2067
    %2663 = vmatprep.subr.bf16.mxu0 %v2076
    %2664 = vmatpush1.bf16.msra.mxu0 %v2075
    %2665 = vmatprep.subr.bf16.mxu0 %v2084
    %2666 = vmatpush1.bf16.msra.mxu0 %v2083
    %2667 = vmatprep.subr.bf16.mxu0 %v2092
    %2668 = vmatpush1.bf16.msra.mxu0 %v2091
    %2669 = vmatprep.subr.bf16.mxu0 %v2100
    %2670 = vmatpush1.bf16.msra.mxu0 %v2099
    %2671 = vmatprep.subr.bf16.mxu0 %v2108
    %2672 = vmatpush1.bf16.msra.mxu0 %v2107
    %2673 = vmatprep.subr.bf16.mxu0 %v2116
    %2674 = vmatpush1.bf16.msra.mxu0 %v2115
    %2675 = vmatprep.subr.bf16.mxu0 %v2124
    %2676 = vmatpush1.bf16.msra.mxu0 %v2123
    %2677 = vmatprep.subr.bf16.mxu0 %v2132
    %2678 = vmatpush1.bf16.msra.mxu0 %v2131
    %2679 = vmatprep.subr.bf16.mxu0 %v2140
    %2680 = vmatpush1.bf16.msra.mxu0 %v2139
    %2681 = vmatprep.subr.bf16.mxu0 %v2148
    %2682 = vmatpush1.bf16.msra.mxu0 %v2147
    %2683 = vmatprep.subr.bf16.mxu0 %v2156
    %2684 = vmatpush1.bf16.msra.mxu0 %v2155
    %2685 = vmatprep.mubr.bf16.mxu0 %v167
    %2686 = vmatmul.mubr.bf16.gmra.mrb[0].mxu0 %v166
    %v2687 = vpop.f32.mrb[0].mxu0
    %v2688 = vadd.f32 %v2645, %v2687
    %v2689 = vpop.f32.mrb[0].mxu0
    %v2690 = vadd.f32 %v2647, %v2689
    %v2691 = vpop.f32.mrb[0].mxu0
    %v2692 = vadd.f32 %v2649, %v2691
    %v2693 = vpop.f32.mrb[0].mxu0
    %v2694 = vadd.f32 %v2651, %v2693
    %2695 = vdwg.mxu0
    %2696 = vmatprep.subr.bf16.mxu0 %v2164
    %2697 = vmatpush1.bf16.msra.mxu0 %v2163
    %2698 = vmatprep.subr.bf16.mxu0 0
    %2699 = vmatpush1.bf16.msra.mxu0 0
    %2700 = vmatprep.subr.bf16.mxu0 0
    %2701 = vmatpush1.bf16.msra.mxu0 0
    %2702 = vmatprep.subr.bf16.mxu0 0
    %2703 = vmatpush1.bf16.msra.mxu0 0
    %2704 = vmatprep.subr.bf16.mxu0 0
    %2705 = vmatpush1.bf16.msra.mxu0 0
    %2706 = vmatprep.subr.bf16.mxu0 0
    %2707 = vmatpush1.bf16.msra.mxu0 0
    %2708 = vmatprep.subr.bf16.mxu0 0
    %2709 = vmatpush1.bf16.msra.mxu0 0
    %2710 = vmatprep.subr.bf16.mxu0 0
    %2711 = vmatpush1.bf16.msra.mxu0 0
    %2712 = vmatprep.subr.bf16.mxu0 0
    %2713 = vmatpush1.bf16.msra.mxu0 0
    %2714 = vmatprep.subr.bf16.mxu0 0
    %2715 = vmatpush1.bf16.msra.mxu0 0
    %2716 = vmatprep.subr.bf16.mxu0 0
    %2717 = vmatpush1.bf16.msra.mxu0 0
    %2718 = vmatprep.subr.bf16.mxu0 0
    %2719 = vmatpush1.bf16.msra.mxu0 0
    %2720 = vmatprep.subr.bf16.mxu0 0
    %2721 = vmatpush1.bf16.msra.mxu0 0
    %2722 = vmatprep.subr.bf16.mxu0 0
    %2723 = vmatpush1.bf16.msra.mxu0 0
    %2724 = vmatprep.subr.bf16.mxu0 0
    %2725 = vmatpush1.bf16.msra.mxu0 0
    %2726 = vmatprep.subr.bf16.mxu0 0
    %2727 = vmatpush1.bf16.msra.mxu0 0
    %2728 = vmatprep.mubr.bf16.mxu0 0
    %2729 = vmatmul.mubr.bf16.gmra.mrb[0].mxu0 %v2565
    %v2730 = vpop.f32.mrb[0].mxu0
    %v2731 = vadd.f32 %v2688, %v2730
    %v2732 = vpop.f32.mrb[0].mxu0
    %v2733 = vadd.f32 %v2690, %v2732
    %v2734 = vpop.f32.mrb[0].mxu0
    %v2735 = vadd.f32 %v2692, %v2734
    %v2736 = vpop.f32.mrb[0].mxu0
    %v2737 = vadd.f32 %v2694, %v2736
    %2738 = vdwg.mxu0
    %2739 = vmatprep.subr.bf16.mxu0 %v1782
    %2740 = vmatpush1.bf16.msra.mxu0 %v1781
    %2741 = vmatprep.subr.bf16.mxu0 %v1790
    %2742 = vmatpush1.bf16.msra.mxu0 %v1789
    %2743 = vmatprep.subr.bf16.mxu0 %v1798
    %2744 = vmatpush1.bf16.msra.mxu0 %v1797
    %2745 = vmatprep.subr.bf16.mxu0 %v1806
    %2746 = vmatpush1.bf16.msra.mxu0 %v1805
    %2747 = vmatprep.subr.bf16.mxu0 %v1814
    %2748 = vmatpush1.bf16.msra.mxu0 %v1813
    %2749 = vmatprep.subr.bf16.mxu0 %v1822
    %2750 = vmatpush1.bf16.msra.mxu0 %v1821
    %2751 = vmatprep.subr.bf16.mxu0 %v1830
    %2752 = vmatpush1.bf16.msra.mxu0 %v1829
    %2753 = vmatprep.subr.bf16.mxu0 %v1838
    %2754 = vmatpush1.bf16.msra.mxu0 %v1837
    %2755 = vmatprep.subr.bf16.mxu0 %v1846
    %2756 = vmatpush1.bf16.msra.mxu0 %v1845
    %2757 = vmatprep.subr.bf16.mxu0 %v1854
    %2758 = vmatpush1.bf16.msra.mxu0 %v1853
    %2759 = vmatprep.subr.bf16.mxu0 %v1862
    %2760 = vmatpush1.bf16.msra.mxu0 %v1861
    %2761 = vmatprep.subr.bf16.mxu0 %v1870
    %2762 = vmatpush1.bf16.msra.mxu0 %v1869
    %2763 = vmatprep.subr.bf16.mxu0 %v1878
    %2764 = vmatpush1.bf16.msra.mxu0 %v1877
    %2765 = vmatprep.subr.bf16.mxu0 %v1886
    %2766 = vmatpush1.bf16.msra.mxu0 %v1885
    %2767 = vmatprep.subr.bf16.mxu0 %v1894
    %2768 = vmatpush1.bf16.msra.mxu0 %v1893
    %2769 = vmatprep.subr.bf16.mxu0 %v1902
    %2770 = vmatpush1.bf16.msra.mxu0 %v1901
    %2771 = vmatprep.mubr.bf16.mxu0 %v163
    %2772 = vmatmul.mubr.bf16.gmra.mrb[0].mxu0 %v162
    %v2773 = vpop.f32.mrb[0].mxu0
    %v2774 = vadd.f32 %v574, %v2773
    %v2775 = vpop.f32.mrb[0].mxu0
    %v2776 = vadd.f32 %v578, %v2775
    %v2777 = vpop.f32.mrb[0].mxu0
    %v2778 = vadd.f32 %v574, %v2777
    %v2779 = vpop.f32.mrb[0].mxu0
    %v2780 = vadd.f32 %v578, %v2779
    %2781 = vdwg.mxu0
    %2782 = vmatprep.subr.bf16.mxu0 %v1910
    %2783 = vmatpush1.bf16.msra.mxu0 %v1909
    %2784 = vmatprep.subr.bf16.mxu0 %v1918
    %2785 = vmatpush1.bf16.msra.mxu0 %v1917
    %2786 = vmatprep.subr.bf16.mxu0 %v1926
    %2787 = vmatpush1.bf16.msra.mxu0 %v1925
    %2788 = vmatprep.subr.bf16.mxu0 %v1934
    %2789 = vmatpush1.bf16.msra.mxu0 %v1933
    %2790 = vmatprep.subr.bf16.mxu0 %v1942
    %2791 = vmatpush1.bf16.msra.mxu0 %v1941
    %2792 = vmatprep.subr.bf16.mxu0 %v1950
    %2793 = vmatpush1.bf16.msra.mxu0 %v1949
    %2794 = vmatprep.subr.bf16.mxu0 %v1958
    %2795 = vmatpush1.bf16.msra.mxu0 %v1957
    %2796 = vmatprep.subr.bf16.mxu0 %v1966
    %2797 = vmatpush1.bf16.msra.mxu0 %v1965
    %2798 = vmatprep.subr.bf16.mxu0 %v1974
    %2799 = vmatpush1.bf16.msra.mxu0 %v1973
    %2800 = vmatprep.subr.bf16.mxu0 %v1982
    %2801 = vmatpush1.bf16.msra.mxu0 %v1981
    %2802 = vmatprep.subr.bf16.mxu0 %v1990
    %2803 = vmatpush1.bf16.msra.mxu0 %v1989
    %2804 = vmatprep.subr.bf16.mxu0 %v1998
    %2805 = vmatpush1.bf16.msra.mxu0 %v1997
    %2806 = vmatprep.subr.bf16.mxu0 %v2006
    %2807 = vmatpush1.bf16.msra.mxu0 %v2005
    %2808 = vmatprep.subr.bf16.mxu0 %v2014
    %2809 = vmatpush1.bf16.msra.mxu0 %v2013
    %2810 = vmatprep.subr.bf16.mxu0 %v2022
    %2811 = vmatpush1.bf16.msra.mxu0 %v2021
    %2812 = vmatprep.subr.bf16.mxu0 %v2030
    %2813 = vmatpush1.bf16.msra.mxu0 %v2029
    %2814 = vmatprep.mubr.bf16.mxu0 %v165
    %2815 = vmatmul.mubr.bf16.gmra.mrb[0].mxu0 %v164
    %v2816 = vpop.f32.mrb[0].mxu0
    %v2817 = vadd.f32 %v2774, %v2816
    %v2818 = vpop.f32.mrb[0].mxu0
    %v2819 = vadd.f32 %v2776, %v2818
    %v2820 = vpop.f32.mrb[0].mxu0
    %v2821 = vadd.f32 %v2778, %v2820
    %v2822 = vpop.f32.mrb[0].mxu0
    %v2823 = vadd.f32 %v2780, %v2822
    %2824 = vdwg.mxu0
    %2825 = vmatprep.subr.bf16.mxu0 %v2038
    %2826 = vmatpush1.bf16.msra.mxu0 %v2037
    %2827 = vmatprep.subr.bf16.mxu0 %v2046
    %2828 = vmatpush1.bf16.msra.mxu0 %v2045
    %2829 = vmatprep.subr.bf16.mxu0 %v2054
    %2830 = vmatpush1.bf16.msra.mxu0 %v2053
    %2831 = vmatprep.subr.bf16.mxu0 %v2062
    %2832 = vmatpush1.bf16.msra.mxu0 %v2061
    %2833 = vmatprep.subr.bf16.mxu0 %v2070
    %2834 = vmatpush1.bf16.msra.mxu0 %v2069
    %2835 = vmatprep.subr.bf16.mxu0 %v2078
    %2836 = vmatpush1.bf16.msra.mxu0 %v2077
    %2837 = vmatprep.subr.bf16.mxu0 %v2086
    %2838 = vmatpush1.bf16.msra.mxu0 %v2085
    %2839 = vmatprep.subr.bf16.mxu0 %v2094
    %2840 = vmatpush1.bf16.msra.mxu0 %v2093
    %2841 = vmatprep.subr.bf16.mxu0 %v2102
    %2842 = vmatpush1.bf16.msra.mxu0 %v2101
    %2843 = vmatprep.subr.bf16.mxu0 %v2110
    %2844 = vmatpush1.bf16.msra.mxu0 %v2109
    %2845 = vmatprep.subr.bf16.mxu0 %v2118
    %2846 = vmatpush1.bf16.msra.mxu0 %v2117
    %2847 = vmatprep.subr.bf16.mxu0 %v2126
    %2848 = vmatpush1.bf16.msra.mxu0 %v2125
    %2849 = vmatprep.subr.bf16.mxu0 %v2134
    %2850 = vmatpush1.bf16.msra.mxu0 %v2133
    %2851 = vmatprep.subr.bf16.mxu0 %v2142
    %2852 = vmatpush1.bf16.msra.mxu0 %v2141
    %2853 = vmatprep.subr.bf16.mxu0 %v2150
    %2854 = vmatpush1.bf16.msra.mxu0 %v2149
    %2855 = vmatprep.subr.bf16.mxu0 %v2158
    %2856 = vmatpush1.bf16.msra.mxu0 %v2157
    %2857 = vmatprep.mubr.bf16.mxu0 %v167
    %2858 = vmatmul.mubr.bf16.gmra.mrb[0].mxu0 %v166
    %v2859 = vpop.f32.mrb[0].mxu0
    %v2860 = vadd.f32 %v2817, %v2859
    %v2861 = vpop.f32.mrb[0].mxu0
    %v2862 = vadd.f32 %v2819, %v2861
    %v2863 = vpop.f32.mrb[0].mxu0
    %v2864 = vadd.f32 %v2821, %v2863
    %v2865 = vpop.f32.mrb[0].mxu0
    %v2866 = vadd.f32 %v2823, %v2865
    %2867 = vdwg.mxu0
    %2868 = vmatprep.subr.bf16.mxu0 %v2166
    %2869 = vmatpush1.bf16.msra.mxu0 %v2165
    %2870 = vmatprep.subr.bf16.mxu0 0
    %2871 = vmatpush1.bf16.msra.mxu0 0
    %2872 = vmatprep.subr.bf16.mxu0 0
    %2873 = vmatpush1.bf16.msra.mxu0 0
    %2874 = vmatprep.subr.bf16.mxu0 0
    %2875 = vmatpush1.bf16.msra.mxu0 0
    %2876 = vmatprep.subr.bf16.mxu0 0
    %2877 = vmatpush1.bf16.msra.mxu0 0
    %2878 = vmatprep.subr.bf16.mxu0 0
    %2879 = vmatpush1.bf16.msra.mxu0 0
    %2880 = vmatprep.subr.bf16.mxu0 0
    %2881 = vmatpush1.bf16.msra.mxu0 0
    %2882 = vmatprep.subr.bf16.mxu0 0
    %2883 = vmatpush1.bf16.msra.mxu0 0
    %2884 = vmatprep.subr.bf16.mxu0 0
    %2885 = vmatpush1.bf16.msra.mxu0 0
    %2886 = vmatprep.subr.bf16.mxu0 0
    %2887 = vmatpush1.bf16.msra.mxu0 0
    %2888 = vmatprep.subr.bf16.mxu0 0
    %2889 = vmatpush1.bf16.msra.mxu0 0
    %2890 = vmatprep.subr.bf16.mxu0 0
    %2891 = vmatpush1.bf16.msra.mxu0 0
    %2892 = vmatprep.subr.bf16.mxu0 0
    %2893 = vmatpush1.bf16.msra.mxu0 0
    %2894 = vmatprep.subr.bf16.mxu0 0
    %2895 = vmatpush1.bf16.msra.mxu0 0
    %2896 = vmatprep.subr.bf16.mxu0 0
    %2897 = vmatpush1.bf16.msra.mxu0 0
    %2898 = vmatprep.subr.bf16.mxu0 0
    %2899 = vmatpush1.bf16.msra.mxu0 0
    %2900 = vmatprep.mubr.bf16.mxu0 0
    %2901 = vmatmul.mubr.bf16.gmra.mrb[0].mxu0 %v2565
    %v2902 = vpop.f32.mrb[0].mxu0
    %v2903 = vadd.f32 %v2860, %v2902
    %v2904 = vpop.f32.mrb[0].mxu0
    %v2905 = vadd.f32 %v2862, %v2904
    %v2906 = vpop.f32.mrb[0].mxu0
    %v2907 = vadd.f32 %v2864, %v2906
    %v2908 = vpop.f32.mrb[0].mxu0
    %v2909 = vadd.f32 %v2866, %v2908
    %2910 = vdwg.mxu0
    %2911 = vmatprep.subr.bf16.mxu0 %v1784
    %2912 = vmatpush1.bf16.msra.mxu0 %v1783
    %2913 = vmatprep.subr.bf16.mxu0 %v1792
    %2914 = vmatpush1.bf16.msra.mxu0 %v1791
    %2915 = vmatprep.subr.bf16.mxu0 %v1800
    %2916 = vmatpush1.bf16.msra.mxu0 %v1799
    %2917 = vmatprep.subr.bf16.mxu0 %v1808
    %2918 = vmatpush1.bf16.msra.mxu0 %v1807
    %2919 = vmatprep.subr.bf16.mxu0 %v1816
    %2920 = vmatpush1.bf16.msra.mxu0 %v1815
    %2921 = vmatprep.subr.bf16.mxu0 %v1824
    %2922 = vmatpush1.bf16.msra.mxu0 %v1823
    %2923 = vmatprep.subr.bf16.mxu0 %v1832
    %2924 = vmatpush1.bf16.msra.mxu0 %v1831
    %2925 = vmatprep.subr.bf16.mxu0 %v1840
    %2926 = vmatpush1.bf16.msra.mxu0 %v1839
    %2927 = vmatprep.subr.bf16.mxu0 %v1848
    %2928 = vmatpush1.bf16.msra.mxu0 %v1847
    %2929 = vmatprep.subr.bf16.mxu0 %v1856
    %2930 = vmatpush1.bf16.msra.mxu0 %v1855
    %2931 = vmatprep.subr.bf16.mxu0 %v1864
    %2932 = vmatpush1.bf16.msra.mxu0 %v1863
    %2933 = vmatprep.subr.bf16.mxu0 %v1872
    %2934 = vmatpush1.bf16.msra.mxu0 %v1871
    %2935 = vmatprep.subr.bf16.mxu0 %v1880
    %2936 = vmatpush1.bf16.msra.mxu0 %v1879
    %2937 = vmatprep.subr.bf16.mxu0 %v1888
    %2938 = vmatpush1.bf16.msra.mxu0 %v1887
    %2939 = vmatprep.subr.bf16.mxu0 %v1896
    %2940 = vmatpush1.bf16.msra.mxu0 %v1895
    %2941 = vmatprep.subr.bf16.mxu0 %v1904
    %2942 = vmatpush1.bf16.msra.mxu0 %v1903
    %2943 = vmatprep.mubr.bf16.mxu0 %v163
    %2944 = vmatmul.mubr.bf16.gmra.mrb[0].mxu0 %v162
    %v2945 = vpop.f32.mrb[0].mxu0
    %v2946 = vadd.f32 %v582, %v2945
    %v2947 = vpop.f32.mrb[0].mxu0
    %v2948 = vadd.f32 %v586, %v2947
    %v2949 = vpop.f32.mrb[0].mxu0
    %v2950 = vadd.f32 %v582, %v2949
    %v2951 = vpop.f32.mrb[0].mxu0
    %v2952 = vadd.f32 %v586, %v2951
    %2953 = vdwg.mxu0
    %2954 = vmatprep.subr.bf16.mxu0 %v1912
    %2955 = vmatpush1.bf16.msra.mxu0 %v1911
    %2956 = vmatprep.subr.bf16.mxu0 %v1920
    %2957 = vmatpush1.bf16.msra.mxu0 %v1919
    %2958 = vmatprep.subr.bf16.mxu0 %v1928
    %2959 = vmatpush1.bf16.msra.mxu0 %v1927
    %2960 = vmatprep.subr.bf16.mxu0 %v1936
    %2961 = vmatpush1.bf16.msra.mxu0 %v1935
    %2962 = vmatprep.subr.bf16.mxu0 %v1944
    %2963 = vmatpush1.bf16.msra.mxu0 %v1943
    %2964 = vmatprep.subr.bf16.mxu0 %v1952
    %2965 = vmatpush1.bf16.msra.mxu0 %v1951
    %2966 = vmatprep.subr.bf16.mxu0 %v1960
    %2967 = vmatpush1.bf16.msra.mxu0 %v1959
    %2968 = vmatprep.subr.bf16.mxu0 %v1968
    %2969 = vmatpush1.bf16.msra.mxu0 %v1967
    %2970 = vmatprep.subr.bf16.mxu0 %v1976
    %2971 = vmatpush1.bf16.msra.mxu0 %v1975
    %2972 = vmatprep.subr.bf16.mxu0 %v1984
    %2973 = vmatpush1.bf16.msra.mxu0 %v1983
    %2974 = vmatprep.subr.bf16.mxu0 %v1992
    %2975 = vmatpush1.bf16.msra.mxu0 %v1991
    %2976 = vmatprep.subr.bf16.mxu0 %v2000
    %2977 = vmatpush1.bf16.msra.mxu0 %v1999
    %2978 = vmatprep.subr.bf16.mxu0 %v2008
    %2979 = vmatpush1.bf16.msra.mxu0 %v2007
    %2980 = vmatprep.subr.bf16.mxu0 %v2016
    %2981 = vmatpush1.bf16.msra.mxu0 %v2015
    %2982 = vmatprep.subr.bf16.mxu0 %v2024
    %2983 = vmatpush1.bf16.msra.mxu0 %v2023
    %2984 = vmatprep.subr.bf16.mxu0 %v2032
    %2985 = vmatpush1.bf16.msra.mxu0 %v2031
    %2986 = vmatprep.mubr.bf16.mxu0 %v165
    %2987 = vmatmul.mubr.bf16.gmra.mrb[0].mxu0 %v164
    %v2988 = vpop.f32.mrb[0].mxu0
    %v2989 = vadd.f32 %v2946, %v2988
    %v2990 = vpop.f32.mrb[0].mxu0
    %v2991 = vadd.f32 %v2948, %v2990
    %v2992 = vpop.f32.mrb[0].mxu0
    %v2993 = vadd.f32 %v2950, %v2992
    %v2994 = vpop.f32.mrb[0].mxu0
    %v2995 = vadd.f32 %v2952, %v2994
    %2996 = vdwg.mxu0
    %2997 = vmatprep.subr.bf16.mxu0 %v2040
    %2998 = vmatpush1.bf16.msra.mxu0 %v2039
    %2999 = vmatprep.subr.bf16.mxu0 %v2048
    %3000 = vmatpush1.bf16.msra.mxu0 %v2047
    %3001 = vmatprep.subr.bf16.mxu0 %v2056
    %3002 = vmatpush1.bf16.msra.mxu0 %v2055
    %3003 = vmatprep.subr.bf16.mxu0 %v2064
    %3004 = vmatpush1.bf16.msra.mxu0 %v2063
    %3005 = vmatprep.subr.bf16.mxu0 %v2072
    %3006 = vmatpush1.bf16.msra.mxu0 %v2071
    %3007 = vmatprep.subr.bf16.mxu0 %v2080
    %3008 = vmatpush1.bf16.msra.mxu0 %v2079
    %3009 = vmatprep.subr.bf16.mxu0 %v2088
    %3010 = vmatpush1.bf16.msra.mxu0 %v2087
    %3011 = vmatprep.subr.bf16.mxu0 %v2096
    %3012 = vmatpush1.bf16.msra.mxu0 %v2095
    %3013 = vmatprep.subr.bf16.mxu0 %v2104
    %3014 = vmatpush1.bf16.msra.mxu0 %v2103
    %3015 = vmatprep.subr.bf16.mxu0 %v2112
    %3016 = vmatpush1.bf16.msra.mxu0 %v2111
    %3017 = vmatprep.subr.bf16.mxu0 %v2120
    %3018 = vmatpush1.bf16.msra.mxu0 %v2119
    %3019 = vmatprep.subr.bf16.mxu0 %v2128
    %3020 = vmatpush1.bf16.msra.mxu0 %v2127
    %3021 = vmatprep.subr.bf16.mxu0 %v2136
    %3022 = vmatpush1.bf16.msra.mxu0 %v2135
    %3023 = vmatprep.subr.bf16.mxu0 %v2144
    %3024 = vmatpush1.bf16.msra.mxu0 %v2143
    %3025 = vmatprep.subr.bf16.mxu0 %v2152
    %3026 = vmatpush1.bf16.msra.mxu0 %v2151
    %3027 = vmatprep.subr.bf16.mxu0 %v2160
    %3028 = vmatpush1.bf16.msra.mxu0 %v2159
    %3029 = vmatprep.mubr.bf16.mxu0 %v167
    %3030 = vmatmul.mubr.bf16.gmra.mrb[0].mxu0 %v166
    %v3031 = vpop.f32.mrb[0].mxu0
    %v3032 = vadd.f32 %v2989, %v3031
    %v3033 = vpop.f32.mrb[0].mxu0
    %v3034 = vadd.f32 %v2991, %v3033
    %v3035 = vpop.f32.mrb[0].mxu0
    %v3036 = vadd.f32 %v2993, %v3035
    %v3037 = vpop.f32.mrb[0].mxu0
    %v3038 = vadd.f32 %v2995, %v3037
    %3039 = vdwg.mxu0
    %3040 = vmatprep.subr.bf16.mxu0 %v2168
    %3041 = vmatpush1.bf16.msra.mxu0 %v2167
    %3042 = vmatprep.subr.bf16.mxu0 0
    %3043 = vmatpush1.bf16.msra.mxu0 0
    %3044 = vmatprep.subr.bf16.mxu0 0
    %3045 = vmatpush1.bf16.msra.mxu0 0
    %3046 = vmatprep.subr.bf16.mxu0 0
    %3047 = vmatpush1.bf16.msra.mxu0 0
    %3048 = vmatprep.subr.bf16.mxu0 0
    %3049 = vmatpush1.bf16.msra.mxu0 0
    %3050 = vmatprep.subr.bf16.mxu0 0
    %3051 = vmatpush1.bf16.msra.mxu0 0
    %3052 = vmatprep.subr.bf16.mxu0 0
    %3053 = vmatpush1.bf16.msra.mxu0 0
    %3054 = vmatprep.subr.bf16.mxu0 0
    %3055 = vmatpush1.bf16.msra.mxu0 0
    %3056 = vmatprep.subr.bf16.mxu0 0
    %3057 = vmatpush1.bf16.msra.mxu0 0
    %3058 = vmatprep.subr.bf16.mxu0 0
    %3059 = vmatpush1.bf16.msra.mxu0 0
    %3060 = vmatprep.subr.bf16.mxu0 0
    %3061 = vmatpush1.bf16.msra.mxu0 0
    %3062 = vmatprep.subr.bf16.mxu0 0
    %3063 = vmatpush1.bf16.msra.mxu0 0
    %3064 = vmatprep.subr.bf16.mxu0 0
    %3065 = vmatpush1.bf16.msra.mxu0 0
    %3066 = vmatprep.subr.bf16.mxu0 0
    %3067 = vmatpush1.bf16.msra.mxu0 0
    %3068 = vmatprep.subr.bf16.mxu0 0
    %3069 = vmatpush1.bf16.msra.mxu0 0
    %3070 = vmatprep.subr.bf16.mxu0 0
    %3071 = vmatpush1.bf16.msra.mxu0 0
    %3072 = vmatprep.mubr.bf16.mxu0 0
    %3073 = vmatmul.mubr.bf16.gmra.mrb[0].mxu0 %v2565
    %v3074 = vpop.f32.mrb[0].mxu0
    %v3075 = vadd.f32 %v3032, %v3074
    %v3076 = vpop.f32.mrb[0].mxu0
    %v3077 = vadd.f32 %v3034, %v3076
    %v3078 = vpop.f32.mrb[0].mxu0
    %v3079 = vadd.f32 %v3036, %v3078
    %v3080 = vpop.f32.mrb[0].mxu0
    %v3081 = vadd.f32 %v3038, %v3080
    %3082 = vdwg.mxu0
    %3083 = vmatprep.subr.bf16.mxu0 %v1786
    %3084 = vmatpush1.bf16.msra.mxu0 %v1785
    %3085 = vmatprep.subr.bf16.mxu0 %v1794
    %3086 = vmatpush1.bf16.msra.mxu0 %v1793
    %3087 = vmatprep.subr.bf16.mxu0 %v1802
    %3088 = vmatpush1.bf16.msra.mxu0 %v1801
    %3089 = vmatprep.subr.bf16.mxu0 %v1810
    %3090 = vmatpush1.bf16.msra.mxu0 %v1809
    %3091 = vmatprep.subr.bf16.mxu0 %v1818
    %3092 = vmatpush1.bf16.msra.mxu0 %v1817
    %3093 = vmatprep.subr.bf16.mxu0 %v1826
    %3094 = vmatpush1.bf16.msra.mxu0 %v1825
    %3095 = vmatprep.subr.bf16.mxu0 %v1834
    %3096 = vmatpush1.bf16.msra.mxu0 %v1833
    %3097 = vmatprep.subr.bf16.mxu0 %v1842
    %3098 = vmatpush1.bf16.msra.mxu0 %v1841
    %3099 = vmatprep.subr.bf16.mxu0 %v1850
    %3100 = vmatpush1.bf16.msra.mxu0 %v1849
    %3101 = vmatprep.subr.bf16.mxu0 %v1858
    %3102 = vmatpush1.bf16.msra.mxu0 %v1857
    %3103 = vmatprep.subr.bf16.mxu0 %v1866
    %3104 = vmatpush1.bf16.msra.mxu0 %v1865
    %3105 = vmatprep.subr.bf16.mxu0 %v1874
    %3106 = vmatpush1.bf16.msra.mxu0 %v1873
    %3107 = vmatprep.subr.bf16.mxu0 %v1882
    %3108 = vmatpush1.bf16.msra.mxu0 %v1881
    %3109 = vmatprep.subr.bf16.mxu0 %v1890
    %3110 = vmatpush1.bf16.msra.mxu0 %v1889
    %3111 = vmatprep.subr.bf16.mxu0 %v1898
    %3112 = vmatpush1.bf16.msra.mxu0 %v1897
    %3113 = vmatprep.subr.bf16.mxu0 %v1906
    %3114 = vmatpush1.bf16.msra.mxu0 %v1905
    %3115 = vmatprep.mubr.bf16.mxu0 %v163
    %3116 = vmatmul.mubr.bf16.gmra.mrb[0].mxu0 %v162
    %v3117 = vpop.f32.mrb[0].mxu0
    %v3118 = vadd.f32 %v590, %v3117
    %v3119 = vpop.f32.mrb[0].mxu0
    %v3120 = vadd.f32 %v594, %v3119
    %v3121 = vpop.f32.mrb[0].mxu0
    %v3122 = vadd.f32 %v590, %v3121
    %v3123 = vpop.f32.mrb[0].mxu0
    %v3124 = vadd.f32 %v594, %v3123
    %3125 = vdwg.mxu0
    %3126 = vmatprep.subr.bf16.mxu0 %v1914
    %3127 = vmatpush1.bf16.msra.mxu0 %v1913
    %3128 = vmatprep.subr.bf16.mxu0 %v1922
    %3129 = vmatpush1.bf16.msra.mxu0 %v1921
    %3130 = vmatprep.subr.bf16.mxu0 %v1930
    %3131 = vmatpush1.bf16.msra.mxu0 %v1929
    %3132 = vmatprep.subr.bf16.mxu0 %v1938
    %3133 = vmatpush1.bf16.msra.mxu0 %v1937
    %3134 = vmatprep.subr.bf16.mxu0 %v1946
    %3135 = vmatpush1.bf16.msra.mxu0 %v1945
    %3136 = vmatprep.subr.bf16.mxu0 %v1954
    %3137 = vmatpush1.bf16.msra.mxu0 %v1953
    %3138 = vmatprep.subr.bf16.mxu0 %v1962
    %3139 = vmatpush1.bf16.msra.mxu0 %v1961
    %3140 = vmatprep.subr.bf16.mxu0 %v1970
    %3141 = vmatpush1.bf16.msra.mxu0 %v1969
    %3142 = vmatprep.subr.bf16.mxu0 %v1978
    %3143 = vmatpush1.bf16.msra.mxu0 %v1977
    %3144 = vmatprep.subr.bf16.mxu0 %v1986
    %3145 = vmatpush1.bf16.msra.mxu0 %v1985
    %3146 = vmatprep.subr.bf16.mxu0 %v1994
    %3147 = vmatpush1.bf16.msra.mxu0 %v1993
    %3148 = vmatprep.subr.bf16.mxu0 %v2002
    %3149 = vmatpush1.bf16.msra.mxu0 %v2001
    %3150 = vmatprep.subr.bf16.mxu0 %v2010
    %3151 = vmatpush1.bf16.msra.mxu0 %v2009
    %3152 = vmatprep.subr.bf16.mxu0 %v2018
    %3153 = vmatpush1.bf16.msra.mxu0 %v2017
    %3154 = vmatprep.subr.bf16.mxu0 %v2026
    %3155 = vmatpush1.bf16.msra.mxu0 %v2025
    %3156 = vmatprep.subr.bf16.mxu0 %v2034
    %3157 = vmatpush1.bf16.msra.mxu0 %v2033
    %3158 = vmatprep.mubr.bf16.mxu0 %v165
    %3159 = vmatmul.mubr.bf16.gmra.mrb[0].mxu0 %v164
    %v3160 = vpop.f32.mrb[0].mxu0
    %v3161 = vadd.f32 %v3118, %v3160
    %v3162 = vpop.f32.mrb[0].mxu0
    %v3163 = vadd.f32 %v3120, %v3162
    %v3164 = vpop.f32.mrb[0].mxu0
    %v3165 = vadd.f32 %v3122, %v3164
    %v3166 = vpop.f32.mrb[0].mxu0
    %v3167 = vadd.f32 %v3124, %v3166
    %3168 = vdwg.mxu0
    %3169 = vmatprep.subr.bf16.mxu0 %v2042
    %3170 = vmatpush1.bf16.msra.mxu0 %v2041
    %3171 = vmatprep.subr.bf16.mxu0 %v2050
    %3172 = vmatpush1.bf16.msra.mxu0 %v2049
    %3173 = vmatprep.subr.bf16.mxu0 %v2058
    %3174 = vmatpush1.bf16.msra.mxu0 %v2057
    %3175 = vmatprep.subr.bf16.mxu0 %v2066
    %3176 = vmatpush1.bf16.msra.mxu0 %v2065
    %3177 = vmatprep.subr.bf16.mxu0 %v2074
    %3178 = vmatpush1.bf16.msra.mxu0 %v2073
    %3179 = vmatprep.subr.bf16.mxu0 %v2082
    %3180 = vmatpush1.bf16.msra.mxu0 %v2081
    %3181 = vmatprep.subr.bf16.mxu0 %v2090
    %3182 = vmatpush1.bf16.msra.mxu0 %v2089
    %3183 = vmatprep.subr.bf16.mxu0 %v2098
    %3184 = vmatpush1.bf16.msra.mxu0 %v2097
    %3185 = vmatprep.subr.bf16.mxu0 %v2106
    %3186 = vmatpush1.bf16.msra.mxu0 %v2105
    %3187 = vmatprep.subr.bf16.mxu0 %v2114
    %3188 = vmatpush1.bf16.msra.mxu0 %v2113
    %3189 = vmatprep.subr.bf16.mxu0 %v2122
    %3190 = vmatpush1.bf16.msra.mxu0 %v2121
    %3191 = vmatprep.subr.bf16.mxu0 %v2130
    %3192 = vmatpush1.bf16.msra.mxu0 %v2129
    %3193 = vmatprep.subr.bf16.mxu0 %v2138
    %3194 = vmatpush1.bf16.msra.mxu0 %v2137
    %3195 = vmatprep.subr.bf16.mxu0 %v2146
    %3196 = vmatpush1.bf16.msra.mxu0 %v2145
    %3197 = vmatprep.subr.bf16.mxu0 %v2154
    %3198 = vmatpush1.bf16.msra.mxu0 %v2153
    %3199 = vmatprep.subr.bf16.mxu0 %v2162
    %3200 = vmatpush1.bf16.msra.mxu0 %v2161
    %3201 = vmatprep.mubr.bf16.mxu0 %v167
    %3202 = vmatmul.mubr.bf16.gmra.mrb[0].mxu0 %v166
    %v3203 = vpop.f32.mrb[0].mxu0
    %v3204 = vadd.f32 %v3161, %v3203
    %v3205 = vpop.f32.mrb[0].mxu0
    %v3206 = vadd.f32 %v3163, %v3205
    %v3207 = vpop.f32.mrb[0].mxu0
    %v3208 = vadd.f32 %v3165, %v3207
    %v3209 = vpop.f32.mrb[0].mxu0
    %v3210 = vadd.f32 %v3167, %v3209
    %3211 = vdwg.mxu0
    %3212 = vmatprep.subr.bf16.mxu0 %v2170
    %3213 = vmatpush1.bf16.msra.mxu0 %v2169
    %3214 = vmatprep.subr.bf16.mxu0 0
    %3215 = vmatpush1.bf16.msra.mxu0 0
    %3216 = vmatprep.subr.bf16.mxu0 0
    %3217 = vmatpush1.bf16.msra.mxu0 0
    %3218 = vmatprep.subr.bf16.mxu0 0
    %3219 = vmatpush1.bf16.msra.mxu0 0
    %3220 = vmatprep.subr.bf16.mxu0 0
    %3221 = vmatpush1.bf16.msra.mxu0 0
    %3222 = vmatprep.subr.bf16.mxu0 0
    %3223 = vmatpush1.bf16.msra.mxu0 0
    %3224 = vmatprep.subr.bf16.mxu0 0
    %3225 = vmatpush1.bf16.msra.mxu0 0
    %3226 = vmatprep.subr.bf16.mxu0 0
    %3227 = vmatpush1.bf16.msra.mxu0 0
    %3228 = vmatprep.subr.bf16.mxu0 0
    %3229 = vmatpush1.bf16.msra.mxu0 0
    %3230 = vmatprep.subr.bf16.mxu0 0
    %3231 = vmatpush1.bf16.msra.mxu0 0
    %3232 = vmatprep.subr.bf16.mxu0 0
    %3233 = vmatpush1.bf16.msra.mxu0 0
    %3234 = vmatprep.subr.bf16.mxu0 0
    %3235 = vmatpush1.bf16.msra.mxu0 0
    %3236 = vmatprep.subr.bf16.mxu0 0
    %3237 = vmatpush1.bf16.msra.mxu0 0
    %3238 = vmatprep.subr.bf16.mxu0 0
    %3239 = vmatpush1.bf16.msra.mxu0 0
    %3240 = vmatprep.subr.bf16.mxu0 0
    %3241 = vmatpush1.bf16.msra.mxu0 0
    %3242 = vmatprep.subr.bf16.mxu0 0
    %3243 = vmatpush1.bf16.msra.mxu0 0
    %3244 = vmatprep.mubr.bf16.mxu0 0
    %3245 = vmatmul.mubr.bf16.gmra.mrb[0].mxu0 %v2565
    %v3246 = vpop.f32.mrb[0].mxu0
    %v3247 = vadd.f32 %v3204, %v3246
    %v3248 = vpop.f32.mrb[0].mxu0
    %v3249 = vadd.f32 %v3206, %v3248
    %v3250 = vpop.f32.mrb[0].mxu0
    %v3251 = vadd.f32 %v3208, %v3250
    %v3252 = vpop.f32.mrb[0].mxu0
    %v3253 = vadd.f32 %v3210, %v3252
    %3254 = vdwg.mxu0
    %vm3255 = vcmp.gt.f32.partialorder %v2731, 0.0
    %vm3256 = vcmp.gt.f32.partialorder %v2733, 0.0
    %vm3257 = vcmp.gt.f32.partialorder %v2903, 0.0
    %vm3258 = vcmp.gt.f32.partialorder %v2905, 0.0
    %vm3259 = vcmp.gt.f32.partialorder %v3075, 0.0
    %vm3260 = vcmp.gt.f32.partialorder %v3077, 0.0
    %vm3261 = vcmp.gt.f32.partialorder %v3247, 0.0
    %vm3262 = vcmp.gt.f32.partialorder %v3249, 0.0
    %vm3263 = vcmp.gt.f32.partialorder %v2735, 0.0
    %vm3264 = vcmp.gt.f32.partialorder %v2737, 0.0
    %vm3265 = vcmp.gt.f32.partialorder %v2907, 0.0
    %vm3266 = vcmp.gt.f32.partialorder %v2909, 0.0
    %vm3267 = vcmp.gt.f32.partialorder %v3079, 0.0
    %vm3268 = vcmp.gt.f32.partialorder %v3081, 0.0
    %vm3269 = vcmp.gt.f32.partialorder %v3251, 0.0
    %vm3270 = vcmp.gt.f32.partialorder %v3253, 0.0
    %v3271 = vmul.f32 %v2731, 0.2
    %v3272 = vmul.f32 %v2733, 0.2
    %v3273 = vmul.f32 %v2903, 0.2
    %v3274 = vmul.f32 %v2905, 0.2
    %v3275 = vmul.f32 %v3075, 0.2
    %v3276 = vmul.f32 %v3077, 0.2
    %v3277 = vmul.f32 %v3247, 0.2
    %v3278 = vmul.f32 %v3249, 0.2
    %v3279 = vmul.f32 %v2735, 0.2
    %v3280 = vmul.f32 %v2737, 0.2
    %v3281 = vmul.f32 %v2907, 0.2
    %v3282 = vmul.f32 %v2909, 0.2
    %v3283 = vmul.f32 %v3079, 0.2
    %v3284 = vmul.f32 %v3081, 0.2
    %v3285 = vmul.f32 %v3251, 0.2
    %v3286 = vmul.f32 %v3253, 0.2
    %v3287 = vsel %vm3255, %v2731, %v3271
    %v3288 = vsel %vm3256, %v2733, %v3272
    %v3289 = vsel %vm3257, %v2903, %v3273
    %v3290 = vsel %vm3258, %v2905, %v3274
    %v3291 = vsel %vm3259, %v3075, %v3275
    %v3292 = vsel %vm3260, %v3077, %v3276
    %v3293 = vsel %vm3261, %v3247, %v3277
    %v3294 = vsel %vm3262, %v3249, %v3278
    %v3295 = vsel %vm3263, %v2735, %v3279
    %v3296 = vsel %vm3264, %v2737, %v3280
    %v3297 = vsel %vm3265, %v2907, %v3281
    %v3298 = vsel %vm3266, %v2909, %v3282
    %v3299 = vsel %vm3267, %v3079, %v3283
    %v3300 = vsel %vm3268, %v3081, %v3284
    %v3301 = vsel %vm3269, %v3251, %v3285
    %v3302 = vsel %vm3270, %v3253, %v3286
    %v3303 = vpack.c.bf16 %v3295, %v3287
    %v3304 = vpack.c.bf16 %v3296, %v3288
    %v3305 = vpack.c.bf16 %v3297, %v3289
    %v3306 = vpack.c.bf16 %v3298, %v3290
    %v3307 = vpack.c.bf16 %v3299, %v3291
    %v3308 = vpack.c.bf16 %v3300, %v3292
    %v3309 = vpack.c.bf16 %v3301, %v3293
    %v3310 = vpack.c.bf16 %v3302, %v3294
    %v3311 = vld [vmem:[#allocation8] sm:$0xff]
    %v3312 = vld [vmem:[#allocation8 + $0x8] sm:$0xff]
    %v3313 = vld [vmem:[#allocation8 + $0x10] sm:$0xff]
    %v3314 = vld [vmem:[#allocation8 + $0x18] sm:$0xff]
    %v3315 = vld [vmem:[#allocation8 + $0x20] sm:$0xff]
    %v3316 = vld [vmem:[#allocation8 + $0x28] sm:$0xff]
    %v3317 = vld [vmem:[#allocation8 + $0x30] sm:$0xff]
    %v3318 = vld [vmem:[#allocation8 + $0x38] sm:$0xff]
    %v3319 = vld [vmem:[#allocation8 + $0x40] sm:$0xff]
    %v3320 = vld [vmem:[#allocation8 + $0x48] sm:$0xff]
    %v3321 = vld [vmem:[#allocation8 + $0x50] sm:$0xff]
    %v3322 = vld [vmem:[#allocation8 + $0x58] sm:$0xff]
    %v3323 = vld [vmem:[#allocation8 + $0x60] sm:$0xff]
    %v3324 = vld [vmem:[#allocation8 + $0x68] sm:$0xff]
    %v3325 = vld [vmem:[#allocation8 + $0x70] sm:$0xff]
    %v3326 = vld [vmem:[#allocation8 + $0x78] sm:$0xff]
    %v3327 = vld [vmem:[#allocation8 + $0x80] sm:$0xff]
    %v3328 = vld [vmem:[#allocation8 + $0x88] sm:$0xff]
    %v3329 = vld [vmem:[#allocation8 + $0x90] sm:$0xff]
    %v3330 = vld [vmem:[#allocation8 + $0x98] sm:$0xff]
    %v3331 = vld [vmem:[#allocation8 + $0xa0] sm:$0xff]
    %v3332 = vld [vmem:[#allocation8 + $0xa8] sm:$0xff]
    %v3333 = vld [vmem:[#allocation8 + $0xb0] sm:$0xff]
    %v3334 = vld [vmem:[#allocation8 + $0xb8] sm:$0xff]
    %v3335 = vld [vmem:[#allocation8 + $0xc0] sm:$0xff]
    %v3336 = vld [vmem:[#allocation8 + $0xc8] sm:$0xff]
    %v3337 = vld [vmem:[#allocation8 + $0xd0] sm:$0xff]
    %v3338 = vld [vmem:[#allocation8 + $0xd8] sm:$0xff]
    %v3339 = vld [vmem:[#allocation8 + $0xe0] sm:$0xff]
    %v3340 = vld [vmem:[#allocation8 + $0xe8] sm:$0xff]
    %v3341 = vld [vmem:[#allocation8 + $0xf0] sm:$0xff]
    %v3342 = vld [vmem:[#allocation8 + $0xf8] sm:$0xff]
    %v3343 = vld [vmem:[#allocation8 + $0x100] sm:$0xff]
    %v3344 = vld [vmem:[#allocation8 + $0x108] sm:$0xff]
    %v3345 = vld [vmem:[#allocation8 + $0x110] sm:$0xff]
    %v3346 = vld [vmem:[#allocation8 + $0x118] sm:$0xff]
    %v3347 = vld [vmem:[#allocation8 + $0x120] sm:$0xff]
    %v3348 = vld [vmem:[#allocation8 + $0x128] sm:$0xff]
    %v3349 = vld [vmem:[#allocation8 + $0x130] sm:$0xff]
    %v3350 = vld [vmem:[#allocation8 + $0x138] sm:$0xff]
    %v3351 = vld [vmem:[#allocation8 + $0x140] sm:$0xff]
    %v3352 = vld [vmem:[#allocation8 + $0x148] sm:$0xff]
    %v3353 = vld [vmem:[#allocation8 + $0x150] sm:$0xff]
    %v3354 = vld [vmem:[#allocation8 + $0x158] sm:$0xff]
    %v3355 = vld [vmem:[#allocation8 + $0x160] sm:$0xff]
    %v3356 = vld [vmem:[#allocation8 + $0x168] sm:$0xff]
    %v3357 = vld [vmem:[#allocation8 + $0x170] sm:$0xff]
    %v3358 = vld [vmem:[#allocation8 + $0x178] sm:$0xff]
    %v3359 = vld [vmem:[#allocation8 + $0x180] sm:$0xff]
    %v3360 = vld [vmem:[#allocation8 + $0x188] sm:$0xff]
    %v3361 = vld [vmem:[#allocation8 + $0x190] sm:$0xff]
    %v3362 = vld [vmem:[#allocation8 + $0x198] sm:$0xff]
    %v3363 = vld [vmem:[#allocation8 + $0x1a0] sm:$0xff]
    %v3364 = vld [vmem:[#allocation8 + $0x1a8] sm:$0xff]
    %v3365 = vld [vmem:[#allocation8 + $0x1b0] sm:$0xff]
    %v3366 = vld [vmem:[#allocation8 + $0x1b8] sm:$0xff]
    %v3367 = vld [vmem:[#allocation8 + $0x1c0] sm:$0xff]
    %v3368 = vld [vmem:[#allocation8 + $0x1c8] sm:$0xff]
    %v3369 = vld [vmem:[#allocation8 + $0x1d0] sm:$0xff]
    %v3370 = vld [vmem:[#allocation8 + $0x1d8] sm:$0xff]
    %v3371 = vld [vmem:[#allocation8 + $0x1e0] sm:$0xff]
    %v3372 = vld [vmem:[#allocation8 + $0x1e8] sm:$0xff]
    %v3373 = vld [vmem:[#allocation8 + $0x1f0] sm:$0xff]
    %v3374 = vld [vmem:[#allocation8 + $0x1f8] sm:$0xff]
    %v3375 = vld [vmem:[#allocation8 + $0x200] sm:$0xff]
    %v3376 = vld [vmem:[#allocation8 + $0x208] sm:$0xff]
    %v3377 = vld [vmem:[#allocation8 + $0x210] sm:$0xff]
    %v3378 = vld [vmem:[#allocation8 + $0x218] sm:$0xff]
    %v3379 = vld [vmem:[#allocation8 + $0x220] sm:$0xff]
    %v3380 = vld [vmem:[#allocation8 + $0x228] sm:$0xff]
    %v3381 = vld [vmem:[#allocation8 + $0x230] sm:$0xff]
    %v3382 = vld [vmem:[#allocation8 + $0x238] sm:$0xff]
    %v3383 = vld [vmem:[#allocation8 + $0x240] sm:$0xff]
    %v3384 = vld [vmem:[#allocation8 + $0x248] sm:$0xff]
    %v3385 = vld [vmem:[#allocation8 + $0x250] sm:$0xff]
    %v3386 = vld [vmem:[#allocation8 + $0x258] sm:$0xff]
    %v3387 = vld [vmem:[#allocation8 + $0x260] sm:$0xff]
    %v3388 = vld [vmem:[#allocation8 + $0x268] sm:$0xff]
    %v3389 = vld [vmem:[#allocation8 + $0x270] sm:$0xff]
    %v3390 = vld [vmem:[#allocation8 + $0x278] sm:$0xff]
    %v3391 = vld [vmem:[#allocation8 + $0x280] sm:$0xff]
    %v3392 = vld [vmem:[#allocation8 + $0x288] sm:$0xff]
    %v3393 = vld [vmem:[#allocation8 + $0x290] sm:$0xff]
    %v3394 = vld [vmem:[#allocation8 + $0x298] sm:$0xff]
    %v3395 = vld [vmem:[#allocation8 + $0x2a0] sm:$0xff]
    %v3396 = vld [vmem:[#allocation8 + $0x2a8] sm:$0xff]
    %v3397 = vld [vmem:[#allocation8 + $0x2b0] sm:$0xff]
    %v3398 = vld [vmem:[#allocation8 + $0x2b8] sm:$0xff]
    %v3399 = vld [vmem:[#allocation8 + $0x2c0] sm:$0xff]
    %v3400 = vld [vmem:[#allocation8 + $0x2c8] sm:$0xff]
    %v3401 = vld [vmem:[#allocation8 + $0x2d0] sm:$0xff]
    %v3402 = vld [vmem:[#allocation8 + $0x2d8] sm:$0xff]
    %v3403 = vld [vmem:[#allocation8 + $0x2e0] sm:$0xff]
    %v3404 = vld [vmem:[#allocation8 + $0x2e8] sm:$0xff]
    %v3405 = vld [vmem:[#allocation8 + $0x2f0] sm:$0xff]
    %v3406 = vld [vmem:[#allocation8 + $0x2f8] sm:$0xff]
    %v3407 = vld [vmem:[#allocation8 + $0x300] sm:$0xff]
    %v3408 = vld [vmem:[#allocation8 + $0x308] sm:$0xff]
    %v3409 = vld [vmem:[#allocation8 + $0x310] sm:$0xff]
    %v3410 = vld [vmem:[#allocation8 + $0x318] sm:$0xff]
    %v3411 = vld [vmem:[#allocation8 + $0x320] sm:$0xff]
    %v3412 = vld [vmem:[#allocation8 + $0x328] sm:$0xff]
    %v3413 = vld [vmem:[#allocation8 + $0x330] sm:$0xff]
    %v3414 = vld [vmem:[#allocation8 + $0x338] sm:$0xff]
    %v3415 = vld [vmem:[#allocation8 + $0x340] sm:$0xff]
    %v3416 = vld [vmem:[#allocation8 + $0x348] sm:$0xff]
    %v3417 = vld [vmem:[#allocation8 + $0x350] sm:$0xff]
    %v3418 = vld [vmem:[#allocation8 + $0x358] sm:$0xff]
    %v3419 = vld [vmem:[#allocation8 + $0x360] sm:$0xff]
    %v3420 = vld [vmem:[#allocation8 + $0x368] sm:$0xff]
    %v3421 = vld [vmem:[#allocation8 + $0x370] sm:$0xff]
    %v3422 = vld [vmem:[#allocation8 + $0x378] sm:$0xff]
    %v3423 = vld [vmem:[#allocation8 + $0x380] sm:$0xff]
    %v3424 = vld [vmem:[#allocation8 + $0x388] sm:$0xff]
    %v3425 = vld [vmem:[#allocation8 + $0x390] sm:$0xff]
    %v3426 = vld [vmem:[#allocation8 + $0x398] sm:$0xff]
    %v3427 = vld [vmem:[#allocation8 + $0x3a0] sm:$0xff]
    %v3428 = vld [vmem:[#allocation8 + $0x3a8] sm:$0xff]
    %v3429 = vld [vmem:[#allocation8 + $0x3b0] sm:$0xff]
    %v3430 = vld [vmem:[#allocation8 + $0x3b8] sm:$0xff]
    %v3431 = vld [vmem:[#allocation8 + $0x3c0] sm:$0xff]
    %v3432 = vld [vmem:[#allocation8 + $0x3c8] sm:$0xff]
    %v3433 = vld [vmem:[#allocation8 + $0x3d0] sm:$0xff]
    %v3434 = vld [vmem:[#allocation8 + $0x3d8] sm:$0xff]
    %v3435 = vld [vmem:[#allocation8 + $0x3e0] sm:$0xff]
    %v3436 = vld [vmem:[#allocation8 + $0x3e8] sm:$0xff]
    %v3437 = vld [vmem:[#allocation8 + $0x3f0] sm:$0xff]
    %v3438 = vld [vmem:[#allocation8 + $0x3f8] sm:$0xff]
    %v3439 = vld [vmem:[#allocation8 + $0x400] sm:$0xff]
    %v3440 = vld [vmem:[#allocation8 + $0x408] sm:$0xff]
    %v3441 = vld [vmem:[#allocation8 + $0x410] sm:$0xff]
    %v3442 = vld [vmem:[#allocation8 + $0x418] sm:$0xff]
    %v3443 = vld [vmem:[#allocation8 + $0x420] sm:$0xff]
    %v3444 = vld [vmem:[#allocation8 + $0x428] sm:$0xff]
    %v3445 = vld [vmem:[#allocation8 + $0x430] sm:$0xff]
    %v3446 = vld [vmem:[#allocation8 + $0x438] sm:$0xff]
    %v3447 = vld [vmem:[#allocation8 + $0x440] sm:$0xff]
    %v3448 = vld [vmem:[#allocation8 + $0x448] sm:$0xff]
    %v3449 = vld [vmem:[#allocation8 + $0x450] sm:$0xff]
    %v3450 = vld [vmem:[#allocation8 + $0x458] sm:$0xff]
    %v3451 = vld [vmem:[#allocation8 + $0x460] sm:$0xff]
    %v3452 = vld [vmem:[#allocation8 + $0x468] sm:$0xff]
    %v3453 = vld [vmem:[#allocation8 + $0x470] sm:$0xff]
    %v3454 = vld [vmem:[#allocation8 + $0x478] sm:$0xff]
    %v3455 = vld [vmem:[#allocation8 + $0x480] sm:$0xff]
    %v3456 = vld [vmem:[#allocation8 + $0x488] sm:$0xff]
    %v3457 = vld [vmem:[#allocation8 + $0x490] sm:$0xff]
    %v3458 = vld [vmem:[#allocation8 + $0x498] sm:$0xff]
    %v3459 = vld [vmem:[#allocation8 + $0x4a0] sm:$0xff]
    %v3460 = vld [vmem:[#allocation8 + $0x4a8] sm:$0xff]
    %v3461 = vld [vmem:[#allocation8 + $0x4b0] sm:$0xff]
    %v3462 = vld [vmem:[#allocation8 + $0x4b8] sm:$0xff]
    %v3463 = vld [vmem:[#allocation8 + $0x4c0] sm:$0xff]
    %v3464 = vld [vmem:[#allocation8 + $0x4c8] sm:$0xff]
    %v3465 = vld [vmem:[#allocation8 + $0x4d0] sm:$0xff]
    %v3466 = vld [vmem:[#allocation8 + $0x4d8] sm:$0xff]
    %v3467 = vld [vmem:[#allocation8 + $0x4e0] sm:$0xff]
    %v3468 = vld [vmem:[#allocation8 + $0x4e8] sm:$0xff]
    %v3469 = vld [vmem:[#allocation8 + $0x4f0] sm:$0xff]
    %v3470 = vld [vmem:[#allocation8 + $0x4f8] sm:$0xff]
    %v3471 = vld [vmem:[#allocation8 + $0x500] sm:$0xff]
    %v3472 = vld [vmem:[#allocation8 + $0x508] sm:$0xff]
    %v3473 = vld [vmem:[#allocation8 + $0x510] sm:$0xff]
    %v3474 = vld [vmem:[#allocation8 + $0x518] sm:$0xff]
    %v3475 = vld [vmem:[#allocation8 + $0x520] sm:$0xff]
    %v3476 = vld [vmem:[#allocation8 + $0x528] sm:$0xff]
    %v3477 = vld [vmem:[#allocation8 + $0x530] sm:$0xff]
    %v3478 = vld [vmem:[#allocation8 + $0x538] sm:$0xff]
    %v3479 = vld [vmem:[#allocation8 + $0x540] sm:$0xff]
    %v3480 = vld [vmem:[#allocation8 + $0x548] sm:$0xff]
    %v3481 = vld [vmem:[#allocation8 + $0x550] sm:$0xff]
    %v3482 = vld [vmem:[#allocation8 + $0x558] sm:$0xff]
    %v3483 = vld [vmem:[#allocation8 + $0x560] sm:$0xff]
    %v3484 = vld [vmem:[#allocation8 + $0x568] sm:$0xff]
    %v3485 = vld [vmem:[#allocation8 + $0x570] sm:$0xff]
    %v3486 = vld [vmem:[#allocation8 + $0x578] sm:$0xff]
    %v3487 = vld [vmem:[#allocation8 + $0x580] sm:$0xff]
    %v3488 = vld [vmem:[#allocation8 + $0x588] sm:$0xff]
    %v3489 = vld [vmem:[#allocation8 + $0x590] sm:$0xff]
    %v3490 = vld [vmem:[#allocation8 + $0x598] sm:$0xff]
    %v3491 = vld [vmem:[#allocation8 + $0x5a0] sm:$0xff]
    %v3492 = vld [vmem:[#allocation8 + $0x5a8] sm:$0xff]
    %v3493 = vld [vmem:[#allocation8 + $0x5b0] sm:$0xff]
    %v3494 = vld [vmem:[#allocation8 + $0x5b8] sm:$0xff]
    %v3495 = vld [vmem:[#allocation8 + $0x5c0] sm:$0xff]
    %v3496 = vld [vmem:[#allocation8 + $0x5c8] sm:$0xff]
    %v3497 = vld [vmem:[#allocation8 + $0x5d0] sm:$0xff]
    %v3498 = vld [vmem:[#allocation8 + $0x5d8] sm:$0xff]
    %v3499 = vld [vmem:[#allocation8 + $0x5e0] sm:$0xff]
    %v3500 = vld [vmem:[#allocation8 + $0x5e8] sm:$0xff]
    %v3501 = vld [vmem:[#allocation8 + $0x5f0] sm:$0xff]
    %v3502 = vld [vmem:[#allocation8 + $0x5f8] sm:$0xff]
    %v3503 = vld [vmem:[#allocation8 + $0x600] sm:$0xff]
    %v3504 = vld [vmem:[#allocation8 + $0x608] sm:$0xff]
    %v3505 = vld [vmem:[#allocation8 + $0x610] sm:$0xff]
    %v3506 = vld [vmem:[#allocation8 + $0x618] sm:$0xff]
    %v3507 = vld [vmem:[#allocation8 + $0x620] sm:$0xff]
    %v3508 = vld [vmem:[#allocation8 + $0x628] sm:$0xff]
    %v3509 = vld [vmem:[#allocation8 + $0x630] sm:$0xff]
    %v3510 = vld [vmem:[#allocation8 + $0x638] sm:$0xff]
    %v3511 = vld [vmem:[#allocation8 + $0x640] sm:$0xff]
    %v3512 = vld [vmem:[#allocation8 + $0x648] sm:$0xff]
    %v3513 = vld [vmem:[#allocation8 + $0x650] sm:$0xff]
    %v3514 = vld [vmem:[#allocation8 + $0x658] sm:$0xff]
    %v3515 = vld [vmem:[#allocation8 + $0x660] sm:$0xff]
    %v3516 = vld [vmem:[#allocation8 + $0x668] sm:$0xff]
    %v3517 = vld [vmem:[#allocation8 + $0x670] sm:$0xff]
    %v3518 = vld [vmem:[#allocation8 + $0x678] sm:$0xff]
    %v3519 = vld [vmem:[#allocation8 + $0x680] sm:$0xff]
    %v3520 = vld [vmem:[#allocation8 + $0x688] sm:$0xff]
    %v3521 = vld [vmem:[#allocation8 + $0x690] sm:$0xff]
    %v3522 = vld [vmem:[#allocation8 + $0x698] sm:$0xff]
    %v3523 = vld [vmem:[#allocation8 + $0x6a0] sm:$0xff]
    %v3524 = vld [vmem:[#allocation8 + $0x6a8] sm:$0xff]
    %v3525 = vld [vmem:[#allocation8 + $0x6b0] sm:$0xff]
    %v3526 = vld [vmem:[#allocation8 + $0x6b8] sm:$0xff]
    %v3527 = vld [vmem:[#allocation8 + $0x6c0] sm:$0xff]
    %v3528 = vld [vmem:[#allocation8 + $0x6c8] sm:$0xff]
    %v3529 = vld [vmem:[#allocation8 + $0x6d0] sm:$0xff]
    %v3530 = vld [vmem:[#allocation8 + $0x6d8] sm:$0xff]
    %v3531 = vld [vmem:[#allocation8 + $0x6e0] sm:$0xff]
    %v3532 = vld [vmem:[#allocation8 + $0x6e8] sm:$0xff]
    %v3533 = vld [vmem:[#allocation8 + $0x6f0] sm:$0xff]
    %v3534 = vld [vmem:[#allocation8 + $0x6f8] sm:$0xff]
    %v3535 = vld [vmem:[#allocation8 + $0x700] sm:$0xff]
    %v3536 = vld [vmem:[#allocation8 + $0x708] sm:$0xff]
    %v3537 = vld [vmem:[#allocation8 + $0x710] sm:$0xff]
    %v3538 = vld [vmem:[#allocation8 + $0x718] sm:$0xff]
    %v3539 = vld [vmem:[#allocation8 + $0x720] sm:$0xff]
    %v3540 = vld [vmem:[#allocation8 + $0x728] sm:$0xff]
    %v3541 = vld [vmem:[#allocation8 + $0x730] sm:$0xff]
    %v3542 = vld [vmem:[#allocation8 + $0x738] sm:$0xff]
    %v3543 = vld [vmem:[#allocation8 + $0x740] sm:$0xff]
    %v3544 = vld [vmem:[#allocation8 + $0x748] sm:$0xff]
    %v3545 = vld [vmem:[#allocation8 + $0x750] sm:$0xff]
    %v3546 = vld [vmem:[#allocation8 + $0x758] sm:$0xff]
    %v3547 = vld [vmem:[#allocation8 + $0x760] sm:$0xff]
    %v3548 = vld [vmem:[#allocation8 + $0x768] sm:$0xff]
    %v3549 = vld [vmem:[#allocation8 + $0x770] sm:$0xff]
    %v3550 = vld [vmem:[#allocation8 + $0x778] sm:$0xff]
    %v3551 = vld [vmem:[#allocation8 + $0x780] sm:$0xff]
    %v3552 = vld [vmem:[#allocation8 + $0x788] sm:$0xff]
    %v3553 = vld [vmem:[#allocation8 + $0x790] sm:$0xff]
    %v3554 = vld [vmem:[#allocation8 + $0x798] sm:$0xff]
    %v3555 = vld [vmem:[#allocation8 + $0x7a0] sm:$0xff]
    %v3556 = vld [vmem:[#allocation8 + $0x7a8] sm:$0xff]
    %v3557 = vld [vmem:[#allocation8 + $0x7b0] sm:$0xff]
    %v3558 = vld [vmem:[#allocation8 + $0x7b8] sm:$0xff]
    %v3559 = vld [vmem:[#allocation8 + $0x7c0] sm:$0xff]
    %v3560 = vld [vmem:[#allocation8 + $0x7c8] sm:$0xff]
    %v3561 = vld [vmem:[#allocation8 + $0x7d0] sm:$0xff]
    %v3562 = vld [vmem:[#allocation8 + $0x7d8] sm:$0xff]
    %v3563 = vld [vmem:[#allocation8 + $0x7e0] sm:$0xff]
    %v3564 = vld [vmem:[#allocation8 + $0x7e8] sm:$0xff]
    %v3565 = vld [vmem:[#allocation8 + $0x7f0] sm:$0xff]
    %v3566 = vld [vmem:[#allocation8 + $0x7f8] sm:$0xff]
    %v3567 = vld [vmem:[#allocation10] sm:$0xf]
    %v3569 = vlaneseq
    %v3570 = vshrl.u32 %v3569, 7
    %v3571 = vsub.s32 0, %v3570
    %v3572 = vrot.slane %v3567, %v3571
    %v3573 = vlaneseq
    %v3574 = vshrl.u32 %v3573, 7
    %v3575 = vsub.s32 1, %v3574
    %v3576 = vrot.slane %v3567, %v3575
    %v3577 = vlaneseq
    %v3578 = vshrl.u32 %v3577, 7
    %v3579 = vsub.s32 2, %v3578
    %v3580 = vrot.slane %v3567, %v3579
    %v3581 = vlaneseq
    %v3582 = vshrl.u32 %v3581, 7
    %v3583 = vsub.s32 3, %v3582
    %v3584 = vrot.slane %v3567, %v3583
    %v3845 = vunpack.c.l.b16 %v3311
    %v3846 = vunpack.c.h.b16 %v3311
    %v3847 = vunpack.c.l.b16 %v3312
    %v3848 = vunpack.c.h.b16 %v3312
    %v3849 = vunpack.c.l.b16 %v3313
    %v3850 = vunpack.c.h.b16 %v3313
    %v3851 = vunpack.c.l.b16 %v3314
    %v3852 = vunpack.c.h.b16 %v3314
    %v3853 = vunpack.c.l.b16 %v3315
    %v3854 = vunpack.c.h.b16 %v3315
    %v3855 = vunpack.c.l.b16 %v3316
    %v3856 = vunpack.c.h.b16 %v3316
    %v3857 = vunpack.c.l.b16 %v3317
    %v3858 = vunpack.c.h.b16 %v3317
    %v3859 = vunpack.c.l.b16 %v3318
    %v3860 = vunpack.c.h.b16 %v3318
    %v3861 = vunpack.c.l.b16 %v3319
    %v3862 = vunpack.c.h.b16 %v3319
    %v3863 = vunpack.c.l.b16 %v3320
    %v3864 = vunpack.c.h.b16 %v3320
    %v3865 = vunpack.c.l.b16 %v3321
    %v3866 = vunpack.c.h.b16 %v3321
    %v3867 = vunpack.c.l.b16 %v3322
    %v3868 = vunpack.c.h.b16 %v3322
    %v3869 = vunpack.c.l.b16 %v3323
    %v3870 = vunpack.c.h.b16 %v3323
    %v3871 = vunpack.c.l.b16 %v3324
    %v3872 = vunpack.c.h.b16 %v3324
    %v3873 = vunpack.c.l.b16 %v3325
    %v3874 = vunpack.c.h.b16 %v3325
    %v3875 = vunpack.c.l.b16 %v3326
    %v3876 = vunpack.c.h.b16 %v3326
    %v3877 = vunpack.c.l.b16 %v3327
    %v3878 = vunpack.c.h.b16 %v3327
    %v3879 = vunpack.c.l.b16 %v3328
    %v3880 = vunpack.c.h.b16 %v3328
    %v3881 = vunpack.c.l.b16 %v3329
    %v3882 = vunpack.c.h.b16 %v3329
    %v3883 = vunpack.c.l.b16 %v3330
    %v3884 = vunpack.c.h.b16 %v3330
    %v3885 = vunpack.c.l.b16 %v3331
    %v3886 = vunpack.c.h.b16 %v3331
    %v3887 = vunpack.c.l.b16 %v3332
    %v3888 = vunpack.c.h.b16 %v3332
    %v3889 = vunpack.c.l.b16 %v3333
    %v3890 = vunpack.c.h.b16 %v3333
    %v3891 = vunpack.c.l.b16 %v3334
    %v3892 = vunpack.c.h.b16 %v3334
    %v3893 = vunpack.c.l.b16 %v3335
    %v3894 = vunpack.c.h.b16 %v3335
    %v3895 = vunpack.c.l.b16 %v3336
    %v3896 = vunpack.c.h.b16 %v3336
    %v3897 = vunpack.c.l.b16 %v3337
    %v3898 = vunpack.c.h.b16 %v3337
    %v3899 = vunpack.c.l.b16 %v3338
    %v3900 = vunpack.c.h.b16 %v3338
    %v3901 = vunpack.c.l.b16 %v3339
    %v3902 = vunpack.c.h.b16 %v3339
    %v3903 = vunpack.c.l.b16 %v3340
    %v3904 = vunpack.c.h.b16 %v3340
    %v3905 = vunpack.c.l.b16 %v3341
    %v3906 = vunpack.c.h.b16 %v3341
    %v3907 = vunpack.c.l.b16 %v3342
    %v3908 = vunpack.c.h.b16 %v3342
    %v3909 = vunpack.c.l.b16 %v3343
    %v3910 = vunpack.c.h.b16 %v3343
    %v3911 = vunpack.c.l.b16 %v3344
    %v3912 = vunpack.c.h.b16 %v3344
    %v3913 = vunpack.c.l.b16 %v3345
    %v3914 = vunpack.c.h.b16 %v3345
    %v3915 = vunpack.c.l.b16 %v3346
    %v3916 = vunpack.c.h.b16 %v3346
    %v3917 = vunpack.c.l.b16 %v3347
    %v3918 = vunpack.c.h.b16 %v3347
    %v3919 = vunpack.c.l.b16 %v3348
    %v3920 = vunpack.c.h.b16 %v3348
    %v3921 = vunpack.c.l.b16 %v3349
    %v3922 = vunpack.c.h.b16 %v3349
    %v3923 = vunpack.c.l.b16 %v3350
    %v3924 = vunpack.c.h.b16 %v3350
    %v3925 = vunpack.c.l.b16 %v3351
    %v3926 = vunpack.c.h.b16 %v3351
    %v3927 = vunpack.c.l.b16 %v3352
    %v3928 = vunpack.c.h.b16 %v3352
    %v3929 = vunpack.c.l.b16 %v3353
    %v3930 = vunpack.c.h.b16 %v3353
    %v3931 = vunpack.c.l.b16 %v3354
    %v3932 = vunpack.c.h.b16 %v3354
    %v3933 = vunpack.c.l.b16 %v3355
    %v3934 = vunpack.c.h.b16 %v3355
    %v3935 = vunpack.c.l.b16 %v3356
    %v3936 = vunpack.c.h.b16 %v3356
    %v3937 = vunpack.c.l.b16 %v3357
    %v3938 = vunpack.c.h.b16 %v3357
    %v3939 = vunpack.c.l.b16 %v3358
    %v3940 = vunpack.c.h.b16 %v3358
    %v3941 = vunpack.c.l.b16 %v3359
    %v3942 = vunpack.c.h.b16 %v3359
    %v3943 = vunpack.c.l.b16 %v3360
    %v3944 = vunpack.c.h.b16 %v3360
    %v3945 = vunpack.c.l.b16 %v3361
    %v3946 = vunpack.c.h.b16 %v3361
    %v3947 = vunpack.c.l.b16 %v3362
    %v3948 = vunpack.c.h.b16 %v3362
    %v3949 = vunpack.c.l.b16 %v3363
    %v3950 = vunpack.c.h.b16 %v3363
    %v3951 = vunpack.c.l.b16 %v3364
    %v3952 = vunpack.c.h.b16 %v3364
    %v3953 = vunpack.c.l.b16 %v3365
    %v3954 = vunpack.c.h.b16 %v3365
    %v3955 = vunpack.c.l.b16 %v3366
    %v3956 = vunpack.c.h.b16 %v3366
    %v3957 = vunpack.c.l.b16 %v3367
    %v3958 = vunpack.c.h.b16 %v3367
    %v3959 = vunpack.c.l.b16 %v3368
    %v3960 = vunpack.c.h.b16 %v3368
    %v3961 = vunpack.c.l.b16 %v3369
    %v3962 = vunpack.c.h.b16 %v3369
    %v3963 = vunpack.c.l.b16 %v3370
    %v3964 = vunpack.c.h.b16 %v3370
    %v3965 = vunpack.c.l.b16 %v3371
    %v3966 = vunpack.c.h.b16 %v3371
    %v3967 = vunpack.c.l.b16 %v3372
    %v3968 = vunpack.c.h.b16 %v3372
    %v3969 = vunpack.c.l.b16 %v3373
    %v3970 = vunpack.c.h.b16 %v3373
    %v3971 = vunpack.c.l.b16 %v3374
    %v3972 = vunpack.c.h.b16 %v3374
    %v3973 = vunpack.c.l.b16 %v3375
    %v3974 = vunpack.c.h.b16 %v3375
    %v3975 = vunpack.c.l.b16 %v3376
    %v3976 = vunpack.c.h.b16 %v3376
    %v3977 = vunpack.c.l.b16 %v3377
    %v3978 = vunpack.c.h.b16 %v3377
    %v3979 = vunpack.c.l.b16 %v3378
    %v3980 = vunpack.c.h.b16 %v3378
    %v3981 = vunpack.c.l.b16 %v3379
    %v3982 = vunpack.c.h.b16 %v3379
    %v3983 = vunpack.c.l.b16 %v3380
    %v3984 = vunpack.c.h.b16 %v3380
    %v3985 = vunpack.c.l.b16 %v3381
    %v3986 = vunpack.c.h.b16 %v3381
    %v3987 = vunpack.c.l.b16 %v3382
    %v3988 = vunpack.c.h.b16 %v3382
    %v3989 = vunpack.c.l.b16 %v3383
    %v3990 = vunpack.c.h.b16 %v3383
    %v3991 = vunpack.c.l.b16 %v3384
    %v3992 = vunpack.c.h.b16 %v3384
    %v3993 = vunpack.c.l.b16 %v3385
    %v3994 = vunpack.c.h.b16 %v3385
    %v3995 = vunpack.c.l.b16 %v3386
    %v3996 = vunpack.c.h.b16 %v3386
    %v3997 = vunpack.c.l.b16 %v3387
    %v3998 = vunpack.c.h.b16 %v3387
    %v3999 = vunpack.c.l.b16 %v3388
    %v4000 = vunpack.c.h.b16 %v3388
    %v4001 = vunpack.c.l.b16 %v3389
    %v4002 = vunpack.c.h.b16 %v3389
    %v4003 = vunpack.c.l.b16 %v3390
    %v4004 = vunpack.c.h.b16 %v3390
    %v4005 = vunpack.c.l.b16 %v3391
    %v4006 = vunpack.c.h.b16 %v3391
    %v4007 = vunpack.c.l.b16 %v3392
    %v4008 = vunpack.c.h.b16 %v3392
    %v4009 = vunpack.c.l.b16 %v3393
    %v4010 = vunpack.c.h.b16 %v3393
    %v4011 = vunpack.c.l.b16 %v3394
    %v4012 = vunpack.c.h.b16 %v3394
    %v4013 = vunpack.c.l.b16 %v3395
    %v4014 = vunpack.c.h.b16 %v3395
    %v4015 = vunpack.c.l.b16 %v3396
    %v4016 = vunpack.c.h.b16 %v3396
    %v4017 = vunpack.c.l.b16 %v3397
    %v4018 = vunpack.c.h.b16 %v3397
    %v4019 = vunpack.c.l.b16 %v3398
    %v4020 = vunpack.c.h.b16 %v3398
    %v4021 = vunpack.c.l.b16 %v3399
    %v4022 = vunpack.c.h.b16 %v3399
    %v4023 = vunpack.c.l.b16 %v3400
    %v4024 = vunpack.c.h.b16 %v3400
    %v4025 = vunpack.c.l.b16 %v3401
    %v4026 = vunpack.c.h.b16 %v3401
    %v4027 = vunpack.c.l.b16 %v3402
    %v4028 = vunpack.c.h.b16 %v3402
    %v4029 = vunpack.c.l.b16 %v3403
    %v4030 = vunpack.c.h.b16 %v3403
    %v4031 = vunpack.c.l.b16 %v3404
    %v4032 = vunpack.c.h.b16 %v3404
    %v4033 = vunpack.c.l.b16 %v3405
    %v4034 = vunpack.c.h.b16 %v3405
    %v4035 = vunpack.c.l.b16 %v3406
    %v4036 = vunpack.c.h.b16 %v3406
    %v4037 = vunpack.c.l.b16 %v3407
    %v4038 = vunpack.c.h.b16 %v3407
    %v4039 = vunpack.c.l.b16 %v3408
    %v4040 = vunpack.c.h.b16 %v3408
    %v4041 = vunpack.c.l.b16 %v3409
    %v4042 = vunpack.c.h.b16 %v3409
    %v4043 = vunpack.c.l.b16 %v3410
    %v4044 = vunpack.c.h.b16 %v3410
    %v4045 = vunpack.c.l.b16 %v3411
    %v4046 = vunpack.c.h.b16 %v3411
    %v4047 = vunpack.c.l.b16 %v3412
    %v4048 = vunpack.c.h.b16 %v3412
    %v4049 = vunpack.c.l.b16 %v3413
    %v4050 = vunpack.c.h.b16 %v3413
    %v4051 = vunpack.c.l.b16 %v3414
    %v4052 = vunpack.c.h.b16 %v3414
    %v4053 = vunpack.c.l.b16 %v3415
    %v4054 = vunpack.c.h.b16 %v3415
    %v4055 = vunpack.c.l.b16 %v3416
    %v4056 = vunpack.c.h.b16 %v3416
    %v4057 = vunpack.c.l.b16 %v3417
    %v4058 = vunpack.c.h.b16 %v3417
    %v4059 = vunpack.c.l.b16 %v3418
    %v4060 = vunpack.c.h.b16 %v3418
    %v4061 = vunpack.c.l.b16 %v3419
    %v4062 = vunpack.c.h.b16 %v3419
    %v4063 = vunpack.c.l.b16 %v3420
    %v4064 = vunpack.c.h.b16 %v3420
    %v4065 = vunpack.c.l.b16 %v3421
    %v4066 = vunpack.c.h.b16 %v3421
    %v4067 = vunpack.c.l.b16 %v3422
    %v4068 = vunpack.c.h.b16 %v3422
    %v4069 = vunpack.c.l.b16 %v3423
    %v4070 = vunpack.c.h.b16 %v3423
    %v4071 = vunpack.c.l.b16 %v3424
    %v4072 = vunpack.c.h.b16 %v3424
    %v4073 = vunpack.c.l.b16 %v3425
    %v4074 = vunpack.c.h.b16 %v3425
    %v4075 = vunpack.c.l.b16 %v3426
    %v4076 = vunpack.c.h.b16 %v3426
    %v4077 = vunpack.c.l.b16 %v3427
    %v4078 = vunpack.c.h.b16 %v3427
    %v4079 = vunpack.c.l.b16 %v3428
    %v4080 = vunpack.c.h.b16 %v3428
    %v4081 = vunpack.c.l.b16 %v3429
    %v4082 = vunpack.c.h.b16 %v3429
    %v4083 = vunpack.c.l.b16 %v3430
    %v4084 = vunpack.c.h.b16 %v3430
    %v4085 = vunpack.c.l.b16 %v3431
    %v4086 = vunpack.c.h.b16 %v3431
    %v4087 = vunpack.c.l.b16 %v3432
    %v4088 = vunpack.c.h.b16 %v3432
    %v4089 = vunpack.c.l.b16 %v3433
    %v4090 = vunpack.c.h.b16 %v3433
    %v4091 = vunpack.c.l.b16 %v3434
    %v4092 = vunpack.c.h.b16 %v3434
    %v4093 = vunpack.c.l.b16 %v3435
    %v4094 = vunpack.c.h.b16 %v3435
    %v4095 = vunpack.c.l.b16 %v3436
    %v4096 = vunpack.c.h.b16 %v3436
    %v4097 = vunpack.c.l.b16 %v3437
    %v4098 = vunpack.c.h.b16 %v3437
    %v4099 = vunpack.c.l.b16 %v3438
    %v4100 = vunpack.c.h.b16 %v3438
    %v4101 = vunpack.c.l.b16 %v3439
    %v4102 = vunpack.c.h.b16 %v3439
    %v4103 = vunpack.c.l.b16 %v3440
    %v4104 = vunpack.c.h.b16 %v3440
    %v4105 = vunpack.c.l.b16 %v3441
    %v4106 = vunpack.c.h.b16 %v3441
    %v4107 = vunpack.c.l.b16 %v3442
    %v4108 = vunpack.c.h.b16 %v3442
    %v4109 = vunpack.c.l.b16 %v3443
    %v4110 = vunpack.c.h.b16 %v3443
    %v4111 = vunpack.c.l.b16 %v3444
    %v4112 = vunpack.c.h.b16 %v3444
    %v4113 = vunpack.c.l.b16 %v3445
    %v4114 = vunpack.c.h.b16 %v3445
    %v4115 = vunpack.c.l.b16 %v3446
    %v4116 = vunpack.c.h.b16 %v3446
    %v4117 = vunpack.c.l.b16 %v3447
    %v4118 = vunpack.c.h.b16 %v3447
    %v4119 = vunpack.c.l.b16 %v3448
    %v4120 = vunpack.c.h.b16 %v3448
    %v4121 = vunpack.c.l.b16 %v3449
    %v4122 = vunpack.c.h.b16 %v3449
    %v4123 = vunpack.c.l.b16 %v3450
    %v4124 = vunpack.c.h.b16 %v3450
    %v4125 = vunpack.c.l.b16 %v3451
    %v4126 = vunpack.c.h.b16 %v3451
    %v4127 = vunpack.c.l.b16 %v3452
    %v4128 = vunpack.c.h.b16 %v3452
    %v4129 = vunpack.c.l.b16 %v3453
    %v4130 = vunpack.c.h.b16 %v3453
    %v4131 = vunpack.c.l.b16 %v3454
    %v4132 = vunpack.c.h.b16 %v3454
    %v4133 = vunpack.c.l.b16 %v3455
    %v4134 = vunpack.c.h.b16 %v3455
    %v4135 = vunpack.c.l.b16 %v3456
    %v4136 = vunpack.c.h.b16 %v3456
    %v4137 = vunpack.c.l.b16 %v3457
    %v4138 = vunpack.c.h.b16 %v3457
    %v4139 = vunpack.c.l.b16 %v3458
    %v4140 = vunpack.c.h.b16 %v3458
    %v4141 = vunpack.c.l.b16 %v3459
    %v4142 = vunpack.c.h.b16 %v3459
    %v4143 = vunpack.c.l.b16 %v3460
    %v4144 = vunpack.c.h.b16 %v3460
    %v4145 = vunpack.c.l.b16 %v3461
    %v4146 = vunpack.c.h.b16 %v3461
    %v4147 = vunpack.c.l.b16 %v3462
    %v4148 = vunpack.c.h.b16 %v3462
    %v4149 = vunpack.c.l.b16 %v3463
    %v4150 = vunpack.c.h.b16 %v3463
    %v4151 = vunpack.c.l.b16 %v3464
    %v4152 = vunpack.c.h.b16 %v3464
    %v4153 = vunpack.c.l.b16 %v3465
    %v4154 = vunpack.c.h.b16 %v3465
    %v4155 = vunpack.c.l.b16 %v3466
    %v4156 = vunpack.c.h.b16 %v3466
    %v4157 = vunpack.c.l.b16 %v3467
    %v4158 = vunpack.c.h.b16 %v3467
    %v4159 = vunpack.c.l.b16 %v3468
    %v4160 = vunpack.c.h.b16 %v3468
    %v4161 = vunpack.c.l.b16 %v3469
    %v4162 = vunpack.c.h.b16 %v3469
    %v4163 = vunpack.c.l.b16 %v3470
    %v4164 = vunpack.c.h.b16 %v3470
    %v4165 = vunpack.c.l.b16 %v3471
    %v4166 = vunpack.c.h.b16 %v3471
    %v4167 = vunpack.c.l.b16 %v3472
    %v4168 = vunpack.c.h.b16 %v3472
    %v4169 = vunpack.c.l.b16 %v3473
    %v4170 = vunpack.c.h.b16 %v3473
    %v4171 = vunpack.c.l.b16 %v3474
    %v4172 = vunpack.c.h.b16 %v3474
    %v4173 = vunpack.c.l.b16 %v3475
    %v4174 = vunpack.c.h.b16 %v3475
    %v4175 = vunpack.c.l.b16 %v3476
    %v4176 = vunpack.c.h.b16 %v3476
    %v4177 = vunpack.c.l.b16 %v3477
    %v4178 = vunpack.c.h.b16 %v3477
    %v4179 = vunpack.c.l.b16 %v3478
    %v4180 = vunpack.c.h.b16 %v3478
    %v4181 = vunpack.c.l.b16 %v3479
    %v4182 = vunpack.c.h.b16 %v3479
    %v4183 = vunpack.c.l.b16 %v3480
    %v4184 = vunpack.c.h.b16 %v3480
    %v4185 = vunpack.c.l.b16 %v3481
    %v4186 = vunpack.c.h.b16 %v3481
    %v4187 = vunpack.c.l.b16 %v3482
    %v4188 = vunpack.c.h.b16 %v3482
    %v4189 = vunpack.c.l.b16 %v3483
    %v4190 = vunpack.c.h.b16 %v3483
    %v4191 = vunpack.c.l.b16 %v3484
    %v4192 = vunpack.c.h.b16 %v3484
    %v4193 = vunpack.c.l.b16 %v3485
    %v4194 = vunpack.c.h.b16 %v3485
    %v4195 = vunpack.c.l.b16 %v3486
    %v4196 = vunpack.c.h.b16 %v3486
    %v4197 = vunpack.c.l.b16 %v3487
    %v4198 = vunpack.c.h.b16 %v3487
    %v4199 = vunpack.c.l.b16 %v3488
    %v4200 = vunpack.c.h.b16 %v3488
    %v4201 = vunpack.c.l.b16 %v3489
    %v4202 = vunpack.c.h.b16 %v3489
    %v4203 = vunpack.c.l.b16 %v3490
    %v4204 = vunpack.c.h.b16 %v3490
    %v4205 = vunpack.c.l.b16 %v3491
    %v4206 = vunpack.c.h.b16 %v3491
    %v4207 = vunpack.c.l.b16 %v3492
    %v4208 = vunpack.c.h.b16 %v3492
    %v4209 = vunpack.c.l.b16 %v3493
    %v4210 = vunpack.c.h.b16 %v3493
    %v4211 = vunpack.c.l.b16 %v3494
    %v4212 = vunpack.c.h.b16 %v3494
    %v4213 = vunpack.c.l.b16 %v3495
    %v4214 = vunpack.c.h.b16 %v3495
    %v4215 = vunpack.c.l.b16 %v3496
    %v4216 = vunpack.c.h.b16 %v3496
    %v4217 = vunpack.c.l.b16 %v3497
    %v4218 = vunpack.c.h.b16 %v3497
    %v4219 = vunpack.c.l.b16 %v3498
    %v4220 = vunpack.c.h.b16 %v3498
    %v4221 = vunpack.c.l.b16 %v3499
    %v4222 = vunpack.c.h.b16 %v3499
    %v4223 = vunpack.c.l.b16 %v3500
    %v4224 = vunpack.c.h.b16 %v3500
    %v4225 = vunpack.c.l.b16 %v3501
    %v4226 = vunpack.c.h.b16 %v3501
    %v4227 = vunpack.c.l.b16 %v3502
    %v4228 = vunpack.c.h.b16 %v3502
    %v4229 = vunpack.c.l.b16 %v3503
    %v4230 = vunpack.c.h.b16 %v3503
    %v4231 = vunpack.c.l.b16 %v3504
    %v4232 = vunpack.c.h.b16 %v3504
    %v4233 = vunpack.c.l.b16 %v3505
    %v4234 = vunpack.c.h.b16 %v3505
    %v4235 = vunpack.c.l.b16 %v3506
    %v4236 = vunpack.c.h.b16 %v3506
    %v4237 = vunpack.c.l.b16 %v3507
    %v4238 = vunpack.c.h.b16 %v3507
    %v4239 = vunpack.c.l.b16 %v3508
    %v4240 = vunpack.c.h.b16 %v3508
    %v4241 = vunpack.c.l.b16 %v3509
    %v4242 = vunpack.c.h.b16 %v3509
    %v4243 = vunpack.c.l.b16 %v3510
    %v4244 = vunpack.c.h.b16 %v3510
    %v4245 = vunpack.c.l.b16 %v3511
    %v4246 = vunpack.c.h.b16 %v3511
    %v4247 = vunpack.c.l.b16 %v3512
    %v4248 = vunpack.c.h.b16 %v3512
    %v4249 = vunpack.c.l.b16 %v3513
    %v4250 = vunpack.c.h.b16 %v3513
    %v4251 = vunpack.c.l.b16 %v3514
    %v4252 = vunpack.c.h.b16 %v3514
    %v4253 = vunpack.c.l.b16 %v3515
    %v4254 = vunpack.c.h.b16 %v3515
    %v4255 = vunpack.c.l.b16 %v3516
    %v4256 = vunpack.c.h.b16 %v3516
    %v4257 = vunpack.c.l.b16 %v3517
    %v4258 = vunpack.c.h.b16 %v3517
    %v4259 = vunpack.c.l.b16 %v3518
    %v4260 = vunpack.c.h.b16 %v3518
    %v4261 = vunpack.c.l.b16 %v3519
    %v4262 = vunpack.c.h.b16 %v3519
    %v4263 = vunpack.c.l.b16 %v3520
    %v4264 = vunpack.c.h.b16 %v3520
    %v4265 = vunpack.c.l.b16 %v3521
    %v4266 = vunpack.c.h.b16 %v3521
    %v4267 = vunpack.c.l.b16 %v3522
    %v4268 = vunpack.c.h.b16 %v3522
    %v4269 = vunpack.c.l.b16 %v3523
    %v4270 = vunpack.c.h.b16 %v3523
    %v4271 = vunpack.c.l.b16 %v3524
    %v4272 = vunpack.c.h.b16 %v3524
    %v4273 = vunpack.c.l.b16 %v3525
    %v4274 = vunpack.c.h.b16 %v3525
    %v4275 = vunpack.c.l.b16 %v3526
    %v4276 = vunpack.c.h.b16 %v3526
    %v4277 = vunpack.c.l.b16 %v3527
    %v4278 = vunpack.c.h.b16 %v3527
    %v4279 = vunpack.c.l.b16 %v3528
    %v4280 = vunpack.c.h.b16 %v3528
    %v4281 = vunpack.c.l.b16 %v3529
    %v4282 = vunpack.c.h.b16 %v3529
    %v4283 = vunpack.c.l.b16 %v3530
    %v4284 = vunpack.c.h.b16 %v3530
    %v4285 = vunpack.c.l.b16 %v3531
    %v4286 = vunpack.c.h.b16 %v3531
    %v4287 = vunpack.c.l.b16 %v3532
    %v4288 = vunpack.c.h.b16 %v3532
    %v4289 = vunpack.c.l.b16 %v3533
    %v4290 = vunpack.c.h.b16 %v3533
    %v4291 = vunpack.c.l.b16 %v3534
    %v4292 = vunpack.c.h.b16 %v3534
    %v4293 = vunpack.c.l.b16 %v3535
    %v4294 = vunpack.c.h.b16 %v3535
    %v4295 = vunpack.c.l.b16 %v3536
    %v4296 = vunpack.c.h.b16 %v3536
    %v4297 = vunpack.c.l.b16 %v3537
    %v4298 = vunpack.c.h.b16 %v3537
    %v4299 = vunpack.c.l.b16 %v3538
    %v4300 = vunpack.c.h.b16 %v3538
    %v4301 = vunpack.c.l.b16 %v3539
    %v4302 = vunpack.c.h.b16 %v3539
    %v4303 = vunpack.c.l.b16 %v3540
    %v4304 = vunpack.c.h.b16 %v3540
    %v4305 = vunpack.c.l.b16 %v3541
    %v4306 = vunpack.c.h.b16 %v3541
    %v4307 = vunpack.c.l.b16 %v3542
    %v4308 = vunpack.c.h.b16 %v3542
    %v4309 = vunpack.c.l.b16 %v3543
    %v4310 = vunpack.c.h.b16 %v3543
    %v4311 = vunpack.c.l.b16 %v3544
    %v4312 = vunpack.c.h.b16 %v3544
    %v4313 = vunpack.c.l.b16 %v3545
    %v4314 = vunpack.c.h.b16 %v3545
    %v4315 = vunpack.c.l.b16 %v3546
    %v4316 = vunpack.c.h.b16 %v3546
    %v4317 = vunpack.c.l.b16 %v3547
    %v4318 = vunpack.c.h.b16 %v3547
    %v4319 = vunpack.c.l.b16 %v3548
    %v4320 = vunpack.c.h.b16 %v3548
    %v4321 = vunpack.c.l.b16 %v3549
    %v4322 = vunpack.c.h.b16 %v3549
    %v4323 = vunpack.c.l.b16 %v3550
    %v4324 = vunpack.c.h.b16 %v3550
    %v4325 = vunpack.c.l.b16 %v3551
    %v4326 = vunpack.c.h.b16 %v3551
    %v4327 = vunpack.c.l.b16 %v3552
    %v4328 = vunpack.c.h.b16 %v3552
    %v4329 = vunpack.c.l.b16 %v3553
    %v4330 = vunpack.c.h.b16 %v3553
    %v4331 = vunpack.c.l.b16 %v3554
    %v4332 = vunpack.c.h.b16 %v3554
    %v4333 = vunpack.c.l.b16 %v3555
    %v4334 = vunpack.c.h.b16 %v3555
    %v4335 = vunpack.c.l.b16 %v3556
    %v4336 = vunpack.c.h.b16 %v3556
    %v4337 = vunpack.c.l.b16 %v3557
    %v4338 = vunpack.c.h.b16 %v3557
    %v4339 = vunpack.c.l.b16 %v3558
    %v4340 = vunpack.c.h.b16 %v3558
    %v4341 = vunpack.c.l.b16 %v3559
    %v4342 = vunpack.c.h.b16 %v3559
    %v4343 = vunpack.c.l.b16 %v3560
    %v4344 = vunpack.c.h.b16 %v3560
    %v4345 = vunpack.c.l.b16 %v3561
    %v4346 = vunpack.c.h.b16 %v3561
    %v4347 = vunpack.c.l.b16 %v3562
    %v4348 = vunpack.c.h.b16 %v3562
    %v4349 = vunpack.c.l.b16 %v3563
    %v4350 = vunpack.c.h.b16 %v3563
    %v4351 = vunpack.c.l.b16 %v3564
    %v4352 = vunpack.c.h.b16 %v3564
    %v4353 = vunpack.c.l.b16 %v3565
    %v4354 = vunpack.c.h.b16 %v3565
    %v4355 = vunpack.c.l.b16 %v3566
    %v4356 = vunpack.c.h.b16 %v3566
    %v4357 = vpack.c.b16 %v3849, %v3845
    %v4358 = vpack.c.b16 %v3850, %v3846
    %v4359 = vpack.c.b16 %v3851, %v3847
    %v4360 = vpack.c.b16 %v3852, %v3848
    %v4361 = vpack.c.b16 %v3857, %v3853
    %v4362 = vpack.c.b16 %v3858, %v3854
    %v4363 = vpack.c.b16 %v3859, %v3855
    %v4364 = vpack.c.b16 %v3860, %v3856
    %v4365 = vpack.c.b16 %v3865, %v3861
    %v4366 = vpack.c.b16 %v3866, %v3862
    %v4367 = vpack.c.b16 %v3867, %v3863
    %v4368 = vpack.c.b16 %v3868, %v3864
    %v4369 = vpack.c.b16 %v3873, %v3869
    %v4370 = vpack.c.b16 %v3874, %v3870
    %v4371 = vpack.c.b16 %v3875, %v3871
    %v4372 = vpack.c.b16 %v3876, %v3872
    %v4373 = vpack.c.b16 %v3881, %v3877
    %v4374 = vpack.c.b16 %v3882, %v3878
    %v4375 = vpack.c.b16 %v3883, %v3879
    %v4376 = vpack.c.b16 %v3884, %v3880
    %v4377 = vpack.c.b16 %v3889, %v3885
    %v4378 = vpack.c.b16 %v3890, %v3886
    %v4379 = vpack.c.b16 %v3891, %v3887
    %v4380 = vpack.c.b16 %v3892, %v3888
    %v4381 = vpack.c.b16 %v3897, %v3893
    %v4382 = vpack.c.b16 %v3898, %v3894
    %v4383 = vpack.c.b16 %v3899, %v3895
    %v4384 = vpack.c.b16 %v3900, %v3896
    %v4385 = vpack.c.b16 %v3905, %v3901
    %v4386 = vpack.c.b16 %v3906, %v3902
    %v4387 = vpack.c.b16 %v3907, %v3903
    %v4388 = vpack.c.b16 %v3908, %v3904
    %v4389 = vpack.c.b16 %v3913, %v3909
    %v4390 = vpack.c.b16 %v3914, %v3910
    %v4391 = vpack.c.b16 %v3915, %v3911
    %v4392 = vpack.c.b16 %v3916, %v3912
    %v4393 = vpack.c.b16 %v3921, %v3917
    %v4394 = vpack.c.b16 %v3922, %v3918
    %v4395 = vpack.c.b16 %v3923, %v3919
    %v4396 = vpack.c.b16 %v3924, %v3920
    %v4397 = vpack.c.b16 %v3929, %v3925
    %v4398 = vpack.c.b16 %v3930, %v3926
    %v4399 = vpack.c.b16 %v3931, %v3927
    %v4400 = vpack.c.b16 %v3932, %v3928
    %v4401 = vpack.c.b16 %v3937, %v3933
    %v4402 = vpack.c.b16 %v3938, %v3934
    %v4403 = vpack.c.b16 %v3939, %v3935
    %v4404 = vpack.c.b16 %v3940, %v3936
    %v4405 = vpack.c.b16 %v3945, %v3941
    %v4406 = vpack.c.b16 %v3946, %v3942
    %v4407 = vpack.c.b16 %v3947, %v3943
    %v4408 = vpack.c.b16 %v3948, %v3944
    %v4409 = vpack.c.b16 %v3953, %v3949
    %v4410 = vpack.c.b16 %v3954, %v3950
    %v4411 = vpack.c.b16 %v3955, %v3951
    %v4412 = vpack.c.b16 %v3956, %v3952
    %v4413 = vpack.c.b16 %v3961, %v3957
    %v4414 = vpack.c.b16 %v3962, %v3958
    %v4415 = vpack.c.b16 %v3963, %v3959
    %v4416 = vpack.c.b16 %v3964, %v3960
    %v4417 = vpack.c.b16 %v3969, %v3965
    %v4418 = vpack.c.b16 %v3970, %v3966
    %v4419 = vpack.c.b16 %v3971, %v3967
    %v4420 = vpack.c.b16 %v3972, %v3968
    %v4421 = vpack.c.b16 %v3977, %v3973
    %v4422 = vpack.c.b16 %v3978, %v3974
    %v4423 = vpack.c.b16 %v3979, %v3975
    %v4424 = vpack.c.b16 %v3980, %v3976
    %v4425 = vpack.c.b16 %v3985, %v3981
    %v4426 = vpack.c.b16 %v3986, %v3982
    %v4427 = vpack.c.b16 %v3987, %v3983
    %v4428 = vpack.c.b16 %v3988, %v3984
    %v4429 = vpack.c.b16 %v3993, %v3989
    %v4430 = vpack.c.b16 %v3994, %v3990
    %v4431 = vpack.c.b16 %v3995, %v3991
    %v4432 = vpack.c.b16 %v3996, %v3992
    %v4433 = vpack.c.b16 %v4001, %v3997
    %v4434 = vpack.c.b16 %v4002, %v3998
    %v4435 = vpack.c.b16 %v4003, %v3999
    %v4436 = vpack.c.b16 %v4004, %v4000
    %v4437 = vpack.c.b16 %v4009, %v4005
    %v4438 = vpack.c.b16 %v4010, %v4006
    %v4439 = vpack.c.b16 %v4011, %v4007
    %v4440 = vpack.c.b16 %v4012, %v4008
    %v4441 = vpack.c.b16 %v4017, %v4013
    %v4442 = vpack.c.b16 %v4018, %v4014
    %v4443 = vpack.c.b16 %v4019, %v4015
    %v4444 = vpack.c.b16 %v4020, %v4016
    %v4445 = vpack.c.b16 %v4025, %v4021
    %v4446 = vpack.c.b16 %v4026, %v4022
    %v4447 = vpack.c.b16 %v4027, %v4023
    %v4448 = vpack.c.b16 %v4028, %v4024
    %v4449 = vpack.c.b16 %v4033, %v4029
    %v4450 = vpack.c.b16 %v4034, %v4030
    %v4451 = vpack.c.b16 %v4035, %v4031
    %v4452 = vpack.c.b16 %v4036, %v4032
    %v4453 = vpack.c.b16 %v4041, %v4037
    %v4454 = vpack.c.b16 %v4042, %v4038
    %v4455 = vpack.c.b16 %v4043, %v4039
    %v4456 = vpack.c.b16 %v4044, %v4040
    %v4457 = vpack.c.b16 %v4049, %v4045
    %v4458 = vpack.c.b16 %v4050, %v4046
    %v4459 = vpack.c.b16 %v4051, %v4047
    %v4460 = vpack.c.b16 %v4052, %v4048
    %v4461 = vpack.c.b16 %v4057, %v4053
    %v4462 = vpack.c.b16 %v4058, %v4054
    %v4463 = vpack.c.b16 %v4059, %v4055
    %v4464 = vpack.c.b16 %v4060, %v4056
    %v4465 = vpack.c.b16 %v4065, %v4061
    %v4466 = vpack.c.b16 %v4066, %v4062
    %v4467 = vpack.c.b16 %v4067, %v4063
    %v4468 = vpack.c.b16 %v4068, %v4064
    %v4469 = vpack.c.b16 %v4073, %v4069
    %v4470 = vpack.c.b16 %v4074, %v4070
    %v4471 = vpack.c.b16 %v4075, %v4071
    %v4472 = vpack.c.b16 %v4076, %v4072
    %v4473 = vpack.c.b16 %v4081, %v4077
    %v4474 = vpack.c.b16 %v4082, %v4078
    %v4475 = vpack.c.b16 %v4083, %v4079
    %v4476 = vpack.c.b16 %v4084, %v4080
    %v4477 = vpack.c.b16 %v4089, %v4085
    %v4478 = vpack.c.b16 %v4090, %v4086
    %v4479 = vpack.c.b16 %v4091, %v4087
    %v4480 = vpack.c.b16 %v4092, %v4088
    %v4481 = vpack.c.b16 %v4097, %v4093
    %v4482 = vpack.c.b16 %v4098, %v4094
    %v4483 = vpack.c.b16 %v4099, %v4095
    %v4484 = vpack.c.b16 %v4100, %v4096
    %v4485 = vpack.c.b16 %v4105, %v4101
    %v4486 = vpack.c.b16 %v4106, %v4102
    %v4487 = vpack.c.b16 %v4107, %v4103
    %v4488 = vpack.c.b16 %v4108, %v4104
    %v4489 = vpack.c.b16 %v4113, %v4109
    %v4490 = vpack.c.b16 %v4114, %v4110
    %v4491 = vpack.c.b16 %v4115, %v4111
    %v4492 = vpack.c.b16 %v4116, %v4112
    %v4493 = vpack.c.b16 %v4121, %v4117
    %v4494 = vpack.c.b16 %v4122, %v4118
    %v4495 = vpack.c.b16 %v4123, %v4119
    %v4496 = vpack.c.b16 %v4124, %v4120
    %v4497 = vpack.c.b16 %v4129, %v4125
    %v4498 = vpack.c.b16 %v4130, %v4126
    %v4499 = vpack.c.b16 %v4131, %v4127
    %v4500 = vpack.c.b16 %v4132, %v4128
    %v4501 = vpack.c.b16 %v4137, %v4133
    %v4502 = vpack.c.b16 %v4138, %v4134
    %v4503 = vpack.c.b16 %v4139, %v4135
    %v4504 = vpack.c.b16 %v4140, %v4136
    %v4505 = vpack.c.b16 %v4145, %v4141
    %v4506 = vpack.c.b16 %v4146, %v4142
    %v4507 = vpack.c.b16 %v4147, %v4143
    %v4508 = vpack.c.b16 %v4148, %v4144
    %v4509 = vpack.c.b16 %v4153, %v4149
    %v4510 = vpack.c.b16 %v4154, %v4150
    %v4511 = vpack.c.b16 %v4155, %v4151
    %v4512 = vpack.c.b16 %v4156, %v4152
    %v4513 = vpack.c.b16 %v4161, %v4157
    %v4514 = vpack.c.b16 %v4162, %v4158
    %v4515 = vpack.c.b16 %v4163, %v4159
    %v4516 = vpack.c.b16 %v4164, %v4160
    %v4517 = vpack.c.b16 %v4169, %v4165
    %v4518 = vpack.c.b16 %v4170, %v4166
    %v4519 = vpack.c.b16 %v4171, %v4167
    %v4520 = vpack.c.b16 %v4172, %v4168
    %v4521 = vpack.c.b16 %v4177, %v4173
    %v4522 = vpack.c.b16 %v4178, %v4174
    %v4523 = vpack.c.b16 %v4179, %v4175
    %v4524 = vpack.c.b16 %v4180, %v4176
    %v4525 = vpack.c.b16 %v4185, %v4181
    %v4526 = vpack.c.b16 %v4186, %v4182
    %v4527 = vpack.c.b16 %v4187, %v4183
    %v4528 = vpack.c.b16 %v4188, %v4184
    %v4529 = vpack.c.b16 %v4193, %v4189
    %v4530 = vpack.c.b16 %v4194, %v4190
    %v4531 = vpack.c.b16 %v4195, %v4191
    %v4532 = vpack.c.b16 %v4196, %v4192
    %v4533 = vpack.c.b16 %v4201, %v4197
    %v4534 = vpack.c.b16 %v4202, %v4198
    %v4535 = vpack.c.b16 %v4203, %v4199
    %v4536 = vpack.c.b16 %v4204, %v4200
    %v4537 = vpack.c.b16 %v4209, %v4205
    %v4538 = vpack.c.b16 %v4210, %v4206
    %v4539 = vpack.c.b16 %v4211, %v4207
    %v4540 = vpack.c.b16 %v4212, %v4208
    %v4541 = vpack.c.b16 %v4217, %v4213
    %v4542 = vpack.c.b16 %v4218, %v4214
    %v4543 = vpack.c.b16 %v4219, %v4215
    %v4544 = vpack.c.b16 %v4220, %v4216
    %v4545 = vpack.c.b16 %v4225, %v4221
    %v4546 = vpack.c.b16 %v4226, %v4222
    %v4547 = vpack.c.b16 %v4227, %v4223
    %v4548 = vpack.c.b16 %v4228, %v4224
    %v4549 = vpack.c.b16 %v4233, %v4229
    %v4550 = vpack.c.b16 %v4234, %v4230
    %v4551 = vpack.c.b16 %v4235, %v4231
    %v4552 = vpack.c.b16 %v4236, %v4232
    %v4553 = vpack.c.b16 %v4241, %v4237
    %v4554 = vpack.c.b16 %v4242, %v4238
    %v4555 = vpack.c.b16 %v4243, %v4239
    %v4556 = vpack.c.b16 %v4244, %v4240
    %v4557 = vpack.c.b16 %v4249, %v4245
    %v4558 = vpack.c.b16 %v4250, %v4246
    %v4559 = vpack.c.b16 %v4251, %v4247
    %v4560 = vpack.c.b16 %v4252, %v4248
    %v4561 = vpack.c.b16 %v4257, %v4253
    %v4562 = vpack.c.b16 %v4258, %v4254
    %v4563 = vpack.c.b16 %v4259, %v4255
    %v4564 = vpack.c.b16 %v4260, %v4256
    %v4565 = vpack.c.b16 %v4265, %v4261
    %v4566 = vpack.c.b16 %v4266, %v4262
    %v4567 = vpack.c.b16 %v4267, %v4263
    %v4568 = vpack.c.b16 %v4268, %v4264
    %v4569 = vpack.c.b16 %v4273, %v4269
    %v4570 = vpack.c.b16 %v4274, %v4270
    %v4571 = vpack.c.b16 %v4275, %v4271
    %v4572 = vpack.c.b16 %v4276, %v4272
    %v4573 = vpack.c.b16 %v4281, %v4277
    %v4574 = vpack.c.b16 %v4282, %v4278
    %v4575 = vpack.c.b16 %v4283, %v4279
    %v4576 = vpack.c.b16 %v4284, %v4280
    %v4577 = vpack.c.b16 %v4289, %v4285
    %v4578 = vpack.c.b16 %v4290, %v4286
    %v4579 = vpack.c.b16 %v4291, %v4287
    %v4580 = vpack.c.b16 %v4292, %v4288
    %v4581 = vpack.c.b16 %v4297, %v4293
    %v4582 = vpack.c.b16 %v4298, %v4294
    %v4583 = vpack.c.b16 %v4299, %v4295
    %v4584 = vpack.c.b16 %v4300, %v4296
    %v4585 = vpack.c.b16 %v4305, %v4301
    %v4586 = vpack.c.b16 %v4306, %v4302
    %v4587 = vpack.c.b16 %v4307, %v4303
    %v4588 = vpack.c.b16 %v4308, %v4304
    %v4589 = vpack.c.b16 %v4313, %v4309
    %v4590 = vpack.c.b16 %v4314, %v4310
    %v4591 = vpack.c.b16 %v4315, %v4311
    %v4592 = vpack.c.b16 %v4316, %v4312
    %v4593 = vpack.c.b16 %v4321, %v4317
    %v4594 = vpack.c.b16 %v4322, %v4318
    %v4595 = vpack.c.b16 %v4323, %v4319
    %v4596 = vpack.c.b16 %v4324, %v4320
    %v4597 = vpack.c.b16 %v4329, %v4325
    %v4598 = vpack.c.b16 %v4330, %v4326
    %v4599 = vpack.c.b16 %v4331, %v4327
    %v4600 = vpack.c.b16 %v4332, %v4328
    %v4601 = vpack.c.b16 %v4337, %v4333
    %v4602 = vpack.c.b16 %v4338, %v4334
    %v4603 = vpack.c.b16 %v4339, %v4335
    %v4604 = vpack.c.b16 %v4340, %v4336
    %v4605 = vpack.c.b16 %v4345, %v4341
    %v4606 = vpack.c.b16 %v4346, %v4342
    %v4607 = vpack.c.b16 %v4347, %v4343
    %v4608 = vpack.c.b16 %v4348, %v4344
    %v4609 = vpack.c.b16 %v4353, %v4349
    %v4610 = vpack.c.b16 %v4354, %v4350
    %v4611 = vpack.c.b16 %v4355, %v4351
    %v4612 = vpack.c.b16 %v4356, %v4352
    %4869 = vmatprep.subr.bf16.mxu0 %v4358
    %4870 = vmatpush1.bf16.msra.mxu0 %v4357
    %4871 = vmatprep.subr.bf16.mxu0 %v4362
    %4872 = vmatpush1.bf16.msra.mxu0 %v4361
    %4873 = vmatprep.subr.bf16.mxu0 %v4366
    %4874 = vmatpush1.bf16.msra.mxu0 %v4365
    %4875 = vmatprep.subr.bf16.mxu0 %v4370
    %4876 = vmatpush1.bf16.msra.mxu0 %v4369
    %4877 = vmatprep.subr.bf16.mxu0 %v4374
    %4878 = vmatpush1.bf16.msra.mxu0 %v4373
    %4879 = vmatprep.subr.bf16.mxu0 %v4378
    %4880 = vmatpush1.bf16.msra.mxu0 %v4377
    %4881 = vmatprep.subr.bf16.mxu0 %v4382
    %4882 = vmatpush1.bf16.msra.mxu0 %v4381
    %4883 = vmatprep.subr.bf16.mxu0 %v4386
    %4884 = vmatpush1.bf16.msra.mxu0 %v4385
    %4885 = vmatprep.subr.bf16.mxu0 %v4390
    %4886 = vmatpush1.bf16.msra.mxu0 %v4389
    %4887 = vmatprep.subr.bf16.mxu0 %v4394
    %4888 = vmatpush1.bf16.msra.mxu0 %v4393
    %4889 = vmatprep.subr.bf16.mxu0 %v4398
    %4890 = vmatpush1.bf16.msra.mxu0 %v4397
    %4891 = vmatprep.subr.bf16.mxu0 %v4402
    %4892 = vmatpush1.bf16.msra.mxu0 %v4401
    %4893 = vmatprep.subr.bf16.mxu0 %v4406
    %4894 = vmatpush1.bf16.msra.mxu0 %v4405
    %4895 = vmatprep.subr.bf16.mxu0 %v4410
    %4896 = vmatpush1.bf16.msra.mxu0 %v4409
    %4897 = vmatprep.subr.bf16.mxu0 %v4414
    %4898 = vmatpush1.bf16.msra.mxu0 %v4413
    %4899 = vmatprep.subr.bf16.mxu0 %v4418
    %4900 = vmatpush1.bf16.msra.mxu0 %v4417
    %4901 = vmatprep.mubr.bf16.mxu0 %v3304
    %4902 = vmatmul.mubr.bf16.gmra.mrb[0].mxu0 %v3303
    %v4903 = vpop.f32.mrb[0].mxu0
    %v4904 = vadd.f32 %v3572, %v4903
    %v4905 = vpop.f32.mrb[0].mxu0
    %v4906 = vadd.f32 %v3576, %v4905
    %v4907 = vpop.f32.mrb[0].mxu0
    %v4908 = vadd.f32 %v3572, %v4907
    %v4909 = vpop.f32.mrb[0].mxu0
    %v4910 = vadd.f32 %v3576, %v4909
    %4911 = vdwg.mxu0
    %4912 = vmatprep.subr.bf16.mxu0 %v4422
    %4913 = vmatpush1.bf16.msra.mxu0 %v4421
    %4914 = vmatprep.subr.bf16.mxu0 %v4426
    %4915 = vmatpush1.bf16.msra.mxu0 %v4425
    %4916 = vmatprep.subr.bf16.mxu0 %v4430
    %4917 = vmatpush1.bf16.msra.mxu0 %v4429
    %4918 = vmatprep.subr.bf16.mxu0 %v4434
    %4919 = vmatpush1.bf16.msra.mxu0 %v4433
    %4920 = vmatprep.subr.bf16.mxu0 %v4438
    %4921 = vmatpush1.bf16.msra.mxu0 %v4437
    %4922 = vmatprep.subr.bf16.mxu0 %v4442
    %4923 = vmatpush1.bf16.msra.mxu0 %v4441
    %4924 = vmatprep.subr.bf16.mxu0 %v4446
    %4925 = vmatpush1.bf16.msra.mxu0 %v4445
    %4926 = vmatprep.subr.bf16.mxu0 %v4450
    %4927 = vmatpush1.bf16.msra.mxu0 %v4449
    %4928 = vmatprep.subr.bf16.mxu0 %v4454
    %4929 = vmatpush1.bf16.msra.mxu0 %v4453
    %4930 = vmatprep.subr.bf16.mxu0 %v4458
    %4931 = vmatpush1.bf16.msra.mxu0 %v4457
    %4932 = vmatprep.subr.bf16.mxu0 %v4462
    %4933 = vmatpush1.bf16.msra.mxu0 %v4461
    %4934 = vmatprep.subr.bf16.mxu0 %v4466
    %4935 = vmatpush1.bf16.msra.mxu0 %v4465
    %4936 = vmatprep.subr.bf16.mxu0 %v4470
    %4937 = vmatpush1.bf16.msra.mxu0 %v4469
    %4938 = vmatprep.subr.bf16.mxu0 %v4474
    %4939 = vmatpush1.bf16.msra.mxu0 %v4473
    %4940 = vmatprep.subr.bf16.mxu0 %v4478
    %4941 = vmatpush1.bf16.msra.mxu0 %v4477
    %4942 = vmatprep.subr.bf16.mxu0 %v4482
    %4943 = vmatpush1.bf16.msra.mxu0 %v4481
    %4944 = vmatprep.mubr.bf16.mxu0 %v3306
    %4945 = vmatmul.mubr.bf16.gmra.mrb[0].mxu0 %v3305
    %v4946 = vpop.f32.mrb[0].mxu0
    %v4947 = vadd.f32 %v4904, %v4946
    %v4948 = vpop.f32.mrb[0].mxu0
    %v4949 = vadd.f32 %v4906, %v4948
    %v4950 = vpop.f32.mrb[0].mxu0
    %v4951 = vadd.f32 %v4908, %v4950
    %v4952 = vpop.f32.mrb[0].mxu0
    %v4953 = vadd.f32 %v4910, %v4952
    %4954 = vdwg.mxu0
    %4955 = vmatprep.subr.bf16.mxu0 %v4486
    %4956 = vmatpush1.bf16.msra.mxu0 %v4485
    %4957 = vmatprep.subr.bf16.mxu0 %v4490
    %4958 = vmatpush1.bf16.msra.mxu0 %v4489
    %4959 = vmatprep.subr.bf16.mxu0 %v4494
    %4960 = vmatpush1.bf16.msra.mxu0 %v4493
    %4961 = vmatprep.subr.bf16.mxu0 %v4498
    %4962 = vmatpush1.bf16.msra.mxu0 %v4497
    %4963 = vmatprep.subr.bf16.mxu0 %v4502
    %4964 = vmatpush1.bf16.msra.mxu0 %v4501
    %4965 = vmatprep.subr.bf16.mxu0 %v4506
    %4966 = vmatpush1.bf16.msra.mxu0 %v4505
    %4967 = vmatprep.subr.bf16.mxu0 %v4510
    %4968 = vmatpush1.bf16.msra.mxu0 %v4509
    %4969 = vmatprep.subr.bf16.mxu0 %v4514
    %4970 = vmatpush1.bf16.msra.mxu0 %v4513
    %4971 = vmatprep.subr.bf16.mxu0 %v4518
    %4972 = vmatpush1.bf16.msra.mxu0 %v4517
    %4973 = vmatprep.subr.bf16.mxu0 %v4522
    %4974 = vmatpush1.bf16.msra.mxu0 %v4521
    %4975 = vmatprep.subr.bf16.mxu0 %v4526
    %4976 = vmatpush1.bf16.msra.mxu0 %v4525
    %4977 = vmatprep.subr.bf16.mxu0 %v4530
    %4978 = vmatpush1.bf16.msra.mxu0 %v4529
    %4979 = vmatprep.subr.bf16.mxu0 %v4534
    %4980 = vmatpush1.bf16.msra.mxu0 %v4533
    %4981 = vmatprep.subr.bf16.mxu0 %v4538
    %4982 = vmatpush1.bf16.msra.mxu0 %v4537
    %4983 = vmatprep.subr.bf16.mxu0 %v4542
    %4984 = vmatpush1.bf16.msra.mxu0 %v4541
    %4985 = vmatprep.subr.bf16.mxu0 %v4546
    %4986 = vmatpush1.bf16.msra.mxu0 %v4545
    %4987 = vmatprep.mubr.bf16.mxu0 %v3308
    %4988 = vmatmul.mubr.bf16.gmra.mrb[0].mxu0 %v3307
    %v4989 = vpop.f32.mrb[0].mxu0
    %v4990 = vadd.f32 %v4947, %v4989
    %v4991 = vpop.f32.mrb[0].mxu0
    %v4992 = vadd.f32 %v4949, %v4991
    %v4993 = vpop.f32.mrb[0].mxu0
    %v4994 = vadd.f32 %v4951, %v4993
    %v4995 = vpop.f32.mrb[0].mxu0
    %v4996 = vadd.f32 %v4953, %v4995
    %4997 = vdwg.mxu0
    %4998 = vmatprep.subr.bf16.mxu0 %v4550
    %4999 = vmatpush1.bf16.msra.mxu0 %v4549
    %5000 = vmatprep.subr.bf16.mxu0 %v4554
    %5001 = vmatpush1.bf16.msra.mxu0 %v4553
    %5002 = vmatprep.subr.bf16.mxu0 %v4558
    %5003 = vmatpush1.bf16.msra.mxu0 %v4557
    %5004 = vmatprep.subr.bf16.mxu0 %v4562
    %5005 = vmatpush1.bf16.msra.mxu0 %v4561
    %5006 = vmatprep.subr.bf16.mxu0 %v4566
    %5007 = vmatpush1.bf16.msra.mxu0 %v4565
    %5008 = vmatprep.subr.bf16.mxu0 %v4570
    %5009 = vmatpush1.bf16.msra.mxu0 %v4569
    %5010 = vmatprep.subr.bf16.mxu0 %v4574
    %5011 = vmatpush1.bf16.msra.mxu0 %v4573
    %5012 = vmatprep.subr.bf16.mxu0 %v4578
    %5013 = vmatpush1.bf16.msra.mxu0 %v4577
    %5014 = vmatprep.subr.bf16.mxu0 %v4582
    %5015 = vmatpush1.bf16.msra.mxu0 %v4581
    %5016 = vmatprep.subr.bf16.mxu0 %v4586
    %5017 = vmatpush1.bf16.msra.mxu0 %v4585
    %5018 = vmatprep.subr.bf16.mxu0 %v4590
    %5019 = vmatpush1.bf16.msra.mxu0 %v4589
    %5020 = vmatprep.subr.bf16.mxu0 %v4594
    %5021 = vmatpush1.bf16.msra.mxu0 %v4593
    %5022 = vmatprep.subr.bf16.mxu0 %v4598
    %5023 = vmatpush1.bf16.msra.mxu0 %v4597
    %5024 = vmatprep.subr.bf16.mxu0 %v4602
    %5025 = vmatpush1.bf16.msra.mxu0 %v4601
    %5026 = vmatprep.subr.bf16.mxu0 %v4606
    %5027 = vmatpush1.bf16.msra.mxu0 %v4605
    %5028 = vmatprep.subr.bf16.mxu0 %v4610
    %5029 = vmatpush1.bf16.msra.mxu0 %v4609
    %5030 = vmatprep.mubr.bf16.mxu0 %v3310
    %5031 = vmatmul.mubr.bf16.gmra.mrb[0].mxu0 %v3309
    %v5032 = vpop.f32.mrb[0].mxu0
    %v5033 = vadd.f32 %v4990, %v5032
    %v5034 = vpop.f32.mrb[0].mxu0
    %v5035 = vadd.f32 %v4992, %v5034
    %v5036 = vpop.f32.mrb[0].mxu0
    %v5037 = vadd.f32 %v4994, %v5036
    %v5038 = vpop.f32.mrb[0].mxu0
    %v5039 = vadd.f32 %v4996, %v5038
    %5040 = vdwg.mxu0
    %5041 = vmatprep.subr.bf16.mxu0 %v4360
    %5042 = vmatpush1.bf16.msra.mxu0 %v4359
    %5043 = vmatprep.subr.bf16.mxu0 %v4364
    %5044 = vmatpush1.bf16.msra.mxu0 %v4363
    %5045 = vmatprep.subr.bf16.mxu0 %v4368
    %5046 = vmatpush1.bf16.msra.mxu0 %v4367
    %5047 = vmatprep.subr.bf16.mxu0 %v4372
    %5048 = vmatpush1.bf16.msra.mxu0 %v4371
    %5049 = vmatprep.subr.bf16.mxu0 %v4376
    %5050 = vmatpush1.bf16.msra.mxu0 %v4375
    %5051 = vmatprep.subr.bf16.mxu0 %v4380
    %5052 = vmatpush1.bf16.msra.mxu0 %v4379
    %5053 = vmatprep.subr.bf16.mxu0 %v4384
    %5054 = vmatpush1.bf16.msra.mxu0 %v4383
    %5055 = vmatprep.subr.bf16.mxu0 %v4388
    %5056 = vmatpush1.bf16.msra.mxu0 %v4387
    %5057 = vmatprep.subr.bf16.mxu0 %v4392
    %5058 = vmatpush1.bf16.msra.mxu0 %v4391
    %5059 = vmatprep.subr.bf16.mxu0 %v4396
    %5060 = vmatpush1.bf16.msra.mxu0 %v4395
    %5061 = vmatprep.subr.bf16.mxu0 %v4400
    %5062 = vmatpush1.bf16.msra.mxu0 %v4399
    %5063 = vmatprep.subr.bf16.mxu0 %v4404
    %5064 = vmatpush1.bf16.msra.mxu0 %v4403
    %5065 = vmatprep.subr.bf16.mxu0 %v4408
    %5066 = vmatpush1.bf16.msra.mxu0 %v4407
    %5067 = vmatprep.subr.bf16.mxu0 %v4412
    %5068 = vmatpush1.bf16.msra.mxu0 %v4411
    %5069 = vmatprep.subr.bf16.mxu0 %v4416
    %5070 = vmatpush1.bf16.msra.mxu0 %v4415
    %5071 = vmatprep.subr.bf16.mxu0 %v4420
    %5072 = vmatpush1.bf16.msra.mxu0 %v4419
    %5073 = vmatprep.mubr.bf16.mxu0 %v3304
    %5074 = vmatmul.mubr.bf16.gmra.mrb[0].mxu0 %v3303
    %v5075 = vpop.f32.mrb[0].mxu0
    %v5076 = vadd.f32 %v3580, %v5075
    %v5077 = vpop.f32.mrb[0].mxu0
    %v5078 = vadd.f32 %v3584, %v5077
    %v5079 = vpop.f32.mrb[0].mxu0
    %v5080 = vadd.f32 %v3580, %v5079
    %v5081 = vpop.f32.mrb[0].mxu0
    %v5082 = vadd.f32 %v3584, %v5081
    %5083 = vdwg.mxu0
    %5084 = vmatprep.subr.bf16.mxu0 %v4424
    %5085 = vmatpush1.bf16.msra.mxu0 %v4423
    %5086 = vmatprep.subr.bf16.mxu0 %v4428
    %5087 = vmatpush1.bf16.msra.mxu0 %v4427
    %5088 = vmatprep.subr.bf16.mxu0 %v4432
    %5089 = vmatpush1.bf16.msra.mxu0 %v4431
    %5090 = vmatprep.subr.bf16.mxu0 %v4436
    %5091 = vmatpush1.bf16.msra.mxu0 %v4435
    %5092 = vmatprep.subr.bf16.mxu0 %v4440
    %5093 = vmatpush1.bf16.msra.mxu0 %v4439
    %5094 = vmatprep.subr.bf16.mxu0 %v4444
    %5095 = vmatpush1.bf16.msra.mxu0 %v4443
    %5096 = vmatprep.subr.bf16.mxu0 %v4448
    %5097 = vmatpush1.bf16.msra.mxu0 %v4447
    %5098 = vmatprep.subr.bf16.mxu0 %v4452
    %5099 = vmatpush1.bf16.msra.mxu0 %v4451
    %5100 = vmatprep.subr.bf16.mxu0 %v4456
    %5101 = vmatpush1.bf16.msra.mxu0 %v4455
    %5102 = vmatprep.subr.bf16.mxu0 %v4460
    %5103 = vmatpush1.bf16.msra.mxu0 %v4459
    %5104 = vmatprep.subr.bf16.mxu0 %v4464
    %5105 = vmatpush1.bf16.msra.mxu0 %v4463
    %5106 = vmatprep.subr.bf16.mxu0 %v4468
    %5107 = vmatpush1.bf16.msra.mxu0 %v4467
    %5108 = vmatprep.subr.bf16.mxu0 %v4472
    %5109 = vmatpush1.bf16.msra.mxu0 %v4471
    %5110 = vmatprep.subr.bf16.mxu0 %v4476
    %5111 = vmatpush1.bf16.msra.mxu0 %v4475
    %5112 = vmatprep.subr.bf16.mxu0 %v4480
    %5113 = vmatpush1.bf16.msra.mxu0 %v4479
    %5114 = vmatprep.subr.bf16.mxu0 %v4484
    %5115 = vmatpush1.bf16.msra.mxu0 %v4483
    %5116 = vmatprep.mubr.bf16.mxu0 %v3306
    %5117 = vmatmul.mubr.bf16.gmra.mrb[0].mxu0 %v3305
    %v5118 = vpop.f32.mrb[0].mxu0
    %v5119 = vadd.f32 %v5076, %v5118
    %v5120 = vpop.f32.mrb[0].mxu0
    %v5121 = vadd.f32 %v5078, %v5120
    %v5122 = vpop.f32.mrb[0].mxu0
    %v5123 = vadd.f32 %v5080, %v5122
    %v5124 = vpop.f32.mrb[0].mxu0
    %v5125 = vadd.f32 %v5082, %v5124
    %5126 = vdwg.mxu0
    %5127 = vmatprep.subr.bf16.mxu0 %v4488
    %5128 = vmatpush1.bf16.msra.mxu0 %v4487
    %5129 = vmatprep.subr.bf16.mxu0 %v4492
    %5130 = vmatpush1.bf16.msra.mxu0 %v4491
    %5131 = vmatprep.subr.bf16.mxu0 %v4496
    %5132 = vmatpush1.bf16.msra.mxu0 %v4495
    %5133 = vmatprep.subr.bf16.mxu0 %v4500
    %5134 = vmatpush1.bf16.msra.mxu0 %v4499
    %5135 = vmatprep.subr.bf16.mxu0 %v4504
    %5136 = vmatpush1.bf16.msra.mxu0 %v4503
    %5137 = vmatprep.subr.bf16.mxu0 %v4508
    %5138 = vmatpush1.bf16.msra.mxu0 %v4507
    %5139 = vmatprep.subr.bf16.mxu0 %v4512
    %5140 = vmatpush1.bf16.msra.mxu0 %v4511
    %5141 = vmatprep.subr.bf16.mxu0 %v4516
    %5142 = vmatpush1.bf16.msra.mxu0 %v4515
    %5143 = vmatprep.subr.bf16.mxu0 %v4520
    %5144 = vmatpush1.bf16.msra.mxu0 %v4519
    %5145 = vmatprep.subr.bf16.mxu0 %v4524
    %5146 = vmatpush1.bf16.msra.mxu0 %v4523
    %5147 = vmatprep.subr.bf16.mxu0 %v4528
    %5148 = vmatpush1.bf16.msra.mxu0 %v4527
    %5149 = vmatprep.subr.bf16.mxu0 %v4532
    %5150 = vmatpush1.bf16.msra.mxu0 %v4531
    %5151 = vmatprep.subr.bf16.mxu0 %v4536
    %5152 = vmatpush1.bf16.msra.mxu0 %v4535
    %5153 = vmatprep.subr.bf16.mxu0 %v4540
    %5154 = vmatpush1.bf16.msra.mxu0 %v4539
    %5155 = vmatprep.subr.bf16.mxu0 %v4544
    %5156 = vmatpush1.bf16.msra.mxu0 %v4543
    %5157 = vmatprep.subr.bf16.mxu0 %v4548
    %5158 = vmatpush1.bf16.msra.mxu0 %v4547
    %5159 = vmatprep.mubr.bf16.mxu0 %v3308
    %5160 = vmatmul.mubr.bf16.gmra.mrb[0].mxu0 %v3307
    %v5161 = vpop.f32.mrb[0].mxu0
    %v5162 = vadd.f32 %v5119, %v5161
    %v5163 = vpop.f32.mrb[0].mxu0
    %v5164 = vadd.f32 %v5121, %v5163
    %v5165 = vpop.f32.mrb[0].mxu0
    %v5166 = vadd.f32 %v5123, %v5165
    %v5167 = vpop.f32.mrb[0].mxu0
    %v5168 = vadd.f32 %v5125, %v5167
    %5169 = vdwg.mxu0
    %5170 = vmatprep.subr.bf16.mxu0 %v4552
    %5171 = vmatpush1.bf16.msra.mxu0 %v4551
    %5172 = vmatprep.subr.bf16.mxu0 %v4556
    %5173 = vmatpush1.bf16.msra.mxu0 %v4555
    %5174 = vmatprep.subr.bf16.mxu0 %v4560
    %5175 = vmatpush1.bf16.msra.mxu0 %v4559
    %5176 = vmatprep.subr.bf16.mxu0 %v4564
    %5177 = vmatpush1.bf16.msra.mxu0 %v4563
    %5178 = vmatprep.subr.bf16.mxu0 %v4568
    %5179 = vmatpush1.bf16.msra.mxu0 %v4567
    %5180 = vmatprep.subr.bf16.mxu0 %v4572
    %5181 = vmatpush1.bf16.msra.mxu0 %v4571
    %5182 = vmatprep.subr.bf16.mxu0 %v4576
    %5183 = vmatpush1.bf16.msra.mxu0 %v4575
    %5184 = vmatprep.subr.bf16.mxu0 %v4580
    %5185 = vmatpush1.bf16.msra.mxu0 %v4579
    %5186 = vmatprep.subr.bf16.mxu0 %v4584
    %5187 = vmatpush1.bf16.msra.mxu0 %v4583
    %5188 = vmatprep.subr.bf16.mxu0 %v4588
    %5189 = vmatpush1.bf16.msra.mxu0 %v4587
    %5190 = vmatprep.subr.bf16.mxu0 %v4592
    %5191 = vmatpush1.bf16.msra.mxu0 %v4591
    %5192 = vmatprep.subr.bf16.mxu0 %v4596
    %5193 = vmatpush1.bf16.msra.mxu0 %v4595
    %5194 = vmatprep.subr.bf16.mxu0 %v4600
    %5195 = vmatpush1.bf16.msra.mxu0 %v4599
    %5196 = vmatprep.subr.bf16.mxu0 %v4604
    %5197 = vmatpush1.bf16.msra.mxu0 %v4603
    %5198 = vmatprep.subr.bf16.mxu0 %v4608
    %5199 = vmatpush1.bf16.msra.mxu0 %v4607
    %5200 = vmatprep.subr.bf16.mxu0 %v4612
    %5201 = vmatpush1.bf16.msra.mxu0 %v4611
    %5202 = vmatprep.mubr.bf16.mxu0 %v3310
    %5203 = vmatmul.mubr.bf16.gmra.mrb[0].mxu0 %v3309
    %v5204 = vpop.f32.mrb[0].mxu0
    %v5205 = vadd.f32 %v5162, %v5204
    %v5206 = vpop.f32.mrb[0].mxu0
    %v5207 = vadd.f32 %v5164, %v5206
    %v5208 = vpop.f32.mrb[0].mxu0
    %v5209 = vadd.f32 %v5166, %v5208
    %v5210 = vpop.f32.mrb[0].mxu0
    %v5211 = vadd.f32 %v5168, %v5210
    %5212 = vdwg.mxu0
    %vm5213 = vcmp.gt.f32.partialorder %v5033, 0.0
    %vm5214 = vcmp.gt.f32.partialorder %v5035, 0.0
    %vm5215 = vcmp.gt.f32.partialorder %v5205, 0.0
    %vm5216 = vcmp.gt.f32.partialorder %v5207, 0.0
    %vm5217 = vcmp.gt.f32.partialorder %v5037, 0.0
    %vm5218 = vcmp.gt.f32.partialorder %v5039, 0.0
    %vm5219 = vcmp.gt.f32.partialorder %v5209, 0.0
    %vm5220 = vcmp.gt.f32.partialorder %v5211, 0.0
    %v5221 = vmul.f32 %v5033, 0.2
    %v5222 = vmul.f32 %v5035, 0.2
    %v5223 = vmul.f32 %v5205, 0.2
    %v5224 = vmul.f32 %v5207, 0.2
    %v5225 = vmul.f32 %v5037, 0.2
    %v5226 = vmul.f32 %v5039, 0.2
    %v5227 = vmul.f32 %v5209, 0.2
    %v5228 = vmul.f32 %v5211, 0.2
    %v5229 = vsel %vm5213, %v5033, %v5221
    %v5230 = vsel %vm5214, %v5035, %v5222
    %v5231 = vsel %vm5215, %v5205, %v5223
    %v5232 = vsel %vm5216, %v5207, %v5224
    %v5233 = vsel %vm5217, %v5037, %v5225
    %v5234 = vsel %vm5218, %v5039, %v5226
    %v5235 = vsel %vm5219, %v5209, %v5227
    %v5236 = vsel %vm5220, %v5211, %v5228
    %v5237 = vpack.c.bf16 %v5233, %v5229
    %v5238 = vpack.c.bf16 %v5234, %v5230
    %v5239 = vpack.c.bf16 %v5235, %v5231
    %v5240 = vpack.c.bf16 %v5236, %v5232
    %v5241 = vld [vmem:[#allocation11] sm:$0xff]
    %v5242 = vld [vmem:[#allocation11 + $0x8] sm:$0xff]
    %v5243 = vld [vmem:[#allocation11 + $0x10] sm:$0xff]
    %v5244 = vld [vmem:[#allocation11 + $0x18] sm:$0xff]
    %v5245 = vld [vmem:[#allocation11 + $0x20] sm:$0xff]
    %v5246 = vld [vmem:[#allocation11 + $0x28] sm:$0xff]
    %v5247 = vld [vmem:[#allocation11 + $0x30] sm:$0xff]
    %v5248 = vld [vmem:[#allocation11 + $0x38] sm:$0xff]
    %v5249 = vld [vmem:[#allocation11 + $0x40] sm:$0xff]
    %v5250 = vld [vmem:[#allocation11 + $0x48] sm:$0xff]
    %v5251 = vld [vmem:[#allocation11 + $0x50] sm:$0xff]
    %v5252 = vld [vmem:[#allocation11 + $0x58] sm:$0xff]
    %v5253 = vld [vmem:[#allocation11 + $0x60] sm:$0xff]
    %v5254 = vld [vmem:[#allocation11 + $0x68] sm:$0xff]
    %v5255 = vld [vmem:[#allocation11 + $0x70] sm:$0xff]
    %v5256 = vld [vmem:[#allocation11 + $0x78] sm:$0xff]
    %v5257 = vld [vmem:[#allocation11 + $0x80] sm:$0xff]
    %v5258 = vld [vmem:[#allocation11 + $0x88] sm:$0xff]
    %v5259 = vld [vmem:[#allocation11 + $0x90] sm:$0xff]
    %v5260 = vld [vmem:[#allocation11 + $0x98] sm:$0xff]
    %v5261 = vld [vmem:[#allocation11 + $0xa0] sm:$0xff]
    %v5262 = vld [vmem:[#allocation11 + $0xa8] sm:$0xff]
    %v5263 = vld [vmem:[#allocation11 + $0xb0] sm:$0xff]
    %v5264 = vld [vmem:[#allocation11 + $0xb8] sm:$0xff]
    %v5265 = vld [vmem:[#allocation11 + $0xc0] sm:$0xff]
    %v5266 = vld [vmem:[#allocation11 + $0xc8] sm:$0xff]
    %v5267 = vld [vmem:[#allocation11 + $0xd0] sm:$0xff]
    %v5268 = vld [vmem:[#allocation11 + $0xd8] sm:$0xff]
    %v5269 = vld [vmem:[#allocation11 + $0xe0] sm:$0xff]
    %v5270 = vld [vmem:[#allocation11 + $0xe8] sm:$0xff]
    %v5271 = vld [vmem:[#allocation11 + $0xf0] sm:$0xff]
    %v5272 = vld [vmem:[#allocation11 + $0xf8] sm:$0xff]
    %v5273 = vld [vmem:[#allocation11 + $0x100] sm:$0xff]
    %v5274 = vld [vmem:[#allocation11 + $0x108] sm:$0xff]
    %v5275 = vld [vmem:[#allocation11 + $0x110] sm:$0xff]
    %v5276 = vld [vmem:[#allocation11 + $0x118] sm:$0xff]
    %v5277 = vld [vmem:[#allocation11 + $0x120] sm:$0xff]
    %v5278 = vld [vmem:[#allocation11 + $0x128] sm:$0xff]
    %v5279 = vld [vmem:[#allocation11 + $0x130] sm:$0xff]
    %v5280 = vld [vmem:[#allocation11 + $0x138] sm:$0xff]
    %v5281 = vld [vmem:[#allocation11 + $0x140] sm:$0xff]
    %v5282 = vld [vmem:[#allocation11 + $0x148] sm:$0xff]
    %v5283 = vld [vmem:[#allocation11 + $0x150] sm:$0xff]
    %v5284 = vld [vmem:[#allocation11 + $0x158] sm:$0xff]
    %v5285 = vld [vmem:[#allocation11 + $0x160] sm:$0xff]
    %v5286 = vld [vmem:[#allocation11 + $0x168] sm:$0xff]
    %v5287 = vld [vmem:[#allocation11 + $0x170] sm:$0xff]
    %v5288 = vld [vmem:[#allocation11 + $0x178] sm:$0xff]
    %v5289 = vld [vmem:[#allocation11 + $0x180] sm:$0xff]
    %v5290 = vld [vmem:[#allocation11 + $0x188] sm:$0xff]
    %v5291 = vld [vmem:[#allocation11 + $0x190] sm:$0xff]
    %v5292 = vld [vmem:[#allocation11 + $0x198] sm:$0xff]
    %v5293 = vld [vmem:[#allocation11 + $0x1a0] sm:$0xff]
    %v5294 = vld [vmem:[#allocation11 + $0x1a8] sm:$0xff]
    %v5295 = vld [vmem:[#allocation11 + $0x1b0] sm:$0xff]
    %v5296 = vld [vmem:[#allocation11 + $0x1b8] sm:$0xff]
    %v5297 = vld [vmem:[#allocation11 + $0x1c0] sm:$0xff]
    %v5298 = vld [vmem:[#allocation11 + $0x1c8] sm:$0xff]
    %v5299 = vld [vmem:[#allocation11 + $0x1d0] sm:$0xff]
    %v5300 = vld [vmem:[#allocation11 + $0x1d8] sm:$0xff]
    %v5301 = vld [vmem:[#allocation11 + $0x1e0] sm:$0xff]
    %v5302 = vld [vmem:[#allocation11 + $0x1e8] sm:$0xff]
    %v5303 = vld [vmem:[#allocation11 + $0x1f0] sm:$0xff]
    %v5304 = vld [vmem:[#allocation11 + $0x1f8] sm:$0xff]
    %v5305 = vld [vmem:[#allocation13] sm:$0x3]
    %v5307 = vlaneseq
    %v5308 = vshrl.u32 %v5307, 7
    %v5309 = vsub.s32 0, %v5308
    %v5310 = vrot.slane %v5305, %v5309
    %v5311 = vlaneseq
    %v5312 = vshrl.u32 %v5311, 7
    %v5313 = vsub.s32 1, %v5312
    %v5314 = vrot.slane %v5305, %v5313
    %v5381 = vunpack.c.l.b16 %v5241
    %v5382 = vunpack.c.h.b16 %v5241
    %v5383 = vunpack.c.l.b16 %v5242
    %v5384 = vunpack.c.h.b16 %v5242
    %v5385 = vunpack.c.l.b16 %v5243
    %v5386 = vunpack.c.h.b16 %v5243
    %v5387 = vunpack.c.l.b16 %v5244
    %v5388 = vunpack.c.h.b16 %v5244
    %v5389 = vunpack.c.l.b16 %v5245
    %v5390 = vunpack.c.h.b16 %v5245
    %v5391 = vunpack.c.l.b16 %v5246
    %v5392 = vunpack.c.h.b16 %v5246
    %v5393 = vunpack.c.l.b16 %v5247
    %v5394 = vunpack.c.h.b16 %v5247
    %v5395 = vunpack.c.l.b16 %v5248
    %v5396 = vunpack.c.h.b16 %v5248
    %v5397 = vunpack.c.l.b16 %v5249
    %v5398 = vunpack.c.h.b16 %v5249
    %v5399 = vunpack.c.l.b16 %v5250
    %v5400 = vunpack.c.h.b16 %v5250
    %v5401 = vunpack.c.l.b16 %v5251
    %v5402 = vunpack.c.h.b16 %v5251
    %v5403 = vunpack.c.l.b16 %v5252
    %v5404 = vunpack.c.h.b16 %v5252
    %v5405 = vunpack.c.l.b16 %v5253
    %v5406 = vunpack.c.h.b16 %v5253
    %v5407 = vunpack.c.l.b16 %v5254
    %v5408 = vunpack.c.h.b16 %v5254
    %v5409 = vunpack.c.l.b16 %v5255
    %v5410 = vunpack.c.h.b16 %v5255
    %v5411 = vunpack.c.l.b16 %v5256
    %v5412 = vunpack.c.h.b16 %v5256
    %v5413 = vunpack.c.l.b16 %v5257
    %v5414 = vunpack.c.h.b16 %v5257
    %v5415 = vunpack.c.l.b16 %v5258
    %v5416 = vunpack.c.h.b16 %v5258
    %v5417 = vunpack.c.l.b16 %v5259
    %v5418 = vunpack.c.h.b16 %v5259
    %v5419 = vunpack.c.l.b16 %v5260
    %v5420 = vunpack.c.h.b16 %v5260
    %v5421 = vunpack.c.l.b16 %v5261
    %v5422 = vunpack.c.h.b16 %v5261
    %v5423 = vunpack.c.l.b16 %v5262
    %v5424 = vunpack.c.h.b16 %v5262
    %v5425 = vunpack.c.l.b16 %v5263
    %v5426 = vunpack.c.h.b16 %v5263
    %v5427 = vunpack.c.l.b16 %v5264
    %v5428 = vunpack.c.h.b16 %v5264
    %v5429 = vunpack.c.l.b16 %v5265
    %v5430 = vunpack.c.h.b16 %v5265
    %v5431 = vunpack.c.l.b16 %v5266
    %v5432 = vunpack.c.h.b16 %v5266
    %v5433 = vunpack.c.l.b16 %v5267
    %v5434 = vunpack.c.h.b16 %v5267
    %v5435 = vunpack.c.l.b16 %v5268
    %v5436 = vunpack.c.h.b16 %v5268
    %v5437 = vunpack.c.l.b16 %v5269
    %v5438 = vunpack.c.h.b16 %v5269
    %v5439 = vunpack.c.l.b16 %v5270
    %v5440 = vunpack.c.h.b16 %v5270
    %v5441 = vunpack.c.l.b16 %v5271
    %v5442 = vunpack.c.h.b16 %v5271
    %v5443 = vunpack.c.l.b16 %v5272
    %v5444 = vunpack.c.h.b16 %v5272
    %v5445 = vunpack.c.l.b16 %v5273
    %v5446 = vunpack.c.h.b16 %v5273
    %v5447 = vunpack.c.l.b16 %v5274
    %v5448 = vunpack.c.h.b16 %v5274
    %v5449 = vunpack.c.l.b16 %v5275
    %v5450 = vunpack.c.h.b16 %v5275
    %v5451 = vunpack.c.l.b16 %v5276
    %v5452 = vunpack.c.h.b16 %v5276
    %v5453 = vunpack.c.l.b16 %v5277
    %v5454 = vunpack.c.h.b16 %v5277
    %v5455 = vunpack.c.l.b16 %v5278
    %v5456 = vunpack.c.h.b16 %v5278
    %v5457 = vunpack.c.l.b16 %v5279
    %v5458 = vunpack.c.h.b16 %v5279
    %v5459 = vunpack.c.l.b16 %v5280
    %v5460 = vunpack.c.h.b16 %v5280
    %v5461 = vunpack.c.l.b16 %v5281
    %v5462 = vunpack.c.h.b16 %v5281
    %v5463 = vunpack.c.l.b16 %v5282
    %v5464 = vunpack.c.h.b16 %v5282
    %v5465 = vunpack.c.l.b16 %v5283
    %v5466 = vunpack.c.h.b16 %v5283
    %v5467 = vunpack.c.l.b16 %v5284
    %v5468 = vunpack.c.h.b16 %v5284
    %v5469 = vunpack.c.l.b16 %v5285
    %v5470 = vunpack.c.h.b16 %v5285
    %v5471 = vunpack.c.l.b16 %v5286
    %v5472 = vunpack.c.h.b16 %v5286
    %v5473 = vunpack.c.l.b16 %v5287
    %v5474 = vunpack.c.h.b16 %v5287
    %v5475 = vunpack.c.l.b16 %v5288
    %v5476 = vunpack.c.h.b16 %v5288
    %v5477 = vunpack.c.l.b16 %v5289
    %v5478 = vunpack.c.h.b16 %v5289
    %v5479 = vunpack.c.l.b16 %v5290
    %v5480 = vunpack.c.h.b16 %v5290
    %v5481 = vunpack.c.l.b16 %v5291
    %v5482 = vunpack.c.h.b16 %v5291
    %v5483 = vunpack.c.l.b16 %v5292
    %v5484 = vunpack.c.h.b16 %v5292
    %v5485 = vunpack.c.l.b16 %v5293
    %v5486 = vunpack.c.h.b16 %v5293
    %v5487 = vunpack.c.l.b16 %v5294
    %v5488 = vunpack.c.h.b16 %v5294
    %v5489 = vunpack.c.l.b16 %v5295
    %v5490 = vunpack.c.h.b16 %v5295
    %v5491 = vunpack.c.l.b16 %v5296
    %v5492 = vunpack.c.h.b16 %v5296
    %v5493 = vunpack.c.l.b16 %v5297
    %v5494 = vunpack.c.h.b16 %v5297
    %v5495 = vunpack.c.l.b16 %v5298
    %v5496 = vunpack.c.h.b16 %v5298
    %v5497 = vunpack.c.l.b16 %v5299
    %v5498 = vunpack.c.h.b16 %v5299
    %v5499 = vunpack.c.l.b16 %v5300
    %v5500 = vunpack.c.h.b16 %v5300
    %v5501 = vunpack.c.l.b16 %v5301
    %v5502 = vunpack.c.h.b16 %v5301
    %v5503 = vunpack.c.l.b16 %v5302
    %v5504 = vunpack.c.h.b16 %v5302
    %v5505 = vunpack.c.l.b16 %v5303
    %v5506 = vunpack.c.h.b16 %v5303
    %v5507 = vunpack.c.l.b16 %v5304
    %v5508 = vunpack.c.h.b16 %v5304
    %v5509 = vpack.c.b16 %v5383, %v5381
    %v5510 = vpack.c.b16 %v5384, %v5382
    %v5511 = vpack.c.b16 %v5387, %v5385
    %v5512 = vpack.c.b16 %v5388, %v5386
    %v5513 = vpack.c.b16 %v5391, %v5389
    %v5514 = vpack.c.b16 %v5392, %v5390
    %v5515 = vpack.c.b16 %v5395, %v5393
    %v5516 = vpack.c.b16 %v5396, %v5394
    %v5517 = vpack.c.b16 %v5399, %v5397
    %v5518 = vpack.c.b16 %v5400, %v5398
    %v5519 = vpack.c.b16 %v5403, %v5401
    %v5520 = vpack.c.b16 %v5404, %v5402
    %v5521 = vpack.c.b16 %v5407, %v5405
    %v5522 = vpack.c.b16 %v5408, %v5406
    %v5523 = vpack.c.b16 %v5411, %v5409
    %v5524 = vpack.c.b16 %v5412, %v5410
    %v5525 = vpack.c.b16 %v5415, %v5413
    %v5526 = vpack.c.b16 %v5416, %v5414
    %v5527 = vpack.c.b16 %v5419, %v5417
    %v5528 = vpack.c.b16 %v5420, %v5418
    %v5529 = vpack.c.b16 %v5423, %v5421
    %v5530 = vpack.c.b16 %v5424, %v5422
    %v5531 = vpack.c.b16 %v5427, %v5425
    %v5532 = vpack.c.b16 %v5428, %v5426
    %v5533 = vpack.c.b16 %v5431, %v5429
    %v5534 = vpack.c.b16 %v5432, %v5430
    %v5535 = vpack.c.b16 %v5435, %v5433
    %v5536 = vpack.c.b16 %v5436, %v5434
    %v5537 = vpack.c.b16 %v5439, %v5437
    %v5538 = vpack.c.b16 %v5440, %v5438
    %v5539 = vpack.c.b16 %v5443, %v5441
    %v5540 = vpack.c.b16 %v5444, %v5442
    %v5541 = vpack.c.b16 %v5447, %v5445
    %v5542 = vpack.c.b16 %v5448, %v5446
    %v5543 = vpack.c.b16 %v5451, %v5449
    %v5544 = vpack.c.b16 %v5452, %v5450
    %v5545 = vpack.c.b16 %v5455, %v5453
    %v5546 = vpack.c.b16 %v5456, %v5454
    %v5547 = vpack.c.b16 %v5459, %v5457
    %v5548 = vpack.c.b16 %v5460, %v5458
    %v5549 = vpack.c.b16 %v5463, %v5461
    %v5550 = vpack.c.b16 %v5464, %v5462
    %v5551 = vpack.c.b16 %v5467, %v5465
    %v5552 = vpack.c.b16 %v5468, %v5466
    %v5553 = vpack.c.b16 %v5471, %v5469
    %v5554 = vpack.c.b16 %v5472, %v5470
    %v5555 = vpack.c.b16 %v5475, %v5473
    %v5556 = vpack.c.b16 %v5476, %v5474
    %v5557 = vpack.c.b16 %v5479, %v5477
    %v5558 = vpack.c.b16 %v5480, %v5478
    %v5559 = vpack.c.b16 %v5483, %v5481
    %v5560 = vpack.c.b16 %v5484, %v5482
    %v5561 = vpack.c.b16 %v5487, %v5485
    %v5562 = vpack.c.b16 %v5488, %v5486
    %v5563 = vpack.c.b16 %v5491, %v5489
    %v5564 = vpack.c.b16 %v5492, %v5490
    %v5565 = vpack.c.b16 %v5495, %v5493
    %v5566 = vpack.c.b16 %v5496, %v5494
    %v5567 = vpack.c.b16 %v5499, %v5497
    %v5568 = vpack.c.b16 %v5500, %v5498
    %v5569 = vpack.c.b16 %v5503, %v5501
    %v5570 = vpack.c.b16 %v5504, %v5502
    %v5571 = vpack.c.b16 %v5507, %v5505
    %v5572 = vpack.c.b16 %v5508, %v5506
    %5637 = vmatprep.subr.bf16.mxu0 %v5510
    %5638 = vmatpush1.bf16.msra.mxu0 %v5509
    %5639 = vmatprep.subr.bf16.mxu0 %v5512
    %5640 = vmatpush1.bf16.msra.mxu0 %v5511
    %5641 = vmatprep.subr.bf16.mxu0 %v5514
    %5642 = vmatpush1.bf16.msra.mxu0 %v5513
    %5643 = vmatprep.subr.bf16.mxu0 %v5516
    %5644 = vmatpush1.bf16.msra.mxu0 %v5515
    %5645 = vmatprep.subr.bf16.mxu0 %v5518
    %5646 = vmatpush1.bf16.msra.mxu0 %v5517
    %5647 = vmatprep.subr.bf16.mxu0 %v5520
    %5648 = vmatpush1.bf16.msra.mxu0 %v5519
    %5649 = vmatprep.subr.bf16.mxu0 %v5522
    %5650 = vmatpush1.bf16.msra.mxu0 %v5521
    %5651 = vmatprep.subr.bf16.mxu0 %v5524
    %5652 = vmatpush1.bf16.msra.mxu0 %v5523
    %5653 = vmatprep.subr.bf16.mxu0 %v5526
    %5654 = vmatpush1.bf16.msra.mxu0 %v5525
    %5655 = vmatprep.subr.bf16.mxu0 %v5528
    %5656 = vmatpush1.bf16.msra.mxu0 %v5527
    %5657 = vmatprep.subr.bf16.mxu0 %v5530
    %5658 = vmatpush1.bf16.msra.mxu0 %v5529
    %5659 = vmatprep.subr.bf16.mxu0 %v5532
    %5660 = vmatpush1.bf16.msra.mxu0 %v5531
    %5661 = vmatprep.subr.bf16.mxu0 %v5534
    %5662 = vmatpush1.bf16.msra.mxu0 %v5533
    %5663 = vmatprep.subr.bf16.mxu0 %v5536
    %5664 = vmatpush1.bf16.msra.mxu0 %v5535
    %5665 = vmatprep.subr.bf16.mxu0 %v5538
    %5666 = vmatpush1.bf16.msra.mxu0 %v5537
    %5667 = vmatprep.subr.bf16.mxu0 %v5540
    %5668 = vmatpush1.bf16.msra.mxu0 %v5539
    %5669 = vmatprep.mubr.bf16.mxu0 %v5238
    %5670 = vmatmul.mubr.bf16.gmra.mrb[0].mxu0 %v5237
    %v5671 = vpop.f32.mrb[0].mxu0
    %v5672 = vadd.f32 %v5310, %v5671
    %v5673 = vpop.f32.mrb[0].mxu0
    %v5674 = vadd.f32 %v5314, %v5673
    %v5675 = vpop.f32.mrb[0].mxu0
    %v5676 = vadd.f32 %v5310, %v5675
    %v5677 = vpop.f32.mrb[0].mxu0
    %v5678 = vadd.f32 %v5314, %v5677
    %5679 = vdwg.mxu0
    %5680 = vmatprep.subr.bf16.mxu0 %v5542
    %5681 = vmatpush1.bf16.msra.mxu0 %v5541
    %5682 = vmatprep.subr.bf16.mxu0 %v5544
    %5683 = vmatpush1.bf16.msra.mxu0 %v5543
    %5684 = vmatprep.subr.bf16.mxu0 %v5546
    %5685 = vmatpush1.bf16.msra.mxu0 %v5545
    %5686 = vmatprep.subr.bf16.mxu0 %v5548
    %5687 = vmatpush1.bf16.msra.mxu0 %v5547
    %5688 = vmatprep.subr.bf16.mxu0 %v5550
    %5689 = vmatpush1.bf16.msra.mxu0 %v5549
    %5690 = vmatprep.subr.bf16.mxu0 %v5552
    %5691 = vmatpush1.bf16.msra.mxu0 %v5551
    %5692 = vmatprep.subr.bf16.mxu0 %v5554
    %5693 = vmatpush1.bf16.msra.mxu0 %v5553
    %5694 = vmatprep.subr.bf16.mxu0 %v5556
    %5695 = vmatpush1.bf16.msra.mxu0 %v5555
    %5696 = vmatprep.subr.bf16.mxu0 %v5558
    %5697 = vmatpush1.bf16.msra.mxu0 %v5557
    %5698 = vmatprep.subr.bf16.mxu0 %v5560
    %5699 = vmatpush1.bf16.msra.mxu0 %v5559
    %5700 = vmatprep.subr.bf16.mxu0 %v5562
    %5701 = vmatpush1.bf16.msra.mxu0 %v5561
    %5702 = vmatprep.subr.bf16.mxu0 %v5564
    %5703 = vmatpush1.bf16.msra.mxu0 %v5563
    %5704 = vmatprep.subr.bf16.mxu0 %v5566
    %5705 = vmatpush1.bf16.msra.mxu0 %v5565
    %5706 = vmatprep.subr.bf16.mxu0 %v5568
    %5707 = vmatpush1.bf16.msra.mxu0 %v5567
    %5708 = vmatprep.subr.bf16.mxu0 %v5570
    %5709 = vmatpush1.bf16.msra.mxu0 %v5569
    %5710 = vmatprep.subr.bf16.mxu0 %v5572
    %5711 = vmatpush1.bf16.msra.mxu0 %v5571
    %5712 = vmatprep.mubr.bf16.mxu0 %v5240
    %5713 = vmatmul.mubr.bf16.gmra.mrb[0].mxu0 %v5239
    %v5714 = vpop.f32.mrb[0].mxu0
    %v5715 = vadd.f32 %v5672, %v5714
    %v5716 = vpop.f32.mrb[0].mxu0
    %v5717 = vadd.f32 %v5674, %v5716
    %v5718 = vpop.f32.mrb[0].mxu0
    %v5719 = vadd.f32 %v5676, %v5718
    %v5720 = vpop.f32.mrb[0].mxu0
    %v5721 = vadd.f32 %v5678, %v5720
    %5722 = vdwg.mxu0
    %vm5723 = vcmp.gt.f32.partialorder %v5715, 0.0
    %vm5724 = vcmp.gt.f32.partialorder %v5717, 0.0
    %vm5725 = vcmp.gt.f32.partialorder %v5719, 0.0
    %vm5726 = vcmp.gt.f32.partialorder %v5721, 0.0
    %v5727 = vmul.f32 %v5715, 0.2
    %v5728 = vmul.f32 %v5717, 0.2
    %v5729 = vmul.f32 %v5719, 0.2
    %v5730 = vmul.f32 %v5721, 0.2
    %v5731 = vsel %vm5723, %v5715, %v5727
    %v5732 = vsel %vm5724, %v5717, %v5728
    %v5733 = vsel %vm5725, %v5719, %v5729
    %v5734 = vsel %vm5726, %v5721, %v5730
    %v5735 = vpack.c.bf16 %v5733, %v5731
    %v5736 = vpack.c.bf16 %v5734, %v5732
    %v5737 = vld [vmem:[#allocation14] sm:$0xf]
    %v5738 = vld [vmem:[#allocation14 + $0x4] sm:$0xf]
    %v5739 = vld [vmem:[#allocation14 + $0x8] sm:$0xf]
    %v5740 = vld [vmem:[#allocation14 + $0xc] sm:$0xf]
    %v5741 = vld [vmem:[#allocation14 + $0x10] sm:$0xf]
    %v5742 = vld [vmem:[#allocation14 + $0x14] sm:$0xf]
    %v5743 = vld [vmem:[#allocation14 + $0x18] sm:$0xf]
    %v5744 = vld [vmem:[#allocation14 + $0x1c] sm:$0xf]
    %v5745 = vld [vmem:[#allocation14 + $0x20] sm:$0xf]
    %v5746 = vld [vmem:[#allocation14 + $0x24] sm:$0xf]
    %v5747 = vld [vmem:[#allocation14 + $0x28] sm:$0xf]
    %v5748 = vld [vmem:[#allocation14 + $0x2c] sm:$0xf]
    %v5749 = vld [vmem:[#allocation14 + $0x30] sm:$0xf]
    %v5750 = vld [vmem:[#allocation14 + $0x34] sm:$0xf]
    %v5751 = vld [vmem:[#allocation14 + $0x38] sm:$0xf]
    %v5752 = vld [vmem:[#allocation14 + $0x3c] sm:$0xf]
    %v5753 = vld [vmem:[#allocation14 + $0x40] sm:$0xf]
    %v5754 = vld [vmem:[#allocation14 + $0x44] sm:$0xf]
    %v5755 = vld [vmem:[#allocation14 + $0x48] sm:$0xf]
    %v5756 = vld [vmem:[#allocation14 + $0x4c] sm:$0xf]
    %v5757 = vld [vmem:[#allocation14 + $0x50] sm:$0xf]
    %v5758 = vld [vmem:[#allocation14 + $0x54] sm:$0xf]
    %v5759 = vld [vmem:[#allocation14 + $0x58] sm:$0xf]
    %v5760 = vld [vmem:[#allocation14 + $0x5c] sm:$0xf]
    %v5761 = vld [vmem:[#allocation14 + $0x60] sm:$0xf]
    %v5762 = vld [vmem:[#allocation14 + $0x64] sm:$0xf]
    %v5763 = vld [vmem:[#allocation14 + $0x68] sm:$0xf]
    %v5764 = vld [vmem:[#allocation14 + $0x6c] sm:$0xf]
    %v5765 = vld [vmem:[#allocation14 + $0x70] sm:$0xf]
    %v5766 = vld [vmem:[#allocation14 + $0x74] sm:$0xf]
    %v5767 = vld [vmem:[#allocation14 + $0x78] sm:$0xf]
    %v5768 = vld [vmem:[#allocation14 + $0x7c] sm:$0xf]
    %v5769 = vld [vmem:[#allocation16] sm:$0x1]
    %v5771 = vlaneseq
    %v5772 = vshrl.u32 %v5771, 7
    %v5773 = vsub.s32 0, %v5772
    %v5774 = vrot.slane %v5769, %v5773
    %v5808 = vunpack.c.l.b16 %v5737
    %v5809 = vunpack.c.l.b16 %v5738
    %v5810 = vunpack.c.l.b16 %v5739
    %v5811 = vunpack.c.l.b16 %v5740
    %v5812 = vunpack.c.l.b16 %v5741
    %v5813 = vunpack.c.l.b16 %v5742
    %v5814 = vunpack.c.l.b16 %v5743
    %v5815 = vunpack.c.l.b16 %v5744
    %v5816 = vunpack.c.l.b16 %v5745
    %v5817 = vunpack.c.l.b16 %v5746
    %v5818 = vunpack.c.l.b16 %v5747
    %v5819 = vunpack.c.l.b16 %v5748
    %v5820 = vunpack.c.l.b16 %v5749
    %v5821 = vunpack.c.l.b16 %v5750
    %v5822 = vunpack.c.l.b16 %v5751
    %v5823 = vunpack.c.l.b16 %v5752
    %v5824 = vunpack.c.l.b16 %v5753
    %v5825 = vunpack.c.l.b16 %v5754
    %v5826 = vunpack.c.l.b16 %v5755
    %v5827 = vunpack.c.l.b16 %v5756
    %v5828 = vunpack.c.l.b16 %v5757
    %v5829 = vunpack.c.l.b16 %v5758
    %v5830 = vunpack.c.l.b16 %v5759
    %v5831 = vunpack.c.l.b16 %v5760
    %v5832 = vunpack.c.l.b16 %v5761
    %v5833 = vunpack.c.l.b16 %v5762
    %v5834 = vunpack.c.l.b16 %v5763
    %v5835 = vunpack.c.l.b16 %v5764
    %v5836 = vunpack.c.l.b16 %v5765
    %v5837 = vunpack.c.l.b16 %v5766
    %v5838 = vunpack.c.l.b16 %v5767
    %v5839 = vunpack.c.l.b16 %v5768
    %v5840 = vpack.c.b16 %v5809, %v5808
    %v5841 = vpack.c.b16 %v5811, %v5810
    %v5842 = vpack.c.b16 %v5813, %v5812
    %v5843 = vpack.c.b16 %v5815, %v5814
    %v5844 = vpack.c.b16 %v5817, %v5816
    %v5845 = vpack.c.b16 %v5819, %v5818
    %v5846 = vpack.c.b16 %v5821, %v5820
    %v5847 = vpack.c.b16 %v5823, %v5822
    %v5848 = vpack.c.b16 %v5825, %v5824
    %v5849 = vpack.c.b16 %v5827, %v5826
    %v5850 = vpack.c.b16 %v5829, %v5828
    %v5851 = vpack.c.b16 %v5831, %v5830
    %v5852 = vpack.c.b16 %v5833, %v5832
    %v5853 = vpack.c.b16 %v5835, %v5834
    %v5854 = vpack.c.b16 %v5837, %v5836
    %v5855 = vpack.c.b16 %v5839, %v5838
    %5872 = vmatprep.subr.bf16.mxu0 0
    %5873 = vmatpush1.bf16.msra.mxu0 %v5840
    %5874 = vmatprep.subr.bf16.mxu0 0
    %5875 = vmatpush1.bf16.msra.mxu0 %v5841
    %5876 = vmatprep.subr.bf16.mxu0 0
    %5877 = vmatpush1.bf16.msra.mxu0 %v5842
    %5878 = vmatprep.subr.bf16.mxu0 0
    %5879 = vmatpush1.bf16.msra.mxu0 %v5843
    %5880 = vmatprep.subr.bf16.mxu0 0
    %5881 = vmatpush1.bf16.msra.mxu0 %v5844
    %5882 = vmatprep.subr.bf16.mxu0 0
    %5883 = vmatpush1.bf16.msra.mxu0 %v5845
    %5884 = vmatprep.subr.bf16.mxu0 0
    %5885 = vmatpush1.bf16.msra.mxu0 %v5846
    %5886 = vmatprep.subr.bf16.mxu0 0
    %5887 = vmatpush1.bf16.msra.mxu0 %v5847
    %5888 = vmatprep.subr.bf16.mxu0 0
    %5889 = vmatpush1.bf16.msra.mxu0 %v5848
    %5890 = vmatprep.subr.bf16.mxu0 0
    %5891 = vmatpush1.bf16.msra.mxu0 %v5849
    %5892 = vmatprep.subr.bf16.mxu0 0
    %5893 = vmatpush1.bf16.msra.mxu0 %v5850
    %5894 = vmatprep.subr.bf16.mxu0 0
    %5895 = vmatpush1.bf16.msra.mxu0 %v5851
    %5896 = vmatprep.subr.bf16.mxu0 0
    %5897 = vmatpush1.bf16.msra.mxu0 %v5852
    %5898 = vmatprep.subr.bf16.mxu0 0
    %5899 = vmatpush1.bf16.msra.mxu0 %v5853
    %5900 = vmatprep.subr.bf16.mxu0 0
    %5901 = vmatpush1.bf16.msra.mxu0 %v5854
    %5902 = vmatprep.subr.bf16.mxu0 0
    %5903 = vmatpush1.bf16.msra.mxu0 %v5855
    %5904 = vmatprep.mubr.bf16.mxu0 %v5736
    %5905 = vmatmul.mubr.bf16.gmra.mrb[0].mxu0 %v5735
    %v5906 = vpop.f32.mrb[0].mxu0
    %v5907 = vadd.f32 %v5774, %v5906
    %v5908 = vpop.f32.mrb[0].mxu0
    %v5909 = vpop.f32.mrb[0].mxu0
    %v5910 = vadd.f32 %v5774, %v5909
    %v5911 = vpop.f32.mrb[0].mxu0
    %5912 = vdwg.mxu0
    %v5913 = vxor.u32 %v5907, 2147483648
    %v5914 = vxor.u32 %v5910, 2147483648
    %v5915 = vmul.f32 %v5913, 1.442695
    %v5916 = vpow.pop %v5915
    %v5917 = vmul.f32 %v5914, 1.442695
    %v5918 = vpow.pop %v5917
    %v5919 = vadd.f32 %v5916, 1.0
    %v5920 = vadd.f32 %v5918, 1.0
    %v5921 = vrcp.pop %v5919
    %v5922 = vmul.f32 1.0, %v5921
    %v5923 = vrcp.pop %v5920
    %v5924 = vmul.f32 1.0, %v5923
    %5925 = vst [vmem:[#allocation17] sm:$0xff] %v5922
    %5926 = vst [vmem:[#allocation17 + $0x8] sm:$0xff] %v5924
    // Predicated region
    $region74: #{tpu_custom_call.1} parent=1 // pred_check
      _
    $region75: #{tpu_custom_call.1} parent=1 // pred_check_branch
      %5928 = sbr.rel (0) target = $region77
    $region76: #{tpu_custom_call.1} parent=1 // pred_region
      %s5930 = ssub.s32 256, 256
      %5931 = vsyncadd [#allocation4], %s5930
      %s5932 = sshll.u32 [#allocation17], 4
      %s5933 = int_to_ptr.vmem [resolvable:$true] %s5932
      %5938 = dma.vmem_to_hbm [thread:$0]  %s5933, 256, %s9, [#allocation4], 128, 128, 8
    $region77: #{tpu_custom_call.1} parent=1 // pred_fallthru
      _
    // Predicated region
    $region78: #{tpu_custom_call.1} parent=1 // pred_check
      _
    $region79: #{tpu_custom_call.1} parent=1 // pred_check_branch
      %5940 = sbr.rel (0) target = $region81
    $region80: #{tpu_custom_call.1} parent=1 // pred_region
      %5941 = dma.done [#allocation4], 256
    $region81: #{tpu_custom_call.1} parent=1 // pred_fallthru
      _
    %5942 = vsyncpa [#allocation3], 1
    %5943 = vsyncpa [#allocation6], 1
    %5944 = vsyncpa [#allocation9], 1
    %5945 = vsyncpa [#allocation12], 1
    %5946 = vsyncpa [#allocation15], 1
    %5947 = vsyncpa [#allocation4], 1

</llo_original>
